<compile_context>
chip_gen: v7x
topology: tpu7x:2x2x1
jax: 0.10.0
libtpu: 0.0.40
codegen_flags: <defaults>
</compile_context>

<pallas_src>
import functools

import jax
import jax.numpy as jnp
import numpy as np
from jax.experimental import pallas as pl
from jax.experimental.pallas import tpu as pltpu

_BN_EPS = 1e-5


# ---------------------------------------------------------------------------
# Fused BasicBlock kernel: one image per grid step.
#   out = relu( conv2(relu(conv1(x) + b1)) + b2 + x )
# (BN scales already folded into the conv weights by the wrapper.)
#
# Scratch:
#   xs_ref : (h+2, w, 3*cp) bf16 — for each dx block, the dx-shifted padded
#            conv input; per-dy slices flatten to a contiguous (h*w, 3*cp) LHS.
#   acc_ref: (h, w, cp) f32 accumulator.
# ---------------------------------------------------------------------------
def _basic_block_kernel(x_ref, w1_ref, b1_ref, w2_ref, b2_ref, o_ref,
                        xs_ref, acc_ref, *, h, w, cp):
    k3 = 3 * cp

    def write_shifted(v):
        # v: (h, w, cp) bf16 conv input.  Halo rows / shifted-in columns are
        # never touched here, so they stay zero across both convs and steps.
        xs_ref[1:h + 1, :, cp:2 * cp] = v                           # dx = 1
        xs_ref[1:h + 1, 1:w, 0:cp] = v[:, 0:w - 1, :]               # dx = 0
        xs_ref[1:h + 1, 0:w - 1, 2 * cp:3 * cp] = v[:, 1:w, :]      # dx = 2

    def conv3x3(w_ref):
        # 3x3 conv (pad=1, stride=1) = 3 matmuls (one per dy) with K = 3*cp.
        for dy in range(3):                                  # unrolled, static
            lhs = xs_ref[dy:dy + h, :, :].reshape(h * w, k3)  # contiguous view
            prod = jnp.dot(lhs, w_ref[dy],
                           preferred_element_type=jnp.float32).reshape(h, w, cp)
            if dy == 0:
                acc_ref[...] = prod
            else:
                acc_ref[...] += prod

    # Zero only the halo: rows 0 and h+1, plus the shifted-in column of the
    # dx=0 and dx=2 blocks.  Everything else is overwritten by write_shifted.
    zero_row = jnp.zeros((1, w, k3), xs_ref.dtype)
    xs_ref[0:1, :, :] = zero_row
    xs_ref[h + 1:h + 2, :, :] = zero_row
    zero_col = jnp.zeros((h, 1, cp), xs_ref.dtype)
    xs_ref[1:h + 1, 0:1, 0:cp] = zero_col
    xs_ref[1:h + 1, w - 1:w, 2 * cp:3 * cp] = zero_col

    # ---- conv1 (BN1 scale folded into w1) + bias + ReLU ----
    write_shifted(x_ref[0].astype(jnp.bfloat16))
    conv3x3(w1_ref)
    out1 = jnp.maximum(acc_ref[...] + b1_ref[...], 0.0)     # (h, w, cp) f32

    # ---- conv2 (BN2 scale folded into w2) + bias + residual + ReLU ----
    write_shifted(out1.astype(jnp.bfloat16))
    conv3x3(w2_ref)
    o_ref[0] = jnp.maximum(
        acc_ref[...] + b2_ref[...] + x_ref[0].astype(jnp.float32),
        0.0).astype(o_ref.dtype)


# ---------------------------------------------------------------------------
# Wrapper: weight / bias preparation + pallas_call
# ---------------------------------------------------------------------------
def _round_up(v, m):
    return ((v + m - 1) // m) * m


def _fold_bn(gamma, beta, mean, var):
    scale = gamma / jnp.sqrt(var + _BN_EPS)
    bias = beta - mean * scale
    return scale, bias


def _prep_weight(w_oihw, bn_scale, cp):
    """(Cout,Cin,3,3) -> (3, 3*Cp, Cp) bf16; rows ordered dx-major then Cin so
    they line up with the [dx0|dx1|dx2] channel blocks of the LHS lanes."""
    cout, cin = w_oihw.shape[0], w_oihw.shape[1]
    w_hwio = jnp.transpose(w_oihw, (2, 3, 1, 0)) * bn_scale[None, None, None, :]
    w_hwio = jnp.pad(w_hwio, ((0, 0), (0, 0), (0, cp - cin), (0, cp - cout)))
    return w_hwio.reshape(3, 3 * cp, cp).astype(jnp.bfloat16)


def _prep_bias(bn_bias, cp):
    c = bn_bias.shape[0]
    return jnp.pad(bn_bias, (0, cp - c)).reshape(1, 1, cp).astype(jnp.float32)


def basic_block_forward_nhwc(x_nhwc, w1, s1, bias1, w2, s2, bias2):
    """Fused BasicBlock forward, NHWC in / NHWC out (stride=1, no downsample)."""
    n, h, w, c = x_nhwc.shape
    assert w1.shape == (c, c, 3, 3) and w2.shape == (c, c, 3, 3), (
        "fused residual path requires inplanes == planes (stride=1, "
        "downsample=None)")
    cp = _round_up(c, 128)              # lane-dense channel width

    # Pad channels to Cp so every kernel load/store is unmasked and padded
    # lanes are provably zero (they also keep the residual add lane-dense).
    x_in = x_nhwc if cp == c else jnp.pad(
        x_nhwc, ((0, 0), (0, 0), (0, 0), (0, cp - c)))

    w1m = _prep_weight(w1, s1, cp)
    w2m = _prep_weight(w2, s2, cp)
    b1p = _prep_bias(bias1, cp)
    b2p = _prep_bias(bias2, cp)

    kernel = functools.partial(_basic_block_kernel, h=h, w=w, cp=cp)
    out = pl.pallas_call(
        kernel,
        out_shape=jax.ShapeDtypeStruct((n, h, w, cp), x_nhwc.dtype),
        grid_spec=pltpu.PrefetchScalarGridSpec(
            num_scalar_prefetch=0,
            grid=(n,),
            in_specs=[
                pl.BlockSpec((1, h, w, cp), lambda i: (i, 0, 0, 0)),   # x
                pl.BlockSpec((3, 3 * cp, cp), lambda i: (0, 0, 0)),    # w1 bf16
                pl.BlockSpec((1, 1, cp), lambda i: (0, 0, 0)),         # bias1
                pl.BlockSpec((3, 3 * cp, cp), lambda i: (0, 0, 0)),    # w2 bf16
                pl.BlockSpec((1, 1, cp), lambda i: (0, 0, 0)),         # bias2
            ],
            out_specs=pl.BlockSpec((1, h, w, cp), lambda i: (i, 0, 0, 0)),
            scratch_shapes=[
                pltpu.VMEM((h + 2, w, 3 * cp), jnp.bfloat16),  # shifted input
                pltpu.VMEM((h, w, cp), jnp.float32),           # f32 accumulator
            ]),
        compiler_params=pltpu.CompilerParams(
            dimension_semantics=("parallel",)),
    )(x_in, w1m, b1p, w2m, b2p)
    return out if cp == c else out[..., :c]   # drop zero padded channels


# ---------------------------------------------------------------------------
# BasicBlock module (parameters generated deterministically in-script)
# ---------------------------------------------------------------------------
class BasicBlockPallas:
    """Pallas equivalent of the PyTorch BasicBlock (BatchNorm in eval mode)."""

    def __init__(self, inplanes, planes, stride=1, downsample=None, *, key):
        assert downsample is None, "only downsample=None is supported"
        # With downsample=None, the PyTorch forward itself requires stride==1
        # and inplanes==planes for the residual add to be shape-compatible.
        assert stride == 1 and inplanes == planes, (
            "residual path requires stride=1 and inplanes == planes when "
            "downsample is None")
        self.stride = stride
        ks = jax.random.split(key, 10)
        f32 = jnp.float32
        # conv weights (PyTorch OIHW), no bias.
        self.w1 = 0.1 * jax.random.normal(ks[0], (planes, inplanes, 3, 3), f32)
        self.w2 = 0.1 * jax.random.normal(ks[1], (planes, planes, 3, 3), f32)
        # BatchNorm parameters + running stats (inference-mode semantics).
        self.g1 = 1.0 + 0.1 * jax.random.normal(ks[2], (planes,), f32)
        self.b1 = 0.1 * jax.random.normal(ks[3], (planes,), f32)
        self.m1 = 0.1 * jax.random.normal(ks[4], (planes,), f32)
        self.v1 = 0.5 + jnp.abs(jax.random.normal(ks[5], (planes,), f32))
        self.g2 = 1.0 + 0.1 * jax.random.normal(ks[6], (planes,), f32)
        self.b2 = 0.1 * jax.random.normal(ks[7], (planes,), f32)
        self.m2 = 0.1 * jax.random.normal(ks[8], (planes,), f32)
        self.v2 = 0.5 + jnp.abs(jax.random.normal(ks[9], (planes,), f32))

    def forward_nhwc(self, x_nhwc):
        """NHWC entry point (skips the NCHW<->NHWC transposes entirely)."""
        s1, bb1 = _fold_bn(self.g1, self.b1, self.m1, self.v1)
        s2, bb2 = _fold_bn(self.g2, self.b2, self.m2, self.v2)
        return basic_block_forward_nhwc(x_nhwc, self.w1, s1, bb1,
                                        self.w2, s2, bb2)

    def __call__(self, x_nchw):
        # NCHW API to match nn.Conv2d; prefer forward_nhwc when the caller can
        # keep activations in NHWC.
        x = jnp.transpose(x_nchw, (0, 2, 3, 1))          # NCHW -> NHWC
        out = self.forward_nhwc(x)
        return jnp.transpose(out, (0, 3, 1, 2))          # NHWC -> NCHW


# ---------------------------------------------------------------------------
# Pure-JAX reference (same inference-mode BN) for a sanity check
# ---------------------------------------------------------------------------
def _ref_forward(block, x_nchw):
    x = jnp.transpose(x_nchw, (0, 2, 3, 1))

    def conv(inp, w, stride):
        w_hwio = jnp.transpose(w, (2, 3, 1, 0))
        return jax.lax.conv_general_dilated(
            inp, w_hwio, (stride, stride), ((1, 1), (1, 1)),
            dimension_numbers=("NHWC", "HWIO", "NHWC"))

    s1, b1 = _fold_bn(block.g1, block.b1, block.m1, block.v1)
    s2, b2 = _fold_bn(block.g2, block.b2, block.m2, block.v2)
    out = jnp.maximum(conv(x, block.w1, block.stride) * s1 + b1, 0.0)
    out = conv(out, block.w2, 1) * s2 + b2
    out = jnp.maximum(out + x, 0.0)
    return jnp.transpose(out, (0, 3, 1, 2))


if __name__ == "__main__":
    key = jax.random.PRNGKey(0)
    k_x, k_p = jax.random.split(key)

    N, C, H, W = 2, 4, 16, 16
    x = jax.random.normal(k_x, (N, C, H, W), jnp.float32)

    block = BasicBlockPallas(inplanes=C, planes=C, stride=1, downsample=None,
                             key=k_p)

    fwd = jax.jit(block.__call__)
    y = jax.block_until_ready(fwd(x))

    y_ref = _ref_forward(block, x)
    # bf16 MXU inputs with f32 accumulation -> loosened tolerance.
    np.testing.assert_allclose(np.asarray(y), np.asarray(y_ref),
                               rtol=2e-2, atol=2e-2)
    assert y.shape == (N, C, H, W)

    print("KERNEL_OK")
</pallas_src>

<mosaic_0001>
module attributes {stable_mosaic.version = 11 : i64} {
  func.func @_basic_block_kernel(%arg0: i32, %arg1: memref<1x16x16x128xf32, #tpu.memory_space<vmem>>, %arg2: memref<3x384x128xbf16, #tpu.memory_space<vmem>>, %arg3: memref<1x1x128xf32, #tpu.memory_space<vmem>>, %arg4: memref<3x384x128xbf16, #tpu.memory_space<vmem>>, %arg5: memref<1x1x128xf32, #tpu.memory_space<vmem>>, %arg6: memref<1x16x16x128xf32, #tpu.memory_space<vmem>>, %arg7: memref<18x16x384xbf16, #tpu.memory_space<vmem>>, %arg8: memref<16x16x128xf32, #tpu.memory_space<vmem>>) attributes {dimension_semantics = [#tpu.dimension_semantics<parallel>], iteration_bounds = array<i64: 2>, scalar_prefetch = 0 : i64, scratch_operands = 2 : i64, tpu.core_type = #tpu.core_type<tc>, window_params = [{transform_indices = @transform_0, window_bounds = array<i64: 1, 16, 16, 128>}, {pipeline_mode = #tpu.pipeline_mode<synchronous>, transform_indices = @transform_1, window_bounds = array<i64: 3, 384, 128>}, {pipeline_mode = #tpu.pipeline_mode<synchronous>, transform_indices = @transform_2, window_bounds = array<i64: 1, 1, 128>}, {pipeline_mode = #tpu.pipeline_mode<synchronous>, transform_indices = @transform_3, window_bounds = array<i64: 3, 384, 128>}, {pipeline_mode = #tpu.pipeline_mode<synchronous>, transform_indices = @transform_4, window_bounds = array<i64: 1, 1, 128>}, {transform_indices = @transform_5, window_bounds = array<i64: 1, 16, 16, 128>}]} {
    %cst = arith.constant 0.000000e+00 : bf16
    %0 = vector.broadcast %cst : bf16 to vector<1x16x384xbf16>
    %c0 = arith.constant 0 : index
    %c0_0 = arith.constant 0 : index
    %c0_1 = arith.constant 0 : index
    %1 = vector.load %arg7[%c0, %c0_0, %c0_1] : memref<18x16x384xbf16, #tpu.memory_space<vmem>>, vector<1x16x384xbf16>
    tpu.vector_store %arg7[%c0, %c0_0, %c0_1], %0 {strides = array<i32>} : memref<18x16x384xbf16, #tpu.memory_space<vmem>>, vector<1x16x384xbf16>,
    %c17 = arith.constant 17 : index
    %c0_2 = arith.constant 0 : index
    %c0_3 = arith.constant 0 : index
    %2 = vector.load %arg7[%c17, %c0_2, %c0_3] : memref<18x16x384xbf16, #tpu.memory_space<vmem>>, vector<1x16x384xbf16>
    tpu.vector_store %arg7[%c17, %c0_2, %c0_3], %0 {strides = array<i32>} : memref<18x16x384xbf16, #tpu.memory_space<vmem>>, vector<1x16x384xbf16>,
    %cst_4 = arith.constant 0.000000e+00 : bf16
    %3 = vector.broadcast %cst_4 : bf16 to vector<16x1x128xbf16>
    %c1 = arith.constant 1 : index
    %c0_5 = arith.constant 0 : index
    %c0_6 = arith.constant 0 : index
    %4 = vector.load %arg7[%c1, %c0_5, %c0_6] : memref<18x16x384xbf16, #tpu.memory_space<vmem>>, vector<16x1x128xbf16>
    tpu.vector_store %arg7[%c1, %c0_5, %c0_6], %3 {strides = array<i32>} : memref<18x16x384xbf16, #tpu.memory_space<vmem>>, vector<16x1x128xbf16>,
    %c1_7 = arith.constant 1 : index
    %c15 = arith.constant 15 : index
    %c256 = arith.constant 256 : index
    %5 = vector.load %arg7[%c1_7, %c15, %c256] : memref<18x16x384xbf16, #tpu.memory_space<vmem>>, vector<16x1x128xbf16>
    tpu.vector_store %arg7[%c1_7, %c15, %c256], %3 {strides = array<i32>} : memref<18x16x384xbf16, #tpu.memory_space<vmem>>, vector<16x1x128xbf16>,
    %c0_8 = arith.constant 0 : index
    %c0_9 = arith.constant 0 : index
    %c0_10 = arith.constant 0 : index
    %c0_11 = arith.constant 0 : index
    %6 = vector.load %arg1[%c0_8, %c0_9, %c0_10, %c0_11] : memref<1x16x16x128xf32, #tpu.memory_space<vmem>>, vector<1x16x16x128xf32>
    %7 = vector.shape_cast %6 : vector<1x16x16x128xf32> to vector<16x16x128xf32>
    %8 = arith.truncf %7 : vector<16x16x128xf32> to vector<16x16x128xbf16>
    %c1_12 = arith.constant 1 : index
    %c0_13 = arith.constant 0 : index
    %c128 = arith.constant 128 : index
    %9 = vector.load %arg7[%c1_12, %c0_13, %c128] : memref<18x16x384xbf16, #tpu.memory_space<vmem>>, vector<16x16x128xbf16>
    tpu.vector_store %arg7[%c1_12, %c0_13, %c128], %8 {strides = array<i32>} : memref<18x16x384xbf16, #tpu.memory_space<vmem>>, vector<16x16x128xbf16>,
    %10 = vector.extract_strided_slice %8 {offsets = [0, 0, 0], sizes = [16, 15, 128], strides = [1, 1, 1]} : vector<16x16x128xbf16> to vector<16x15x128xbf16>
    %c1_14 = arith.constant 1 : index
    %c1_15 = arith.constant 1 : index
    %c0_16 = arith.constant 0 : index
    %11 = vector.load %arg7[%c1_14, %c1_15, %c0_16] : memref<18x16x384xbf16, #tpu.memory_space<vmem>>, vector<16x15x128xbf16>
    tpu.vector_store %arg7[%c1_14, %c1_15, %c0_16], %10 {strides = array<i32>} : memref<18x16x384xbf16, #tpu.memory_space<vmem>>, vector<16x15x128xbf16>,
    %12 = vector.extract_strided_slice %8 {offsets = [0, 1, 0], sizes = [16, 15, 128], strides = [1, 1, 1]} : vector<16x16x128xbf16> to vector<16x15x128xbf16>
    %c1_17 = arith.constant 1 : index
    %c0_18 = arith.constant 0 : index
    %c256_19 = arith.constant 256 : index
    %13 = vector.load %arg7[%c1_17, %c0_18, %c256_19] : memref<18x16x384xbf16, #tpu.memory_space<vmem>>, vector<16x15x128xbf16>
    tpu.vector_store %arg7[%c1_17, %c0_18, %c256_19], %12 {strides = array<i32>} : memref<18x16x384xbf16, #tpu.memory_space<vmem>>, vector<16x15x128xbf16>,
    %c0_20 = arith.constant 0 : index
    %c0_21 = arith.constant 0 : index
    %c0_22 = arith.constant 0 : index
    %14 = vector.load %arg7[%c0_20, %c0_21, %c0_22] : memref<18x16x384xbf16, #tpu.memory_space<vmem>>, vector<16x16x384xbf16>
    %15 = vector.shape_cast %14 : vector<16x16x384xbf16> to vector<256x384xbf16>
    %c0_23 = arith.constant 0 : index
    %c0_24 = arith.constant 0 : index
    %c0_25 = arith.constant 0 : index
    %16 = vector.load %arg2[%c0_23, %c0_24, %c0_25] : memref<3x384x128xbf16, #tpu.memory_space<vmem>>, vector<1x384x128xbf16>
    %17 = vector.shape_cast %16 : vector<1x384x128xbf16> to vector<384x128xbf16>
    %cst_26 = arith.constant dense<0.000000e+00> : vector<256x128xf32>
    %18 = tpu.matmul %15, %17, %cst_26 {dimension_numbers = #tpu.dot_dimension_numbers<[1], [0], [0], [1], [0, 0, 1, 1], [], []>} : vector<256x384xbf16>, vector<384x128xbf16>, vector<256x128xf32> -> vector<256x128xf32>
    %19 = vector.shape_cast %18 : vector<256x128xf32> to vector<16x16x128xf32>
    %c0_27 = arith.constant 0 : index
    %c0_28 = arith.constant 0 : index
    %c0_29 = arith.constant 0 : index
    %20 = vector.load %arg8[%c0_27, %c0_28, %c0_29] : memref<16x16x128xf32, #tpu.memory_space<vmem>>, vector<16x16x128xf32>
    tpu.vector_store %arg8[%c0_27, %c0_28, %c0_29], %19 {strides = array<i32>} : memref<16x16x128xf32, #tpu.memory_space<vmem>>, vector<16x16x128xf32>,
    %c1_30 = arith.constant 1 : index
    %c0_31 = arith.constant 0 : index
    %c0_32 = arith.constant 0 : index
    %21 = vector.load %arg7[%c1_30, %c0_31, %c0_32] : memref<18x16x384xbf16, #tpu.memory_space<vmem>>, vector<16x16x384xbf16>
    %22 = vector.shape_cast %21 : vector<16x16x384xbf16> to vector<256x384xbf16>
    %c1_33 = arith.constant 1 : index
    %c0_34 = arith.constant 0 : index
    %c0_35 = arith.constant 0 : index
    %23 = vector.load %arg2[%c1_33, %c0_34, %c0_35] : memref<3x384x128xbf16, #tpu.memory_space<vmem>>, vector<1x384x128xbf16>
    %24 = vector.shape_cast %23 : vector<1x384x128xbf16> to vector<384x128xbf16>
    %cst_36 = arith.constant dense<0.000000e+00> : vector<256x128xf32>
    %25 = tpu.matmul %22, %24, %cst_36 {dimension_numbers = #tpu.dot_dimension_numbers<[1], [0], [0], [1], [0, 0, 1, 1], [], []>} : vector<256x384xbf16>, vector<384x128xbf16>, vector<256x128xf32> -> vector<256x128xf32>
    %26 = vector.shape_cast %25 : vector<256x128xf32> to vector<16x16x128xf32>
    %c0_37 = arith.constant 0 : index
    %c0_38 = arith.constant 0 : index
    %c0_39 = arith.constant 0 : index
    %27 = vector.load %arg8[%c0_37, %c0_38, %c0_39] : memref<16x16x128xf32, #tpu.memory_space<vmem>>, vector<16x16x128xf32>
    %28 = arith.addf %27, %26 : vector<16x16x128xf32>
    %c0_40 = arith.constant 0 : index
    %c0_41 = arith.constant 0 : index
    %c0_42 = arith.constant 0 : index
    %29 = vector.load %arg8[%c0_40, %c0_41, %c0_42] : memref<16x16x128xf32, #tpu.memory_space<vmem>>, vector<16x16x128xf32>
    tpu.vector_store %arg8[%c0_40, %c0_41, %c0_42], %28 {strides = array<i32>} : memref<16x16x128xf32, #tpu.memory_space<vmem>>, vector<16x16x128xf32>,
    %c2 = arith.constant 2 : index
    %c0_43 = arith.constant 0 : index
    %c0_44 = arith.constant 0 : index
    %30 = vector.load %arg7[%c2, %c0_43, %c0_44] : memref<18x16x384xbf16, #tpu.memory_space<vmem>>, vector<16x16x384xbf16>
    %31 = vector.shape_cast %30 : vector<16x16x384xbf16> to vector<256x384xbf16>
    %c2_45 = arith.constant 2 : index
    %c0_46 = arith.constant 0 : index
    %c0_47 = arith.constant 0 : index
    %32 = vector.load %arg2[%c2_45, %c0_46, %c0_47] : memref<3x384x128xbf16, #tpu.memory_space<vmem>>, vector<1x384x128xbf16>
    %33 = vector.shape_cast %32 : vector<1x384x128xbf16> to vector<384x128xbf16>
    %cst_48 = arith.constant dense<0.000000e+00> : vector<256x128xf32>
    %34 = tpu.matmul %31, %33, %cst_48 {dimension_numbers = #tpu.dot_dimension_numbers<[1], [0], [0], [1], [0, 0, 1, 1], [], []>} : vector<256x384xbf16>, vector<384x128xbf16>, vector<256x128xf32> -> vector<256x128xf32>
    %35 = vector.shape_cast %34 : vector<256x128xf32> to vector<16x16x128xf32>
    %c0_49 = arith.constant 0 : index
    %c0_50 = arith.constant 0 : index
    %c0_51 = arith.constant 0 : index
    %36 = vector.load %arg8[%c0_49, %c0_50, %c0_51] : memref<16x16x128xf32, #tpu.memory_space<vmem>>, vector<16x16x128xf32>
    %37 = arith.addf %36, %35 : vector<16x16x128xf32>
    %c0_52 = arith.constant 0 : index
    %c0_53 = arith.constant 0 : index
    %c0_54 = arith.constant 0 : index
    %38 = vector.load %arg8[%c0_52, %c0_53, %c0_54] : memref<16x16x128xf32, #tpu.memory_space<vmem>>, vector<16x16x128xf32>
    tpu.vector_store %arg8[%c0_52, %c0_53, %c0_54], %37 {strides = array<i32>} : memref<16x16x128xf32, #tpu.memory_space<vmem>>, vector<16x16x128xf32>,
    %c0_55 = arith.constant 0 : index
    %c0_56 = arith.constant 0 : index
    %c0_57 = arith.constant 0 : index
    %39 = vector.load %arg8[%c0_55, %c0_56, %c0_57] : memref<16x16x128xf32, #tpu.memory_space<vmem>>, vector<16x16x128xf32>
    %c0_58 = arith.constant 0 : index
    %c0_59 = arith.constant 0 : index
    %c0_60 = arith.constant 0 : index
    %40 = vector.load %arg3[%c0_58, %c0_59, %c0_60] : memref<1x1x128xf32, #tpu.memory_space<vmem>>, vector<1x1x128xf32>
    %41 = vector.broadcast %40 : vector<1x1x128xf32> to vector<16x16x128xf32>
    %42 = arith.addf %39, %41 : vector<16x16x128xf32>
    %cst_61 = arith.constant 0.000000e+00 : f32
    %43 = vector.broadcast %cst_61 : f32 to vector<16x16x128xf32>
    %44 = arith.maximumf %42, %43 : vector<16x16x128xf32>
    %45 = arith.truncf %44 : vector<16x16x128xf32> to vector<16x16x128xbf16>
    %c1_62 = arith.constant 1 : index
    %c0_63 = arith.constant 0 : index
    %c128_64 = arith.constant 128 : index
    %46 = vector.load %arg7[%c1_62, %c0_63, %c128_64] : memref<18x16x384xbf16, #tpu.memory_space<vmem>>, vector<16x16x128xbf16>
    tpu.vector_store %arg7[%c1_62, %c0_63, %c128_64], %45 {strides = array<i32>} : memref<18x16x384xbf16, #tpu.memory_space<vmem>>, vector<16x16x128xbf16>,
    %47 = vector.extract_strided_slice %45 {offsets = [0, 0, 0], sizes = [16, 15, 128], strides = [1, 1, 1]} : vector<16x16x128xbf16> to vector<16x15x128xbf16>
    %c1_65 = arith.constant 1 : index
    %c1_66 = arith.constant 1 : index
    %c0_67 = arith.constant 0 : index
    %48 = vector.load %arg7[%c1_65, %c1_66, %c0_67] : memref<18x16x384xbf16, #tpu.memory_space<vmem>>, vector<16x15x128xbf16>
    tpu.vector_store %arg7[%c1_65, %c1_66, %c0_67], %47 {strides = array<i32>} : memref<18x16x384xbf16, #tpu.memory_space<vmem>>, vector<16x15x128xbf16>,
    %49 = vector.extract_strided_slice %45 {offsets = [0, 1, 0], sizes = [16, 15, 128], strides = [1, 1, 1]} : vector<16x16x128xbf16> to vector<16x15x128xbf16>
    %c1_68 = arith.constant 1 : index
    %c0_69 = arith.constant 0 : index
    %c256_70 = arith.constant 256 : index
    %50 = vector.load %arg7[%c1_68, %c0_69, %c256_70] : memref<18x16x384xbf16, #tpu.memory_space<vmem>>, vector<16x15x128xbf16>
    tpu.vector_store %arg7[%c1_68, %c0_69, %c256_70], %49 {strides = array<i32>} : memref<18x16x384xbf16, #tpu.memory_space<vmem>>, vector<16x15x128xbf16>,
    %c0_71 = arith.constant 0 : index
    %c0_72 = arith.constant 0 : index
    %c0_73 = arith.constant 0 : index
    %51 = vector.load %arg7[%c0_71, %c0_72, %c0_73] : memref<18x16x384xbf16, #tpu.memory_space<vmem>>, vector<16x16x384xbf16>
    %52 = vector.shape_cast %51 : vector<16x16x384xbf16> to vector<256x384xbf16>
    %c0_74 = arith.constant 0 : index
    %c0_75 = arith.constant 0 : index
    %c0_76 = arith.constant 0 : index
    %53 = vector.load %arg4[%c0_74, %c0_75, %c0_76] : memref<3x384x128xbf16, #tpu.memory_space<vmem>>, vector<1x384x128xbf16>
    %54 = vector.shape_cast %53 : vector<1x384x128xbf16> to vector<384x128xbf16>
    %cst_77 = arith.constant dense<0.000000e+00> : vector<256x128xf32>
    %55 = tpu.matmul %52, %54, %cst_77 {dimension_numbers = #tpu.dot_dimension_numbers<[1], [0], [0], [1], [0, 0, 1, 1], [], []>} : vector<256x384xbf16>, vector<384x128xbf16>, vector<256x128xf32> -> vector<256x128xf32>
    %56 = vector.shape_cast %55 : vector<256x128xf32> to vector<16x16x128xf32>
    %c0_78 = arith.constant 0 : index
    %c0_79 = arith.constant 0 : index
    %c0_80 = arith.constant 0 : index
    %57 = vector.load %arg8[%c0_78, %c0_79, %c0_80] : memref<16x16x128xf32, #tpu.memory_space<vmem>>, vector<16x16x128xf32>
    tpu.vector_store %arg8[%c0_78, %c0_79, %c0_80], %56 {strides = array<i32>} : memref<16x16x128xf32, #tpu.memory_space<vmem>>, vector<16x16x128xf32>,
    %c1_81 = arith.constant 1 : index
    %c0_82 = arith.constant 0 : index
    %c0_83 = arith.constant 0 : index
    %58 = vector.load %arg7[%c1_81, %c0_82, %c0_83] : memref<18x16x384xbf16, #tpu.memory_space<vmem>>, vector<16x16x384xbf16>
    %59 = vector.shape_cast %58 : vector<16x16x384xbf16> to vector<256x384xbf16>
    %c1_84 = arith.constant 1 : index
    %c0_85 = arith.constant 0 : index
    %c0_86 = arith.constant 0 : index
    %60 = vector.load %arg4[%c1_84, %c0_85, %c0_86] : memref<3x384x128xbf16, #tpu.memory_space<vmem>>, vector<1x384x128xbf16>
    %61 = vector.shape_cast %60 : vector<1x384x128xbf16> to vector<384x128xbf16>
    %cst_87 = arith.constant dense<0.000000e+00> : vector<256x128xf32>
    %62 = tpu.matmul %59, %61, %cst_87 {dimension_numbers = #tpu.dot_dimension_numbers<[1], [0], [0], [1], [0, 0, 1, 1], [], []>} : vector<256x384xbf16>, vector<384x128xbf16>, vector<256x128xf32> -> vector<256x128xf32>
    %63 = vector.shape_cast %62 : vector<256x128xf32> to vector<16x16x128xf32>
    %c0_88 = arith.constant 0 : index
    %c0_89 = arith.constant 0 : index
    %c0_90 = arith.constant 0 : index
    %64 = vector.load %arg8[%c0_88, %c0_89, %c0_90] : memref<16x16x128xf32, #tpu.memory_space<vmem>>, vector<16x16x128xf32>
    %65 = arith.addf %64, %63 : vector<16x16x128xf32>
    %c0_91 = arith.constant 0 : index
    %c0_92 = arith.constant 0 : index
    %c0_93 = arith.constant 0 : index
    %66 = vector.load %arg8[%c0_91, %c0_92, %c0_93] : memref<16x16x128xf32, #tpu.memory_space<vmem>>, vector<16x16x128xf32>
    tpu.vector_store %arg8[%c0_91, %c0_92, %c0_93], %65 {strides = array<i32>} : memref<16x16x128xf32, #tpu.memory_space<vmem>>, vector<16x16x128xf32>,
    %c2_94 = arith.constant 2 : index
    %c0_95 = arith.constant 0 : index
    %c0_96 = arith.constant 0 : index
    %67 = vector.load %arg7[%c2_94, %c0_95, %c0_96] : memref<18x16x384xbf16, #tpu.memory_space<vmem>>, vector<16x16x384xbf16>
    %68 = vector.shape_cast %67 : vector<16x16x384xbf16> to vector<256x384xbf16>
    %c2_97 = arith.constant 2 : index
    %c0_98 = arith.constant 0 : index
    %c0_99 = arith.constant 0 : index
    %69 = vector.load %arg4[%c2_97, %c0_98, %c0_99] : memref<3x384x128xbf16, #tpu.memory_space<vmem>>, vector<1x384x128xbf16>
    %70 = vector.shape_cast %69 : vector<1x384x128xbf16> to vector<384x128xbf16>
    %cst_100 = arith.constant dense<0.000000e+00> : vector<256x128xf32>
    %71 = tpu.matmul %68, %70, %cst_100 {dimension_numbers = #tpu.dot_dimension_numbers<[1], [0], [0], [1], [0, 0, 1, 1], [], []>} : vector<256x384xbf16>, vector<384x128xbf16>, vector<256x128xf32> -> vector<256x128xf32>
    %72 = vector.shape_cast %71 : vector<256x128xf32> to vector<16x16x128xf32>
    %c0_101 = arith.constant 0 : index
    %c0_102 = arith.constant 0 : index
    %c0_103 = arith.constant 0 : index
    %73 = vector.load %arg8[%c0_101, %c0_102, %c0_103] : memref<16x16x128xf32, #tpu.memory_space<vmem>>, vector<16x16x128xf32>
    %74 = arith.addf %73, %72 : vector<16x16x128xf32>
    %c0_104 = arith.constant 0 : index
    %c0_105 = arith.constant 0 : index
    %c0_106 = arith.constant 0 : index
    %75 = vector.load %arg8[%c0_104, %c0_105, %c0_106] : memref<16x16x128xf32, #tpu.memory_space<vmem>>, vector<16x16x128xf32>
    tpu.vector_store %arg8[%c0_104, %c0_105, %c0_106], %74 {strides = array<i32>} : memref<16x16x128xf32, #tpu.memory_space<vmem>>, vector<16x16x128xf32>,
    %c0_107 = arith.constant 0 : index
    %c0_108 = arith.constant 0 : index
    %c0_109 = arith.constant 0 : index
    %76 = vector.load %arg8[%c0_107, %c0_108, %c0_109] : memref<16x16x128xf32, #tpu.memory_space<vmem>>, vector<16x16x128xf32>
    %c0_110 = arith.constant 0 : index
    %c0_111 = arith.constant 0 : index
    %c0_112 = arith.constant 0 : index
    %77 = vector.load %arg5[%c0_110, %c0_111, %c0_112] : memref<1x1x128xf32, #tpu.memory_space<vmem>>, vector<1x1x128xf32>
    %78 = vector.broadcast %77 : vector<1x1x128xf32> to vector<16x16x128xf32>
    %79 = arith.addf %76, %78 : vector<16x16x128xf32>
    %c0_113 = arith.constant 0 : index
    %c0_114 = arith.constant 0 : index
    %c0_115 = arith.constant 0 : index
    %c0_116 = arith.constant 0 : index
    %80 = vector.load %arg1[%c0_113, %c0_114, %c0_115, %c0_116] : memref<1x16x16x128xf32, #tpu.memory_space<vmem>>, vector<1x16x16x128xf32>
    %81 = vector.shape_cast %80 : vector<1x16x16x128xf32> to vector<16x16x128xf32>
    %82 = arith.addf %79, %81 : vector<16x16x128xf32>
    %cst_117 = arith.constant 0.000000e+00 : f32
    %83 = vector.broadcast %cst_117 : f32 to vector<16x16x128xf32>
    %84 = arith.maximumf %82, %83 : vector<16x16x128xf32>
    %c0_118 = arith.constant 0 : index
    %c0_119 = arith.constant 0 : index
    %c0_120 = arith.constant 0 : index
    %c0_121 = arith.constant 0 : index
    %85 = vector.load %arg6[%c0_118, %c0_119, %c0_120, %c0_121] : memref<1x16x16x128xf32, #tpu.memory_space<vmem>>, vector<1x16x16x128xf32>
    %86 = vector.shape_cast %85 : vector<1x16x16x128xf32> to vector<16x16x128xf32>
    %87 = vector.shape_cast %84 : vector<16x16x128xf32> to vector<1x16x16x128xf32>
    tpu.vector_store %arg6[%c0_118, %c0_119, %c0_120, %c0_121], %87 {strides = array<i32>} : memref<1x16x16x128xf32, #tpu.memory_space<vmem>>, vector<1x16x16x128xf32>,
    return
  }
  func.func @transform_0(%arg0: i32) -> (i32, i32, i32, i32) {
    %c0_i32 = arith.constant 0 : i32
    %c0_i32_0 = arith.constant 0 : i32
    %c0_i32_1 = arith.constant 0 : i32
    %c0_i32_2 = arith.constant 0 : i32
    return %arg0, %c0_i32, %c0_i32_0, %c0_i32_1 : i32, i32, i32, i32
  }
  func.func @transform_1(%arg0: i32) -> (i32, i32, i32) {
    %c0_i32 = arith.constant 0 : i32
    %c0_i32_0 = arith.constant 0 : i32
    %c0_i32_1 = arith.constant 0 : i32
    %c0_i32_2 = arith.constant 0 : i32
    return %c0_i32, %c0_i32_0, %c0_i32_1 : i32, i32, i32
  }
  func.func @transform_2(%arg0: i32) -> (i32, i32, i32) {
    %c0_i32 = arith.constant 0 : i32
    %c0_i32_0 = arith.constant 0 : i32
    %c0_i32_1 = arith.constant 0 : i32
    %c0_i32_2 = arith.constant 0 : i32
    return %c0_i32, %c0_i32_0, %c0_i32_1 : i32, i32, i32
  }
  func.func @transform_3(%arg0: i32) -> (i32, i32, i32) {
    %c0_i32 = arith.constant 0 : i32
    %c0_i32_0 = arith.constant 0 : i32
    %c0_i32_1 = arith.constant 0 : i32
    %c0_i32_2 = arith.constant 0 : i32
    return %c0_i32, %c0_i32_0, %c0_i32_1 : i32, i32, i32
  }
  func.func @transform_4(%arg0: i32) -> (i32, i32, i32) {
    %c0_i32 = arith.constant 0 : i32
    %c0_i32_0 = arith.constant 0 : i32
    %c0_i32_1 = arith.constant 0 : i32
    %c0_i32_2 = arith.constant 0 : i32
    return %c0_i32, %c0_i32_0, %c0_i32_1 : i32, i32, i32
  }
  func.func @transform_5(%arg0: i32) -> (i32, i32, i32, i32) {
    %c0_i32 = arith.constant 0 : i32
    %c0_i32_0 = arith.constant 0 : i32
    %c0_i32_1 = arith.constant 0 : i32
    %c0_i32_2 = arith.constant 0 : i32
    return %arg0, %c0_i32, %c0_i32_0, %c0_i32_1 : i32, i32, i32, i32
  }
}

</mosaic_0001>

<llo_original>
// kernel: a_call__.1
$region0: #{a_call__.1}
  #allocation0 [shape = 'u32[]', space=smem, size = 0x4, offset = 0x4, fixed_abs, tag = 'smem constant byte address 0x4 - core index']
  #allocation1 [shape = 'u32[144,128]{1,0:T(1,128)}', space=vmem, size = 0x12000, scoped, tag = 'internal scratch']
  #allocation2 [shape = 'bf16[18,16,384]{2,1,0:T(16,128)(2,1)}', space=vmem, size = 0x36000, scoped, tag = 'scratch operand']
  #allocation3 [shape = 'f32[16,16,128]{2,1,0:T(8,128)}', space=vmem, size = 0x20000, scoped, tag = 'scratch operand']
  %s0 = inlined_call_operand.vmem [shape: f32[2,16,16,128], index: 0, kind: input, shape index: {}]
  %s1 = inlined_call_operand.vmem [shape: bf16[3,384,128], index: 1, kind: input, shape index: {}]
  %s2 = inlined_call_operand.vmem [shape: f32[1,1,128], index: 2, kind: input, shape index: {}]
  %s3 = inlined_call_operand.vmem [shape: bf16[3,384,128], index: 3, kind: input, shape index: {}]
  %s4 = inlined_call_operand.vmem [shape: f32[1,1,128], index: 4, kind: input, shape index: {}]
  %s5 = inlined_call_operand.vmem [shape: f32[2,16,16,128], index: 5, kind: output, shape index: {}]
  %s6 = sld [smem:[#allocation0]]
  $region53: #{a_call__.1} parent=0
    _
  %s8 = ssub.s32 1, %s6
  %s9 = scalar_select 0, %s8, %s6
  loop: start=0, step=1, limit=4
  $region2: #{a_call__.1} parent=0 // loop_pre_header
    _
  $region3: #{a_call__.1} parent=0 // loop_header
    %s11 = sphi 0, %s15
    %p12 = scmp.ge.s32.totalorder %s11, 4
    %s21 = sphi 0, %s23
    %s24 = sphi 0, %s21
    %s25 = sphi 0, %s24
    %s41 = sphi 0, %s25
    %s45 = sphi 0, %s45
    %s47 = sphi 0, %s45
    %s48 = sphi 0, %s47
    %s62 = sphi 0, %s48
    %s66 = sphi 0, %s66
    %s68 = sphi 0, %s66
    %s69 = sphi 0, %s68
    %s83 = sphi 0, %s69
    %s87 = sphi 0, %s87
    %s89 = sphi 0, %s87
    %s90 = sphi 0, %s89
    %s104 = sphi 0, %s90
    %s108 = sphi 0, %s108
    %s110 = sphi 0, %s108
    %s111 = sphi 0, %s110
    %s125 = sphi 0, %s111
    %s131 = sphi 0, %s133
    %s134 = sphi 0, %s131
    %s135 = sphi 0, %s134
    %s151 = sphi 0, %s135
  $region4: #{a_call__.1} parent=0 // loop_header_branch
    %14 = sbr.rel (%p12) target = $region8
  $region5: #{a_call__.1} parent=0 // loop_body
    %s16 = ssub.s32 %s11, 1
    %s17 = ssub.s32 %s11, 2
    %s18 = sadd.s32 %s11, 1
    %s19 = ssub.s32 %s11, %s18
    %p20 = scmp.eq.s32.totalorder %s19, 0
    %s22 = sadd.s32 %s21, 1
    %s23 = scalar_select %p20, %s21, %s22
    %p26 = pneg %p20
    %p27 = scmp.eq.s32.totalorder %s11, 1
    %p28 = por %p26, %p27
    %p29 = scmp.ne.s32.totalorder %s21, %s24
    %p30 = scmp.eq.s32.totalorder %s11, 0
    %p31 = por %p29, %p30
    %p32 = scmp.ne.s32.totalorder %s21, %s24
    %p33 = scmp.eq.s32.totalorder %s16, 1
    %p34 = por %p32, %p33
    %p35 = scmp.ne.s32.totalorder %s24, %s25
    %p36 = scmp.eq.s32.totalorder %s16, 0
    %p37 = por %p35, %p36
    %p38 = scmp.ne.s32.totalorder %s24, %s25
    %p39 = scmp.eq.s32.totalorder %s17, 1
    %p40 = por %p38, %p39
    %p42 = scmp.ne.s32.totalorder %s25, %s41
    %p43 = scmp.eq.s32.totalorder %s17, 0
    %p44 = por %p42, %p43
    %s46 = sadd.s32 %s45, 1
    %p49 = scmp.eq.s32.totalorder %s11, 1
    %p50 = scmp.ne.s32.totalorder %s45, %s47
    %p51 = scmp.eq.s32.totalorder %s11, 0
    %p52 = por %p50, %p51
    %p53 = scmp.ne.s32.totalorder %s45, %s47
    %p54 = scmp.eq.s32.totalorder %s16, 1
    %p55 = por %p53, %p54
    %p56 = scmp.ne.s32.totalorder %s47, %s48
    %p57 = scmp.eq.s32.totalorder %s16, 0
    %p58 = por %p56, %p57
    %p59 = scmp.ne.s32.totalorder %s47, %s48
    %p60 = scmp.eq.s32.totalorder %s17, 1
    %p61 = por %p59, %p60
    %p63 = scmp.ne.s32.totalorder %s48, %s62
    %p64 = scmp.eq.s32.totalorder %s17, 0
    %p65 = por %p63, %p64
    %s67 = sadd.s32 %s66, 1
    %p70 = scmp.eq.s32.totalorder %s11, 1
    %p71 = scmp.ne.s32.totalorder %s66, %s68
    %p72 = scmp.eq.s32.totalorder %s11, 0
    %p73 = por %p71, %p72
    %p74 = scmp.ne.s32.totalorder %s66, %s68
    %p75 = scmp.eq.s32.totalorder %s16, 1
    %p76 = por %p74, %p75
    %p77 = scmp.ne.s32.totalorder %s68, %s69
    %p78 = scmp.eq.s32.totalorder %s16, 0
    %p79 = por %p77, %p78
    %p80 = scmp.ne.s32.totalorder %s68, %s69
    %p81 = scmp.eq.s32.totalorder %s17, 1
    %p82 = por %p80, %p81
    %p84 = scmp.ne.s32.totalorder %s69, %s83
    %p85 = scmp.eq.s32.totalorder %s17, 0
    %p86 = por %p84, %p85
    %s88 = sadd.s32 %s87, 1
    %p91 = scmp.eq.s32.totalorder %s11, 1
    %p92 = scmp.ne.s32.totalorder %s87, %s89
    %p93 = scmp.eq.s32.totalorder %s11, 0
    %p94 = por %p92, %p93
    %p95 = scmp.ne.s32.totalorder %s87, %s89
    %p96 = scmp.eq.s32.totalorder %s16, 1
    %p97 = por %p95, %p96
    %p98 = scmp.ne.s32.totalorder %s89, %s90
    %p99 = scmp.eq.s32.totalorder %s16, 0
    %p100 = por %p98, %p99
    %p101 = scmp.ne.s32.totalorder %s89, %s90
    %p102 = scmp.eq.s32.totalorder %s17, 1
    %p103 = por %p101, %p102
    %p105 = scmp.ne.s32.totalorder %s90, %s104
    %p106 = scmp.eq.s32.totalorder %s17, 0
    %p107 = por %p105, %p106
    %s109 = sadd.s32 %s108, 1
    %p112 = scmp.eq.s32.totalorder %s11, 1
    %p113 = scmp.ne.s32.totalorder %s108, %s110
    %p114 = scmp.eq.s32.totalorder %s11, 0
    %p115 = por %p113, %p114
    %p116 = scmp.ne.s32.totalorder %s108, %s110
    %p117 = scmp.eq.s32.totalorder %s16, 1
    %p118 = por %p116, %p117
    %p119 = scmp.ne.s32.totalorder %s110, %s111
    %p120 = scmp.eq.s32.totalorder %s16, 0
    %p121 = por %p119, %p120
    %p122 = scmp.ne.s32.totalorder %s110, %s111
    %p123 = scmp.eq.s32.totalorder %s17, 1
    %p124 = por %p122, %p123
    %p126 = scmp.ne.s32.totalorder %s111, %s125
    %p127 = scmp.eq.s32.totalorder %s17, 0
    %p128 = por %p126, %p127
    %s129 = ssub.s32 %s11, %s18
    %p130 = scmp.eq.s32.totalorder %s129, 0
    %s132 = sadd.s32 %s131, 1
    %s133 = scalar_select %p130, %s131, %s132
    %p136 = pneg %p130
    %p137 = scmp.eq.s32.totalorder %s11, 1
    %p138 = por %p136, %p137
    %p139 = scmp.ne.s32.totalorder %s131, %s134
    %p140 = scmp.eq.s32.totalorder %s11, 0
    %p141 = por %p139, %p140
    %p142 = scmp.ne.s32.totalorder %s131, %s134
    %p143 = scmp.eq.s32.totalorder %s16, 1
    %p144 = por %p142, %p143
    %p145 = scmp.ne.s32.totalorder %s134, %s135
    %p146 = scmp.eq.s32.totalorder %s16, 0
    %p147 = por %p145, %p146
    %p148 = scmp.ne.s32.totalorder %s134, %s135
    %p149 = scmp.eq.s32.totalorder %s17, 1
    %p150 = por %p148, %p149
    %p152 = scmp.ne.s32.totalorder %s135, %s151
    %p153 = scmp.eq.s32.totalorder %s17, 0
    %p154 = por %p152, %p153
    %p155 = scmp.le.s32.totalorder 1, %s11
    %p156 = scmp.lt.s32.totalorder %s11, 3
    %p157 = pnand %p155, %p156
    %p158 = pneg %p157
    // Predicated region
    $region9: #{a_call__.1} parent=5 // pred_check
      _
    $region10: #{a_call__.1} parent=5 // pred_check_branch
      %160 = sbr.rel (%p157) target = $region12
    $region11: #{a_call__.1} parent=5 // pred_region
      %s161 = ssub.s32 %s11, 1
      // Predicated region
      $region13: #{a_call__.1} parent=11 // pred_check
        %p162 = pneg %p58
      $region14: #{a_call__.1} parent=11 // pred_check_branch
        %164 = sbr.rel (%p162) target = $region16
      $region15: #{a_call__.1} parent=11 // pred_region
        _
      $region16: #{a_call__.1} parent=11 // pred_fallthru
        _
      // Predicated region
      $region17: #{a_call__.1} parent=11 // pred_check
        %p165 = pneg %p79
      $region18: #{a_call__.1} parent=11 // pred_check_branch
        %167 = sbr.rel (%p165) target = $region20
      $region19: #{a_call__.1} parent=11 // pred_region
        _
      $region20: #{a_call__.1} parent=11 // pred_fallthru
        _
      // Predicated region
      $region21: #{a_call__.1} parent=11 // pred_check
        %p168 = pneg %p100
      $region22: #{a_call__.1} parent=11 // pred_check_branch
        %170 = sbr.rel (%p168) target = $region24
      $region23: #{a_call__.1} parent=11 // pred_region
        _
      $region24: #{a_call__.1} parent=11 // pred_fallthru
        _
      // Predicated region
      $region25: #{a_call__.1} parent=11 // pred_check
        %p171 = pneg %p121
      $region26: #{a_call__.1} parent=11 // pred_check_branch
        %173 = sbr.rel (%p171) target = $region28
      $region27: #{a_call__.1} parent=11 // pred_region
        _
      $region28: #{a_call__.1} parent=11 // pred_fallthru
        _
    $region12: #{a_call__.1} parent=5 // pred_fallthru
      _
    %p174 = scmp.lt.s32.totalorder %s11, 2
    // Predicated region
    $region29: #{a_call__.1} parent=5 // pred_check
      %p175 = pneg %p174
    $region30: #{a_call__.1} parent=5 // pred_check_branch
      %177 = sbr.rel (%p175) target = $region32
    $region31: #{a_call__.1} parent=5 // pred_region
      // Predicated region
      $region33: #{a_call__.1} parent=31 // pred_check
        %p178 = pneg %p31
      $region34: #{a_call__.1} parent=31 // pred_check_branch
        %180 = sbr.rel (%p178) target = $region36
      $region35: #{a_call__.1} parent=31 // pred_region
        %p181 = scmp.lt.s32.totalorder %s11, 1
        %s182 = scalar_select %p181, %s11, 1
        %s183 = smul.addr %s182, 32
        %s184 = smul.addr %s183, 8
        %s185 = scalar_lea.vmem %s0, %s184
      $region36: #{a_call__.1} parent=31 // pred_fallthru
        _
    $region32: #{a_call__.1} parent=5 // pred_fallthru
      _
    %p186 = scmp.le.s32.totalorder 1, %s11
    %p187 = scmp.lt.s32.totalorder %s11, 3
    %p188 = pnand %p186, %p187
    %p189 = pneg %p188
    // Predicated region
    $region37: #{a_call__.1} parent=5 // pred_check
      _
    $region38: #{a_call__.1} parent=5 // pred_check_branch
      %191 = sbr.rel (%p188) target = $region40
    $region39: #{a_call__.1} parent=5 // pred_region
      %s192 = ssub.s32 %s11, 1
      %p193 = scmp.lt.s32.totalorder %s16, 1
      %s194 = scalar_select %p193, %s16, 1
      %s195 = smul.addr %s194, 32
      %s196 = smul.addr %s195, 8
      %s197 = scalar_lea.vmem %s0, %s196
      %p198 = pneg %p37
      %p199 = pneg %p34
      %p200 = pneg %p58
      %p201 = pneg %p55
      %p202 = pneg %p79
      %p203 = pneg %p76
      %p204 = pneg %p100
      %p205 = pneg %p97
      %p206 = pneg %p121
      %p207 = pneg %p118
      %p208 = pneg %p147
      %p209 = pneg %p144
      %p210 = scmp.lt.s32.totalorder %s16, 1
      %s211 = scalar_select %p210, %s16, 1
      %s212 = smul.addr %s211, 32
      %s213 = smul.addr %s212, 8
      %s214 = scalar_lea.vmem %s5, %s213
      %p215 = scmp.lt.s32.totalorder %s16, 1
      %s216 = scalar_select %p215, %s16, 1
      %s217 = smul.addr %s216, 32
      %s218 = smul.addr %s217, 8
      %s219 = scalar_lea.vmem %s0, %s218
      %p220 = scmp.lt.s32.totalorder %s16, 1
      %s221 = scalar_select %p220, %s16, 1
      %s222 = smul.addr %s221, 32
      %s223 = smul.addr %s222, 8
      %s224 = scalar_lea.vmem %s5, %s223
      %226 = vst [vmem:[#allocation2] sm:$0xff] 0
      %227 = vst [vmem:[#allocation2 + $0x8] sm:$0xff] 0
      %228 = vst [vmem:[#allocation2 + $0x10] sm:$0xff] 0
      %s229 = scalar_lea.vmem [#allocation2], 408
      %230 = vst [vmem:[%s229] sm:$0xff] 0
      %231 = vst [vmem:[%s229 + $0x8] sm:$0xff] 0
      %232 = vst [vmem:[%s229 + $0x10] sm:$0xff] 0
      %s233 = scalar_lea.vmem [#allocation2], 24
      %vm234 = vcmask 1040384
      %vm235 = vsmask.f32 256
      %vm236 = vmand %vm234, %vm235
      %v237 = vld [vmem:[%s233] sm:$0x1]
      %v238 = vsel %vm236, 0, %v237
      %239 = vst [vmem:[%s233] sm:$0x1] %v238
      %v240 = vld [vmem:[%s233 + $0x18] sm:$0x1]
      %v241 = vsel %vm236, 0, %v240
      %242 = vst [vmem:[%s233 + $0x18] sm:$0x1] %v241
      %v243 = vld [vmem:[%s233 + $0x30] sm:$0x1]
      %v244 = vsel %vm236, 0, %v243
      %245 = vst [vmem:[%s233 + $0x30] sm:$0x1] %v244
      %v246 = vld [vmem:[%s233 + $0x48] sm:$0x1]
      %v247 = vsel %vm236, 0, %v246
      %248 = vst [vmem:[%s233 + $0x48] sm:$0x1] %v247
      %v249 = vld [vmem:[%s233 + $0x60] sm:$0x1]
      %v250 = vsel %vm236, 0, %v249
      %251 = vst [vmem:[%s233 + $0x60] sm:$0x1] %v250
      %v252 = vld [vmem:[%s233 + $0x78] sm:$0x1]
      %v253 = vsel %vm236, 0, %v252
      %254 = vst [vmem:[%s233 + $0x78] sm:$0x1] %v253
      %v255 = vld [vmem:[%s233 + $0x90] sm:$0x1]
      %v256 = vsel %vm236, 0, %v255
      %257 = vst [vmem:[%s233 + $0x90] sm:$0x1] %v256
      %v258 = vld [vmem:[%s233 + $0xa8] sm:$0x1]
      %v259 = vsel %vm236, 0, %v258
      %260 = vst [vmem:[%s233 + $0xa8] sm:$0x1] %v259
      %v261 = vld [vmem:[%s233 + $0xc0] sm:$0x1]
      %v262 = vsel %vm236, 0, %v261
      %263 = vst [vmem:[%s233 + $0xc0] sm:$0x1] %v262
      %v264 = vld [vmem:[%s233 + $0xd8] sm:$0x1]
      %v265 = vsel %vm236, 0, %v264
      %266 = vst [vmem:[%s233 + $0xd8] sm:$0x1] %v265
      %v267 = vld [vmem:[%s233 + $0xf0] sm:$0x1]
      %v268 = vsel %vm236, 0, %v267
      %269 = vst [vmem:[%s233 + $0xf0] sm:$0x1] %v268
      %v270 = vld [vmem:[%s233 + $0x108] sm:$0x1]
      %v271 = vsel %vm236, 0, %v270
      %272 = vst [vmem:[%s233 + $0x108] sm:$0x1] %v271
      %v273 = vld [vmem:[%s233 + $0x120] sm:$0x1]
      %v274 = vsel %vm236, 0, %v273
      %275 = vst [vmem:[%s233 + $0x120] sm:$0x1] %v274
      %v276 = vld [vmem:[%s233 + $0x138] sm:$0x1]
      %v277 = vsel %vm236, 0, %v276
      %278 = vst [vmem:[%s233 + $0x138] sm:$0x1] %v277
      %v279 = vld [vmem:[%s233 + $0x150] sm:$0x1]
      %v280 = vsel %vm236, 0, %v279
      %281 = vst [vmem:[%s233 + $0x150] sm:$0x1] %v280
      %v282 = vld [vmem:[%s233 + $0x168] sm:$0x1]
      %v283 = vsel %vm236, 0, %v282
      %284 = vst [vmem:[%s233 + $0x168] sm:$0x1] %v283
      %vm285 = vcmask 1047559
      %vm286 = vsmask.f32 7966
      %vm287 = vmand %vm285, %vm286
      %v288 = vld [vmem:[%s233 + $0x10] sm:$0x80]
      %v289 = vsel %vm287, 0, %v288
      %290 = vst [vmem:[%s233 + $0x10] sm:$0x80] %v289
      %v291 = vld [vmem:[%s233 + $0x28] sm:$0x80]
      %v292 = vsel %vm287, 0, %v291
      %293 = vst [vmem:[%s233 + $0x28] sm:$0x80] %v292
      %v294 = vld [vmem:[%s233 + $0x40] sm:$0x80]
      %v295 = vsel %vm287, 0, %v294
      %296 = vst [vmem:[%s233 + $0x40] sm:$0x80] %v295
      %v297 = vld [vmem:[%s233 + $0x58] sm:$0x80]
      %v298 = vsel %vm287, 0, %v297
      %299 = vst [vmem:[%s233 + $0x58] sm:$0x80] %v298
      %v300 = vld [vmem:[%s233 + $0x70] sm:$0x80]
      %v301 = vsel %vm287, 0, %v300
      %302 = vst [vmem:[%s233 + $0x70] sm:$0x80] %v301
      %v303 = vld [vmem:[%s233 + $0x88] sm:$0x80]
      %v304 = vsel %vm287, 0, %v303
      %305 = vst [vmem:[%s233 + $0x88] sm:$0x80] %v304
      %v306 = vld [vmem:[%s233 + $0xa0] sm:$0x80]
      %v307 = vsel %vm287, 0, %v306
      %308 = vst [vmem:[%s233 + $0xa0] sm:$0x80] %v307
      %v309 = vld [vmem:[%s233 + $0xb8] sm:$0x80]
      %v310 = vsel %vm287, 0, %v309
      %311 = vst [vmem:[%s233 + $0xb8] sm:$0x80] %v310
      %v312 = vld [vmem:[%s233 + $0xd0] sm:$0x80]
      %v313 = vsel %vm287, 0, %v312
      %314 = vst [vmem:[%s233 + $0xd0] sm:$0x80] %v313
      %v315 = vld [vmem:[%s233 + $0xe8] sm:$0x80]
      %v316 = vsel %vm287, 0, %v315
      %317 = vst [vmem:[%s233 + $0xe8] sm:$0x80] %v316
      %v318 = vld [vmem:[%s233 + $0x100] sm:$0x80]
      %v319 = vsel %vm287, 0, %v318
      %320 = vst [vmem:[%s233 + $0x100] sm:$0x80] %v319
      %v321 = vld [vmem:[%s233 + $0x118] sm:$0x80]
      %v322 = vsel %vm287, 0, %v321
      %323 = vst [vmem:[%s233 + $0x118] sm:$0x80] %v322
      %v324 = vld [vmem:[%s233 + $0x130] sm:$0x80]
      %v325 = vsel %vm287, 0, %v324
      %326 = vst [vmem:[%s233 + $0x130] sm:$0x80] %v325
      %v327 = vld [vmem:[%s233 + $0x148] sm:$0x80]
      %v328 = vsel %vm287, 0, %v327
      %329 = vst [vmem:[%s233 + $0x148] sm:$0x80] %v328
      %v330 = vld [vmem:[%s233 + $0x160] sm:$0x80]
      %v331 = vsel %vm287, 0, %v330
      %332 = vst [vmem:[%s233 + $0x160] sm:$0x80] %v331
      %v333 = vld [vmem:[%s233 + $0x178] sm:$0x80]
      %v334 = vsel %vm287, 0, %v333
      %335 = vst [vmem:[%s233 + $0x178] sm:$0x80] %v334
      %v336 = vld [vmem:[%s219] sm:$0xff]
      %v337 = vld [vmem:[%s219 + $0x8] sm:$0xff]
      %v338 = vld [vmem:[%s219 + $0x10] sm:$0xff]
      %v339 = vld [vmem:[%s219 + $0x18] sm:$0xff]
      %v340 = vld [vmem:[%s219 + $0x20] sm:$0xff]
      %v341 = vld [vmem:[%s219 + $0x28] sm:$0xff]
      %v342 = vld [vmem:[%s219 + $0x30] sm:$0xff]
      %v343 = vld [vmem:[%s219 + $0x38] sm:$0xff]
      %v344 = vld [vmem:[%s219 + $0x40] sm:$0xff]
      %v345 = vld [vmem:[%s219 + $0x48] sm:$0xff]
      %v346 = vld [vmem:[%s219 + $0x50] sm:$0xff]
      %v347 = vld [vmem:[%s219 + $0x58] sm:$0xff]
      %v348 = vld [vmem:[%s219 + $0x60] sm:$0xff]
      %v349 = vld [vmem:[%s219 + $0x68] sm:$0xff]
      %v350 = vld [vmem:[%s219 + $0x70] sm:$0xff]
      %v351 = vld [vmem:[%s219 + $0x78] sm:$0xff]
      %v352 = vld [vmem:[%s219 + $0x80] sm:$0xff]
      %v353 = vld [vmem:[%s219 + $0x88] sm:$0xff]
      %v354 = vld [vmem:[%s219 + $0x90] sm:$0xff]
      %v355 = vld [vmem:[%s219 + $0x98] sm:$0xff]
      %v356 = vld [vmem:[%s219 + $0xa0] sm:$0xff]
      %v357 = vld [vmem:[%s219 + $0xa8] sm:$0xff]
      %v358 = vld [vmem:[%s219 + $0xb0] sm:$0xff]
      %v359 = vld [vmem:[%s219 + $0xb8] sm:$0xff]
      %v360 = vld [vmem:[%s219 + $0xc0] sm:$0xff]
      %v361 = vld [vmem:[%s219 + $0xc8] sm:$0xff]
      %v362 = vld [vmem:[%s219 + $0xd0] sm:$0xff]
      %v363 = vld [vmem:[%s219 + $0xd8] sm:$0xff]
      %v364 = vld [vmem:[%s219 + $0xe0] sm:$0xff]
      %v365 = vld [vmem:[%s219 + $0xe8] sm:$0xff]
      %v366 = vld [vmem:[%s219 + $0xf0] sm:$0xff]
      %v367 = vld [vmem:[%s219 + $0xf8] sm:$0xff]
      %v368 = vpack.c.bf16 %v337, %v336
      %v369 = vpack.c.bf16 %v339, %v338
      %v370 = vpack.c.bf16 %v341, %v340
      %v371 = vpack.c.bf16 %v343, %v342
      %v372 = vpack.c.bf16 %v345, %v344
      %v373 = vpack.c.bf16 %v347, %v346
      %v374 = vpack.c.bf16 %v349, %v348
      %v375 = vpack.c.bf16 %v351, %v350
      %v376 = vpack.c.bf16 %v353, %v352
      %v377 = vpack.c.bf16 %v355, %v354
      %v378 = vpack.c.bf16 %v357, %v356
      %v379 = vpack.c.bf16 %v359, %v358
      %v380 = vpack.c.bf16 %v361, %v360
      %v381 = vpack.c.bf16 %v363, %v362
      %v382 = vpack.c.bf16 %v365, %v364
      %v383 = vpack.c.bf16 %v367, %v366
      %384 = vst [vmem:[%s233 + $0x8] sm:$0xff] %v368
      %385 = vst [vmem:[%s233 + $0x20] sm:$0xff] %v369
      %386 = vst [vmem:[%s233 + $0x38] sm:$0xff] %v370
      %387 = vst [vmem:[%s233 + $0x50] sm:$0xff] %v371
      %388 = vst [vmem:[%s233 + $0x68] sm:$0xff] %v372
      %389 = vst [vmem:[%s233 + $0x80] sm:$0xff] %v373
      %390 = vst [vmem:[%s233 + $0x98] sm:$0xff] %v374
      %391 = vst [vmem:[%s233 + $0xb0] sm:$0xff] %v375
      %392 = vst [vmem:[%s233 + $0xc8] sm:$0xff] %v376
      %393 = vst [vmem:[%s233 + $0xe0] sm:$0xff] %v377
      %394 = vst [vmem:[%s233 + $0xf8] sm:$0xff] %v378
      %395 = vst [vmem:[%s233 + $0x110] sm:$0xff] %v379
      %396 = vst [vmem:[%s233 + $0x128] sm:$0xff] %v380
      %397 = vst [vmem:[%s233 + $0x140] sm:$0xff] %v381
      %398 = vst [vmem:[%s233 + $0x158] sm:$0xff] %v382
      %399 = vst [vmem:[%s233 + $0x170] sm:$0xff] %v383
      %v401 = vshrl.u32 %v368, 16
      %v403 = vrot.slane %v401, 7
      %v404 = vshll.u32 %v368, 16
      %v406 = vor.u32 %v403, %v404
      %v408 = vshrl.u32 %v369, 16
      %v410 = vrot.slane %v408, 7
      %v411 = vshll.u32 %v369, 16
      %v413 = vor.u32 %v410, %v411
      %v415 = vshrl.u32 %v370, 16
      %v417 = vrot.slane %v415, 7
      %v418 = vshll.u32 %v370, 16
      %v420 = vor.u32 %v417, %v418
      %v422 = vshrl.u32 %v371, 16
      %v424 = vrot.slane %v422, 7
      %v425 = vshll.u32 %v371, 16
      %v427 = vor.u32 %v424, %v425
      %v429 = vshrl.u32 %v372, 16
      %v431 = vrot.slane %v429, 7
      %v432 = vshll.u32 %v372, 16
      %v434 = vor.u32 %v431, %v432
      %v436 = vshrl.u32 %v373, 16
      %v438 = vrot.slane %v436, 7
      %v439 = vshll.u32 %v373, 16
      %v441 = vor.u32 %v438, %v439
      %v443 = vshrl.u32 %v374, 16
      %v445 = vrot.slane %v443, 7
      %v446 = vshll.u32 %v374, 16
      %v448 = vor.u32 %v445, %v446
      %v450 = vshrl.u32 %v375, 16
      %v452 = vrot.slane %v450, 7
      %v453 = vshll.u32 %v375, 16
      %v455 = vor.u32 %v452, %v453
      %v457 = vshrl.u32 %v376, 16
      %v459 = vrot.slane %v457, 7
      %v460 = vshll.u32 %v376, 16
      %v462 = vor.u32 %v459, %v460
      %v464 = vshrl.u32 %v377, 16
      %v466 = vrot.slane %v464, 7
      %v467 = vshll.u32 %v377, 16
      %v469 = vor.u32 %v466, %v467
      %v471 = vshrl.u32 %v378, 16
      %v473 = vrot.slane %v471, 7
      %v474 = vshll.u32 %v378, 16
      %v476 = vor.u32 %v473, %v474
      %v478 = vshrl.u32 %v379, 16
      %v480 = vrot.slane %v478, 7
      %v481 = vshll.u32 %v379, 16
      %v483 = vor.u32 %v480, %v481
      %v485 = vshrl.u32 %v380, 16
      %v487 = vrot.slane %v485, 7
      %v488 = vshll.u32 %v380, 16
      %v490 = vor.u32 %v487, %v488
      %v492 = vshrl.u32 %v381, 16
      %v494 = vrot.slane %v492, 7
      %v495 = vshll.u32 %v381, 16
      %v497 = vor.u32 %v494, %v495
      %v499 = vshrl.u32 %v382, 16
      %v501 = vrot.slane %v499, 7
      %v502 = vshll.u32 %v382, 16
      %v504 = vor.u32 %v501, %v502
      %v506 = vshrl.u32 %v383, 16
      %v508 = vrot.slane %v506, 7
      %v509 = vshll.u32 %v383, 16
      %v511 = vor.u32 %v508, %v509
      %vm528 = vcmask 1047552
      %vm529 = vsmask.f32 7938
      %vm530 = vmand %vm528, %vm529
      %v531 = vld [vmem:[%s233] sm:$0xff]
      %v532 = vsel %vm530, %v406, %v531
      %533 = vst [vmem:[%s233] sm:$0xff] %v532
      %v534 = vld [vmem:[%s233 + $0x18] sm:$0xff]
      %v535 = vsel %vm530, %v413, %v534
      %536 = vst [vmem:[%s233 + $0x18] sm:$0xff] %v535
      %v537 = vld [vmem:[%s233 + $0x30] sm:$0xff]
      %v538 = vsel %vm530, %v420, %v537
      %539 = vst [vmem:[%s233 + $0x30] sm:$0xff] %v538
      %v540 = vld [vmem:[%s233 + $0x48] sm:$0xff]
      %v541 = vsel %vm530, %v427, %v540
      %542 = vst [vmem:[%s233 + $0x48] sm:$0xff] %v541
      %v543 = vld [vmem:[%s233 + $0x60] sm:$0xff]
      %v544 = vsel %vm530, %v434, %v543
      %545 = vst [vmem:[%s233 + $0x60] sm:$0xff] %v544
      %v546 = vld [vmem:[%s233 + $0x78] sm:$0xff]
      %v547 = vsel %vm530, %v441, %v546
      %548 = vst [vmem:[%s233 + $0x78] sm:$0xff] %v547
      %v549 = vld [vmem:[%s233 + $0x90] sm:$0xff]
      %v550 = vsel %vm530, %v448, %v549
      %551 = vst [vmem:[%s233 + $0x90] sm:$0xff] %v550
      %v552 = vld [vmem:[%s233 + $0xa8] sm:$0xff]
      %v553 = vsel %vm530, %v455, %v552
      %554 = vst [vmem:[%s233 + $0xa8] sm:$0xff] %v553
      %v555 = vld [vmem:[%s233 + $0xc0] sm:$0xff]
      %v556 = vsel %vm530, %v462, %v555
      %557 = vst [vmem:[%s233 + $0xc0] sm:$0xff] %v556
      %v558 = vld [vmem:[%s233 + $0xd8] sm:$0xff]
      %v559 = vsel %vm530, %v469, %v558
      %560 = vst [vmem:[%s233 + $0xd8] sm:$0xff] %v559
      %v561 = vld [vmem:[%s233 + $0xf0] sm:$0xff]
      %v562 = vsel %vm530, %v476, %v561
      %563 = vst [vmem:[%s233 + $0xf0] sm:$0xff] %v562
      %v564 = vld [vmem:[%s233 + $0x108] sm:$0xff]
      %v565 = vsel %vm530, %v483, %v564
      %566 = vst [vmem:[%s233 + $0x108] sm:$0xff] %v565
      %v567 = vld [vmem:[%s233 + $0x120] sm:$0xff]
      %v568 = vsel %vm530, %v490, %v567
      %569 = vst [vmem:[%s233 + $0x120] sm:$0xff] %v568
      %v570 = vld [vmem:[%s233 + $0x138] sm:$0xff]
      %v571 = vsel %vm530, %v497, %v570
      %572 = vst [vmem:[%s233 + $0x138] sm:$0xff] %v571
      %v573 = vld [vmem:[%s233 + $0x150] sm:$0xff]
      %v574 = vsel %vm530, %v504, %v573
      %575 = vst [vmem:[%s233 + $0x150] sm:$0xff] %v574
      %v576 = vld [vmem:[%s233 + $0x168] sm:$0xff]
      %v577 = vsel %vm530, %v511, %v576
      %578 = vst [vmem:[%s233 + $0x168] sm:$0xff] %v577
      %v579 = vrot.slane %v404, 1
      %v580 = vor.u32 %v401, %v579
      %v581 = vrot.slane %v411, 1
      %v582 = vor.u32 %v408, %v581
      %v583 = vrot.slane %v418, 1
      %v584 = vor.u32 %v415, %v583
      %v585 = vrot.slane %v425, 1
      %v586 = vor.u32 %v422, %v585
      %v587 = vrot.slane %v432, 1
      %v588 = vor.u32 %v429, %v587
      %v589 = vrot.slane %v439, 1
      %v590 = vor.u32 %v436, %v589
      %v591 = vrot.slane %v446, 1
      %v592 = vor.u32 %v443, %v591
      %v593 = vrot.slane %v453, 1
      %v594 = vor.u32 %v450, %v593
      %v595 = vrot.slane %v460, 1
      %v596 = vor.u32 %v457, %v595
      %v597 = vrot.slane %v467, 1
      %v598 = vor.u32 %v464, %v597
      %v599 = vrot.slane %v474, 1
      %v600 = vor.u32 %v471, %v599
      %v601 = vrot.slane %v481, 1
      %v602 = vor.u32 %v478, %v601
      %v603 = vrot.slane %v488, 1
      %v604 = vor.u32 %v485, %v603
      %v605 = vrot.slane %v495, 1
      %v606 = vor.u32 %v492, %v605
      %v607 = vrot.slane %v502, 1
      %v608 = vor.u32 %v499, %v607
      %v609 = vrot.slane %v509, 1
      %v610 = vor.u32 %v506, %v609
      %vm627 = vsmask.f32 7424
      %vm628 = vmand %vm528, %vm627
      %v629 = vld [vmem:[%s233 + $0x10] sm:$0xff]
      %v630 = vsel %vm628, %v580, %v629
      %631 = vst [vmem:[%s233 + $0x10] sm:$0xff] %v630
      %v632 = vld [vmem:[%s233 + $0x28] sm:$0xff]
      %v633 = vsel %vm628, %v582, %v632
      %634 = vst [vmem:[%s233 + $0x28] sm:$0xff] %v633
      %v635 = vld [vmem:[%s233 + $0x40] sm:$0xff]
      %v636 = vsel %vm628, %v584, %v635
      %637 = vst [vmem:[%s233 + $0x40] sm:$0xff] %v636
      %v638 = vld [vmem:[%s233 + $0x58] sm:$0xff]
      %v639 = vsel %vm628, %v586, %v638
      %640 = vst [vmem:[%s233 + $0x58] sm:$0xff] %v639
      %v641 = vld [vmem:[%s233 + $0x70] sm:$0xff]
      %v642 = vsel %vm628, %v588, %v641
      %643 = vst [vmem:[%s233 + $0x70] sm:$0xff] %v642
      %v644 = vld [vmem:[%s233 + $0x88] sm:$0xff]
      %v645 = vsel %vm628, %v590, %v644
      %646 = vst [vmem:[%s233 + $0x88] sm:$0xff] %v645
      %v647 = vld [vmem:[%s233 + $0xa0] sm:$0xff]
      %v648 = vsel %vm628, %v592, %v647
      %649 = vst [vmem:[%s233 + $0xa0] sm:$0xff] %v648
      %v650 = vld [vmem:[%s233 + $0xb8] sm:$0xff]
      %v651 = vsel %vm628, %v594, %v650
      %652 = vst [vmem:[%s233 + $0xb8] sm:$0xff] %v651
      %v653 = vld [vmem:[%s233 + $0xd0] sm:$0xff]
      %v654 = vsel %vm628, %v596, %v653
      %655 = vst [vmem:[%s233 + $0xd0] sm:$0xff] %v654
      %v656 = vld [vmem:[%s233 + $0xe8] sm:$0xff]
      %v657 = vsel %vm628, %v598, %v656
      %658 = vst [vmem:[%s233 + $0xe8] sm:$0xff] %v657
      %v659 = vld [vmem:[%s233 + $0x100] sm:$0xff]
      %v660 = vsel %vm628, %v600, %v659
      %661 = vst [vmem:[%s233 + $0x100] sm:$0xff] %v660
      %v662 = vld [vmem:[%s233 + $0x118] sm:$0xff]
      %v663 = vsel %vm628, %v602, %v662
      %664 = vst [vmem:[%s233 + $0x118] sm:$0xff] %v663
      %v665 = vld [vmem:[%s233 + $0x130] sm:$0xff]
      %v666 = vsel %vm628, %v604, %v665
      %667 = vst [vmem:[%s233 + $0x130] sm:$0xff] %v666
      %v668 = vld [vmem:[%s233 + $0x148] sm:$0xff]
      %v669 = vsel %vm628, %v606, %v668
      %670 = vst [vmem:[%s233 + $0x148] sm:$0xff] %v669
      %v671 = vld [vmem:[%s233 + $0x160] sm:$0xff]
      %v672 = vsel %vm628, %v608, %v671
      %673 = vst [vmem:[%s233 + $0x160] sm:$0xff] %v672
      %v674 = vld [vmem:[%s233 + $0x178] sm:$0xff]
      %v675 = vsel %vm628, %v610, %v674
      %676 = vst [vmem:[%s233 + $0x178] sm:$0xff] %v675
      %v677 = vld [vmem:[#allocation2] sm:$0xff]
      %v678 = vld [vmem:[#allocation2 + $0x8] sm:$0xff]
      %v679 = vld [vmem:[#allocation2 + $0x10] sm:$0xff]
      %v680 = vld [vmem:[#allocation2 + $0x18] sm:$0xff]
      %v681 = vld [vmem:[#allocation2 + $0x20] sm:$0xff]
      %v682 = vld [vmem:[#allocation2 + $0x28] sm:$0xff]
      %v683 = vld [vmem:[#allocation2 + $0x30] sm:$0xff]
      %v684 = vld [vmem:[#allocation2 + $0x38] sm:$0xff]
      %v685 = vld [vmem:[#allocation2 + $0x40] sm:$0xff]
      %v686 = vld [vmem:[#allocation2 + $0x48] sm:$0xff]
      %v687 = vld [vmem:[#allocation2 + $0x50] sm:$0xff]
      %v688 = vld [vmem:[#allocation2 + $0x58] sm:$0xff]
      %v689 = vld [vmem:[#allocation2 + $0x60] sm:$0xff]
      %v690 = vld [vmem:[#allocation2 + $0x68] sm:$0xff]
      %v691 = vld [vmem:[#allocation2 + $0x70] sm:$0xff]
      %v692 = vld [vmem:[#allocation2 + $0x78] sm:$0xff]
      %v693 = vld [vmem:[#allocation2 + $0x80] sm:$0xff]
      %v694 = vld [vmem:[#allocation2 + $0x88] sm:$0xff]
      %v695 = vld [vmem:[#allocation2 + $0x90] sm:$0xff]
      %v696 = vld [vmem:[#allocation2 + $0x98] sm:$0xff]
      %v697 = vld [vmem:[#allocation2 + $0xa0] sm:$0xff]
      %v698 = vld [vmem:[#allocation2 + $0xa8] sm:$0xff]
      %v699 = vld [vmem:[#allocation2 + $0xb0] sm:$0xff]
      %v700 = vld [vmem:[#allocation2 + $0xb8] sm:$0xff]
      %v701 = vld [vmem:[#allocation2 + $0xc0] sm:$0xff]
      %v702 = vld [vmem:[#allocation2 + $0xc8] sm:$0xff]
      %v703 = vld [vmem:[#allocation2 + $0xd0] sm:$0xff]
      %v704 = vld [vmem:[#allocation2 + $0xd8] sm:$0xff]
      %v705 = vld [vmem:[#allocation2 + $0xe0] sm:$0xff]
      %v706 = vld [vmem:[#allocation2 + $0xe8] sm:$0xff]
      %v707 = vld [vmem:[#allocation2 + $0xf0] sm:$0xff]
      %v708 = vld [vmem:[#allocation2 + $0xf8] sm:$0xff]
      %v709 = vld [vmem:[#allocation2 + $0x100] sm:$0xff]
      %v710 = vld [vmem:[#allocation2 + $0x108] sm:$0xff]
      %v711 = vld [vmem:[#allocation2 + $0x110] sm:$0xff]
      %v712 = vld [vmem:[#allocation2 + $0x118] sm:$0xff]
      %v713 = vld [vmem:[#allocation2 + $0x120] sm:$0xff]
      %v714 = vld [vmem:[#allocation2 + $0x128] sm:$0xff]
      %v715 = vld [vmem:[#allocation2 + $0x130] sm:$0xff]
      %v716 = vld [vmem:[#allocation2 + $0x138] sm:$0xff]
      %v717 = vld [vmem:[#allocation2 + $0x140] sm:$0xff]
      %v718 = vld [vmem:[#allocation2 + $0x148] sm:$0xff]
      %v719 = vld [vmem:[#allocation2 + $0x150] sm:$0xff]
      %v720 = vld [vmem:[#allocation2 + $0x158] sm:$0xff]
      %v721 = vld [vmem:[#allocation2 + $0x160] sm:$0xff]
      %v722 = vld [vmem:[#allocation2 + $0x168] sm:$0xff]
      %v723 = vld [vmem:[#allocation2 + $0x170] sm:$0xff]
      %v724 = vld [vmem:[#allocation2 + $0x178] sm:$0xff]
      %v725 = vld [vmem:[%s1] sm:$0xf]
      %v726 = vld [vmem:[%s1 + $0x4] sm:$0xf]
      %v727 = vld [vmem:[%s1 + $0x8] sm:$0xf]
      %v728 = vld [vmem:[%s1 + $0xc] sm:$0xf]
      %v729 = vld [vmem:[%s1 + $0x10] sm:$0xf]
      %v730 = vld [vmem:[%s1 + $0x14] sm:$0xf]
      %v731 = vld [vmem:[%s1 + $0x18] sm:$0xf]
      %v732 = vld [vmem:[%s1 + $0x1c] sm:$0xf]
      %v733 = vld [vmem:[%s1 + $0x20] sm:$0xf]
      %v734 = vld [vmem:[%s1 + $0x24] sm:$0xf]
      %v735 = vld [vmem:[%s1 + $0x28] sm:$0xf]
      %v736 = vld [vmem:[%s1 + $0x2c] sm:$0xf]
      %v737 = vld [vmem:[%s1 + $0x30] sm:$0xf]
      %v738 = vld [vmem:[%s1 + $0x34] sm:$0xf]
      %v739 = vld [vmem:[%s1 + $0x38] sm:$0xf]
      %v740 = vld [vmem:[%s1 + $0x3c] sm:$0xf]
      %v741 = vld [vmem:[%s1 + $0x40] sm:$0xf]
      %v742 = vld [vmem:[%s1 + $0x44] sm:$0xf]
      %v743 = vld [vmem:[%s1 + $0x48] sm:$0xf]
      %v744 = vld [vmem:[%s1 + $0x4c] sm:$0xf]
      %v745 = vld [vmem:[%s1 + $0x50] sm:$0xf]
      %v746 = vld [vmem:[%s1 + $0x54] sm:$0xf]
      %v747 = vld [vmem:[%s1 + $0x58] sm:$0xf]
      %v748 = vld [vmem:[%s1 + $0x5c] sm:$0xf]
      %v749 = vld [vmem:[%s1 + $0x60] sm:$0xf]
      %v750 = vld [vmem:[%s1 + $0x64] sm:$0xf]
      %v751 = vld [vmem:[%s1 + $0x68] sm:$0xf]
      %v752 = vld [vmem:[%s1 + $0x6c] sm:$0xf]
      %v753 = vld [vmem:[%s1 + $0x70] sm:$0xf]
      %v754 = vld [vmem:[%s1 + $0x74] sm:$0xf]
      %v755 = vld [vmem:[%s1 + $0x78] sm:$0xf]
      %v756 = vld [vmem:[%s1 + $0x7c] sm:$0xf]
      %v757 = vld [vmem:[%s1 + $0x80] sm:$0xf]
      %v758 = vld [vmem:[%s1 + $0x84] sm:$0xf]
      %v759 = vld [vmem:[%s1 + $0x88] sm:$0xf]
      %v760 = vld [vmem:[%s1 + $0x8c] sm:$0xf]
      %v761 = vld [vmem:[%s1 + $0x90] sm:$0xf]
      %v762 = vld [vmem:[%s1 + $0x94] sm:$0xf]
      %v763 = vld [vmem:[%s1 + $0x98] sm:$0xf]
      %v764 = vld [vmem:[%s1 + $0x9c] sm:$0xf]
      %v765 = vld [vmem:[%s1 + $0xa0] sm:$0xf]
      %v766 = vld [vmem:[%s1 + $0xa4] sm:$0xf]
      %v767 = vld [vmem:[%s1 + $0xa8] sm:$0xf]
      %v768 = vld [vmem:[%s1 + $0xac] sm:$0xf]
      %v769 = vld [vmem:[%s1 + $0xb0] sm:$0xf]
      %v770 = vld [vmem:[%s1 + $0xb4] sm:$0xf]
      %v771 = vld [vmem:[%s1 + $0xb8] sm:$0xf]
      %v772 = vld [vmem:[%s1 + $0xbc] sm:$0xf]
      %v821 = vunpack.c.l.b16 %v725
      %v822 = vunpack.c.l.b16 %v726
      %v823 = vunpack.c.l.b16 %v727
      %v824 = vunpack.c.l.b16 %v728
      %v825 = vunpack.c.l.b16 %v729
      %v826 = vunpack.c.l.b16 %v730
      %v827 = vunpack.c.l.b16 %v731
      %v828 = vunpack.c.l.b16 %v732
      %v829 = vunpack.c.l.b16 %v733
      %v830 = vunpack.c.l.b16 %v734
      %v831 = vunpack.c.l.b16 %v735
      %v832 = vunpack.c.l.b16 %v736
      %v833 = vunpack.c.l.b16 %v737
      %v834 = vunpack.c.l.b16 %v738
      %v835 = vunpack.c.l.b16 %v739
      %v836 = vunpack.c.l.b16 %v740
      %v837 = vunpack.c.l.b16 %v741
      %v838 = vunpack.c.l.b16 %v742
      %v839 = vunpack.c.l.b16 %v743
      %v840 = vunpack.c.l.b16 %v744
      %v841 = vunpack.c.l.b16 %v745
      %v842 = vunpack.c.l.b16 %v746
      %v843 = vunpack.c.l.b16 %v747
      %v844 = vunpack.c.l.b16 %v748
      %v845 = vunpack.c.l.b16 %v749
      %v846 = vunpack.c.l.b16 %v750
      %v847 = vunpack.c.l.b16 %v751
      %v848 = vunpack.c.l.b16 %v752
      %v849 = vunpack.c.l.b16 %v753
      %v850 = vunpack.c.l.b16 %v754
      %v851 = vunpack.c.l.b16 %v755
      %v852 = vunpack.c.l.b16 %v756
      %v853 = vunpack.c.l.b16 %v757
      %v854 = vunpack.c.l.b16 %v758
      %v855 = vunpack.c.l.b16 %v759
      %v856 = vunpack.c.l.b16 %v760
      %v857 = vunpack.c.l.b16 %v761
      %v858 = vunpack.c.l.b16 %v762
      %v859 = vunpack.c.l.b16 %v763
      %v860 = vunpack.c.l.b16 %v764
      %v861 = vunpack.c.l.b16 %v765
      %v862 = vunpack.c.l.b16 %v766
      %v863 = vunpack.c.l.b16 %v767
      %v864 = vunpack.c.l.b16 %v768
      %v865 = vunpack.c.l.b16 %v769
      %v866 = vunpack.c.l.b16 %v770
      %v867 = vunpack.c.l.b16 %v771
      %v868 = vunpack.c.l.b16 %v772
      %v869 = vpack.c.b16 %v822, %v821
      %v870 = vpack.c.b16 %v824, %v823
      %v871 = vpack.c.b16 %v826, %v825
      %v872 = vpack.c.b16 %v828, %v827
      %v873 = vpack.c.b16 %v830, %v829
      %v874 = vpack.c.b16 %v832, %v831
      %v875 = vpack.c.b16 %v834, %v833
      %v876 = vpack.c.b16 %v836, %v835
      %v877 = vpack.c.b16 %v838, %v837
      %v878 = vpack.c.b16 %v840, %v839
      %v879 = vpack.c.b16 %v842, %v841
      %v880 = vpack.c.b16 %v844, %v843
      %v881 = vpack.c.b16 %v846, %v845
      %v882 = vpack.c.b16 %v848, %v847
      %v883 = vpack.c.b16 %v850, %v849
      %v884 = vpack.c.b16 %v852, %v851
      %v885 = vpack.c.b16 %v854, %v853
      %v886 = vpack.c.b16 %v856, %v855
      %v887 = vpack.c.b16 %v858, %v857
      %v888 = vpack.c.b16 %v860, %v859
      %v889 = vpack.c.b16 %v862, %v861
      %v890 = vpack.c.b16 %v864, %v863
      %v891 = vpack.c.b16 %v866, %v865
      %v892 = vpack.c.b16 %v868, %v867
      %917 = vmatprep.subr.bf16.mxu0 0
      %918 = vmatpush1.bf16.msra.mxu0 %v869
      %919 = vmatprep.subr.bf16.mxu0 0
      %920 = vmatpush1.bf16.msra.mxu0 %v870
      %921 = vmatprep.subr.bf16.mxu0 0
      %922 = vmatpush1.bf16.msra.mxu0 %v871
      %923 = vmatprep.subr.bf16.mxu0 0
      %924 = vmatpush1.bf16.msra.mxu0 %v872
      %925 = vmatprep.subr.bf16.mxu0 0
      %926 = vmatpush1.bf16.msra.mxu0 %v873
      %927 = vmatprep.subr.bf16.mxu0 0
      %928 = vmatpush1.bf16.msra.mxu0 %v874
      %929 = vmatprep.subr.bf16.mxu0 0
      %930 = vmatpush1.bf16.msra.mxu0 %v875
      %931 = vmatprep.subr.bf16.mxu0 0
      %932 = vmatpush1.bf16.msra.mxu0 %v876
      %933 = vmatprep.subr.bf16.mxu0 0
      %934 = vmatpush1.bf16.msra.mxu0 %v877
      %935 = vmatprep.subr.bf16.mxu0 0
      %936 = vmatpush1.bf16.msra.mxu0 %v878
      %937 = vmatprep.subr.bf16.mxu0 0
      %938 = vmatpush1.bf16.msra.mxu0 %v879
      %939 = vmatprep.subr.bf16.mxu0 0
      %940 = vmatpush1.bf16.msra.mxu0 %v880
      %941 = vmatprep.subr.bf16.mxu0 0
      %942 = vmatpush1.bf16.msra.mxu0 %v881
      %943 = vmatprep.subr.bf16.mxu0 0
      %944 = vmatpush1.bf16.msra.mxu0 %v882
      %945 = vmatprep.subr.bf16.mxu0 0
      %946 = vmatpush1.bf16.msra.mxu0 %v883
      %947 = vmatprep.subr.bf16.mxu0 0
      %948 = vmatpush1.bf16.msra.mxu0 %v884
      %949 = vmatprep.mubr.bf16.mxu0 %v678
      %950 = vmatmul.mubr.bf16.gmra.mrb[0].mxu0 %v677
      %v951 = vpop.f32.mrb[0].mxu0
      %v952 = vadd.f32 0.0, %v951
      %v953 = vpop.f32.mrb[0].mxu0
      %v954 = vpop.f32.mrb[0].mxu0
      %v955 = vadd.f32 0.0, %v954
      %v956 = vpop.f32.mrb[0].mxu0
      %957 = vmatprep.mubr.bf16.mxu0 %v681
      %958 = vmatmul.mubr.bf16.gmra.mrb[0].mxu0 %v680
      %v959 = vpop.f32.mrb[0].mxu0
      %v960 = vadd.f32 0.0, %v959
      %v961 = vpop.f32.mrb[0].mxu0
      %v962 = vpop.f32.mrb[0].mxu0
      %v963 = vadd.f32 0.0, %v962
      %v964 = vpop.f32.mrb[0].mxu0
      %965 = vmatprep.mubr.bf16.mxu0 %v684
      %966 = vmatmul.mubr.bf16.gmra.mrb[0].mxu0 %v683
      %v967 = vpop.f32.mrb[0].mxu0
      %v968 = vadd.f32 0.0, %v967
      %v969 = vpop.f32.mrb[0].mxu0
      %v970 = vpop.f32.mrb[0].mxu0
      %v971 = vadd.f32 0.0, %v970
      %v972 = vpop.f32.mrb[0].mxu0
      %973 = vmatprep.mubr.bf16.mxu0 %v687
      %974 = vmatmul.mubr.bf16.gmra.mrb[0].mxu0 %v686
      %v975 = vpop.f32.mrb[0].mxu0
      %v976 = vadd.f32 0.0, %v975
      %v977 = vpop.f32.mrb[0].mxu0
      %v978 = vpop.f32.mrb[0].mxu0
      %v979 = vadd.f32 0.0, %v978
      %v980 = vpop.f32.mrb[0].mxu0
      %981 = vmatprep.mubr.bf16.mxu0 %v690
      %982 = vmatmul.mubr.bf16.gmra.mrb[0].mxu0 %v689
      %v983 = vpop.f32.mrb[0].mxu0
      %v984 = vadd.f32 0.0, %v983
      %v985 = vpop.f32.mrb[0].mxu0
      %v986 = vpop.f32.mrb[0].mxu0
      %v987 = vadd.f32 0.0, %v986
      %v988 = vpop.f32.mrb[0].mxu0
      %989 = vmatprep.mubr.bf16.mxu0 %v693
      %990 = vmatmul.mubr.bf16.gmra.mrb[0].mxu0 %v692
      %v991 = vpop.f32.mrb[0].mxu0
      %v992 = vadd.f32 0.0, %v991
      %v993 = vpop.f32.mrb[0].mxu0
      %v994 = vpop.f32.mrb[0].mxu0
      %v995 = vadd.f32 0.0, %v994
      %v996 = vpop.f32.mrb[0].mxu0
      %997 = vmatprep.mubr.bf16.mxu0 %v696
      %998 = vmatmul.mubr.bf16.gmra.mrb[0].mxu0 %v695
      %v999 = vpop.f32.mrb[0].mxu0
      %v1000 = vadd.f32 0.0, %v999
      %v1001 = vpop.f32.mrb[0].mxu0
      %v1002 = vpop.f32.mrb[0].mxu0
      %v1003 = vadd.f32 0.0, %v1002
      %v1004 = vpop.f32.mrb[0].mxu0
      %1005 = vmatprep.mubr.bf16.mxu0 %v699
      %1006 = vmatmul.mubr.bf16.gmra.mrb[0].mxu0 %v698
      %v1007 = vpop.f32.mrb[0].mxu0
      %v1008 = vadd.f32 0.0, %v1007
      %v1009 = vpop.f32.mrb[0].mxu0
      %v1010 = vpop.f32.mrb[0].mxu0
      %v1011 = vadd.f32 0.0, %v1010
      %v1012 = vpop.f32.mrb[0].mxu0
      %1013 = vmatprep.mubr.bf16.mxu0 %v702
      %1014 = vmatmul.mubr.bf16.gmra.mrb[0].mxu0 %v701
      %v1015 = vpop.f32.mrb[0].mxu0
      %v1016 = vadd.f32 0.0, %v1015
      %v1017 = vpop.f32.mrb[0].mxu0
      %v1018 = vpop.f32.mrb[0].mxu0
      %v1019 = vadd.f32 0.0, %v1018
      %v1020 = vpop.f32.mrb[0].mxu0
      %1021 = vmatprep.mubr.bf16.mxu0 %v705
      %1022 = vmatmul.mubr.bf16.gmra.mrb[0].mxu0 %v704
      %v1023 = vpop.f32.mrb[0].mxu0
      %v1024 = vadd.f32 0.0, %v1023
      %v1025 = vpop.f32.mrb[0].mxu0
      %v1026 = vpop.f32.mrb[0].mxu0
      %v1027 = vadd.f32 0.0, %v1026
      %v1028 = vpop.f32.mrb[0].mxu0
      %1029 = vmatprep.mubr.bf16.mxu0 %v708
      %1030 = vmatmul.mubr.bf16.gmra.mrb[0].mxu0 %v707
      %v1031 = vpop.f32.mrb[0].mxu0
      %v1032 = vadd.f32 0.0, %v1031
      %v1033 = vpop.f32.mrb[0].mxu0
      %v1034 = vpop.f32.mrb[0].mxu0
      %v1035 = vadd.f32 0.0, %v1034
      %v1036 = vpop.f32.mrb[0].mxu0
      %1037 = vmatprep.mubr.bf16.mxu0 %v711
      %1038 = vmatmul.mubr.bf16.gmra.mrb[0].mxu0 %v710
      %v1039 = vpop.f32.mrb[0].mxu0
      %v1040 = vadd.f32 0.0, %v1039
      %v1041 = vpop.f32.mrb[0].mxu0
      %v1042 = vpop.f32.mrb[0].mxu0
      %v1043 = vadd.f32 0.0, %v1042
      %v1044 = vpop.f32.mrb[0].mxu0
      %1045 = vmatprep.mubr.bf16.mxu0 %v714
      %1046 = vmatmul.mubr.bf16.gmra.mrb[0].mxu0 %v713
      %v1047 = vpop.f32.mrb[0].mxu0
      %v1048 = vadd.f32 0.0, %v1047
      %v1049 = vpop.f32.mrb[0].mxu0
      %v1050 = vpop.f32.mrb[0].mxu0
      %v1051 = vadd.f32 0.0, %v1050
      %v1052 = vpop.f32.mrb[0].mxu0
      %1053 = vmatprep.mubr.bf16.mxu0 %v717
      %1054 = vmatmul.mubr.bf16.gmra.mrb[0].mxu0 %v716
      %v1055 = vpop.f32.mrb[0].mxu0
      %v1056 = vadd.f32 0.0, %v1055
      %v1057 = vpop.f32.mrb[0].mxu0
      %v1058 = vpop.f32.mrb[0].mxu0
      %v1059 = vadd.f32 0.0, %v1058
      %v1060 = vpop.f32.mrb[0].mxu0
      %1061 = vmatprep.mubr.bf16.mxu0 %v720
      %1062 = vmatmul.mubr.bf16.gmra.mrb[0].mxu0 %v719
      %v1063 = vpop.f32.mrb[0].mxu0
      %v1064 = vadd.f32 0.0, %v1063
      %v1065 = vpop.f32.mrb[0].mxu0
      %v1066 = vpop.f32.mrb[0].mxu0
      %v1067 = vadd.f32 0.0, %v1066
      %v1068 = vpop.f32.mrb[0].mxu0
      %1069 = vmatprep.mubr.bf16.mxu0 %v723
      %1070 = vmatmul.mubr.bf16.gmra.mrb[0].mxu0 %v722
      %v1071 = vpop.f32.mrb[0].mxu0
      %v1072 = vadd.f32 0.0, %v1071
      %v1073 = vpop.f32.mrb[0].mxu0
      %v1074 = vpop.f32.mrb[0].mxu0
      %v1075 = vadd.f32 0.0, %v1074
      %v1076 = vpop.f32.mrb[0].mxu0
      %1077 = vdwg.mxu0
      %1078 = vmatprep.subr.bf16.mxu0 0
      %1079 = vmatpush1.bf16.msra.mxu0 %v885
      %1080 = vmatprep.subr.bf16.mxu0 0
      %1081 = vmatpush1.bf16.msra.mxu0 %v886
      %1082 = vmatprep.subr.bf16.mxu0 0
      %1083 = vmatpush1.bf16.msra.mxu0 %v887
      %1084 = vmatprep.subr.bf16.mxu0 0
      %1085 = vmatpush1.bf16.msra.mxu0 %v888
      %1086 = vmatprep.subr.bf16.mxu0 0
      %1087 = vmatpush1.bf16.msra.mxu0 %v889
      %1088 = vmatprep.subr.bf16.mxu0 0
      %1089 = vmatpush1.bf16.msra.mxu0 %v890
      %1090 = vmatprep.subr.bf16.mxu0 0
      %1091 = vmatpush1.bf16.msra.mxu0 %v891
      %1092 = vmatprep.subr.bf16.mxu0 0
      %1093 = vmatpush1.bf16.msra.mxu0 %v892
      %1094 = vmatprep.subr.bf16.mxu0 0
      %1095 = vmatpush1.bf16.msra.mxu0 0
      %1096 = vmatprep.subr.bf16.mxu0 0
      %1097 = vmatpush1.bf16.msra.mxu0 0
      %1098 = vmatprep.subr.bf16.mxu0 0
      %1099 = vmatpush1.bf16.msra.mxu0 0
      %1100 = vmatprep.subr.bf16.mxu0 0
      %1101 = vmatpush1.bf16.msra.mxu0 0
      %1102 = vmatprep.subr.bf16.mxu0 0
      %1103 = vmatpush1.bf16.msra.mxu0 0
      %1104 = vmatprep.subr.bf16.mxu0 0
      %1105 = vmatpush1.bf16.msra.mxu0 0
      %1106 = vmatprep.subr.bf16.mxu0 0
      %1107 = vmatpush1.bf16.msra.mxu0 0
      %1108 = vmatprep.subr.bf16.mxu0 0
      %1109 = vmatpush1.bf16.msra.mxu0 0
      %1110 = vmatprep.mubr.bf16.mxu0 0
      %1111 = vmatmul.mubr.bf16.gmra.mrb[0].mxu0 %v679
      %v1112 = vpop.f32.mrb[0].mxu0
      %v1113 = vadd.f32 %v952, %v1112
      %v1114 = vpop.f32.mrb[0].mxu0
      %v1115 = vpop.f32.mrb[0].mxu0
      %v1116 = vadd.f32 %v955, %v1115
      %v1117 = vpop.f32.mrb[0].mxu0
      %1118 = vmatprep.mubr.bf16.mxu0 0
      %1119 = vmatmul.mubr.bf16.gmra.mrb[0].mxu0 %v682
      %v1120 = vpop.f32.mrb[0].mxu0
      %v1121 = vadd.f32 %v960, %v1120
      %v1122 = vpop.f32.mrb[0].mxu0
      %v1123 = vpop.f32.mrb[0].mxu0
      %v1124 = vadd.f32 %v963, %v1123
      %v1125 = vpop.f32.mrb[0].mxu0
      %1126 = vmatprep.mubr.bf16.mxu0 0
      %1127 = vmatmul.mubr.bf16.gmra.mrb[0].mxu0 %v685
      %v1128 = vpop.f32.mrb[0].mxu0
      %v1129 = vadd.f32 %v968, %v1128
      %v1130 = vpop.f32.mrb[0].mxu0
      %v1131 = vpop.f32.mrb[0].mxu0
      %v1132 = vadd.f32 %v971, %v1131
      %v1133 = vpop.f32.mrb[0].mxu0
      %1134 = vmatprep.mubr.bf16.mxu0 0
      %1135 = vmatmul.mubr.bf16.gmra.mrb[0].mxu0 %v688
      %v1136 = vpop.f32.mrb[0].mxu0
      %v1137 = vadd.f32 %v976, %v1136
      %v1138 = vpop.f32.mrb[0].mxu0
      %v1139 = vpop.f32.mrb[0].mxu0
      %v1140 = vadd.f32 %v979, %v1139
      %v1141 = vpop.f32.mrb[0].mxu0
      %1142 = vmatprep.mubr.bf16.mxu0 0
      %1143 = vmatmul.mubr.bf16.gmra.mrb[0].mxu0 %v691
      %v1144 = vpop.f32.mrb[0].mxu0
      %v1145 = vadd.f32 %v984, %v1144
      %v1146 = vpop.f32.mrb[0].mxu0
      %v1147 = vpop.f32.mrb[0].mxu0
      %v1148 = vadd.f32 %v987, %v1147
      %v1149 = vpop.f32.mrb[0].mxu0
      %1150 = vmatprep.mubr.bf16.mxu0 0
      %1151 = vmatmul.mubr.bf16.gmra.mrb[0].mxu0 %v694
      %v1152 = vpop.f32.mrb[0].mxu0
      %v1153 = vadd.f32 %v992, %v1152
      %v1154 = vpop.f32.mrb[0].mxu0
      %v1155 = vpop.f32.mrb[0].mxu0
      %v1156 = vadd.f32 %v995, %v1155
      %v1157 = vpop.f32.mrb[0].mxu0
      %1158 = vmatprep.mubr.bf16.mxu0 0
      %1159 = vmatmul.mubr.bf16.gmra.mrb[0].mxu0 %v697
      %v1160 = vpop.f32.mrb[0].mxu0
      %v1161 = vadd.f32 %v1000, %v1160
      %v1162 = vpop.f32.mrb[0].mxu0
      %v1163 = vpop.f32.mrb[0].mxu0
      %v1164 = vadd.f32 %v1003, %v1163
      %v1165 = vpop.f32.mrb[0].mxu0
      %1166 = vmatprep.mubr.bf16.mxu0 0
      %1167 = vmatmul.mubr.bf16.gmra.mrb[0].mxu0 %v700
      %v1168 = vpop.f32.mrb[0].mxu0
      %v1169 = vadd.f32 %v1008, %v1168
      %v1170 = vpop.f32.mrb[0].mxu0
      %v1171 = vpop.f32.mrb[0].mxu0
      %v1172 = vadd.f32 %v1011, %v1171
      %v1173 = vpop.f32.mrb[0].mxu0
      %1174 = vmatprep.mubr.bf16.mxu0 0
      %1175 = vmatmul.mubr.bf16.gmra.mrb[0].mxu0 %v703
      %v1176 = vpop.f32.mrb[0].mxu0
      %v1177 = vadd.f32 %v1016, %v1176
      %v1178 = vpop.f32.mrb[0].mxu0
      %v1179 = vpop.f32.mrb[0].mxu0
      %v1180 = vadd.f32 %v1019, %v1179
      %v1181 = vpop.f32.mrb[0].mxu0
      %1182 = vmatprep.mubr.bf16.mxu0 0
      %1183 = vmatmul.mubr.bf16.gmra.mrb[0].mxu0 %v706
      %v1184 = vpop.f32.mrb[0].mxu0
      %v1185 = vadd.f32 %v1024, %v1184
      %v1186 = vpop.f32.mrb[0].mxu0
      %v1187 = vpop.f32.mrb[0].mxu0
      %v1188 = vadd.f32 %v1027, %v1187
      %v1189 = vpop.f32.mrb[0].mxu0
      %1190 = vmatprep.mubr.bf16.mxu0 0
      %1191 = vmatmul.mubr.bf16.gmra.mrb[0].mxu0 %v709
      %v1192 = vpop.f32.mrb[0].mxu0
      %v1193 = vadd.f32 %v1032, %v1192
      %v1194 = vpop.f32.mrb[0].mxu0
      %v1195 = vpop.f32.mrb[0].mxu0
      %v1196 = vadd.f32 %v1035, %v1195
      %v1197 = vpop.f32.mrb[0].mxu0
      %1198 = vmatprep.mubr.bf16.mxu0 0
      %1199 = vmatmul.mubr.bf16.gmra.mrb[0].mxu0 %v712
      %v1200 = vpop.f32.mrb[0].mxu0
      %v1201 = vadd.f32 %v1040, %v1200
      %v1202 = vpop.f32.mrb[0].mxu0
      %v1203 = vpop.f32.mrb[0].mxu0
      %v1204 = vadd.f32 %v1043, %v1203
      %v1205 = vpop.f32.mrb[0].mxu0
      %1206 = vmatprep.mubr.bf16.mxu0 0
      %1207 = vmatmul.mubr.bf16.gmra.mrb[0].mxu0 %v715
      %v1208 = vpop.f32.mrb[0].mxu0
      %v1209 = vadd.f32 %v1048, %v1208
      %v1210 = vpop.f32.mrb[0].mxu0
      %v1211 = vpop.f32.mrb[0].mxu0
      %v1212 = vadd.f32 %v1051, %v1211
      %v1213 = vpop.f32.mrb[0].mxu0
      %1214 = vmatprep.mubr.bf16.mxu0 0
      %1215 = vmatmul.mubr.bf16.gmra.mrb[0].mxu0 %v718
      %v1216 = vpop.f32.mrb[0].mxu0
      %v1217 = vadd.f32 %v1056, %v1216
      %v1218 = vpop.f32.mrb[0].mxu0
      %v1219 = vpop.f32.mrb[0].mxu0
      %v1220 = vadd.f32 %v1059, %v1219
      %v1221 = vpop.f32.mrb[0].mxu0
      %1222 = vmatprep.mubr.bf16.mxu0 0
      %1223 = vmatmul.mubr.bf16.gmra.mrb[0].mxu0 %v721
      %v1224 = vpop.f32.mrb[0].mxu0
      %v1225 = vadd.f32 %v1064, %v1224
      %v1226 = vpop.f32.mrb[0].mxu0
      %v1227 = vpop.f32.mrb[0].mxu0
      %v1228 = vadd.f32 %v1067, %v1227
      %v1229 = vpop.f32.mrb[0].mxu0
      %1230 = vmatprep.mubr.bf16.mxu0 0
      %1231 = vmatmul.mubr.bf16.gmra.mrb[0].mxu0 %v724
      %v1232 = vpop.f32.mrb[0].mxu0
      %v1233 = vadd.f32 %v1072, %v1232
      %v1234 = vpop.f32.mrb[0].mxu0
      %v1235 = vpop.f32.mrb[0].mxu0
      %v1236 = vadd.f32 %v1075, %v1235
      %v1237 = vpop.f32.mrb[0].mxu0
      %1238 = vdwg.mxu0
      %1239 = vst [vmem:[#allocation3] sm:$0xff] %v1113
      %1240 = vst [vmem:[#allocation3 + $0x8] sm:$0xff] %v1116
      %1241 = vst [vmem:[#allocation3 + $0x10] sm:$0xff] %v1121
      %1242 = vst [vmem:[#allocation3 + $0x18] sm:$0xff] %v1124
      %1243 = vst [vmem:[#allocation3 + $0x20] sm:$0xff] %v1129
      %1244 = vst [vmem:[#allocation3 + $0x28] sm:$0xff] %v1132
      %1245 = vst [vmem:[#allocation3 + $0x30] sm:$0xff] %v1137
      %1246 = vst [vmem:[#allocation3 + $0x38] sm:$0xff] %v1140
      %1247 = vst [vmem:[#allocation3 + $0x40] sm:$0xff] %v1145
      %1248 = vst [vmem:[#allocation3 + $0x48] sm:$0xff] %v1148
      %1249 = vst [vmem:[#allocation3 + $0x50] sm:$0xff] %v1153
      %1250 = vst [vmem:[#allocation3 + $0x58] sm:$0xff] %v1156
      %1251 = vst [vmem:[#allocation3 + $0x60] sm:$0xff] %v1161
      %1252 = vst [vmem:[#allocation3 + $0x68] sm:$0xff] %v1164
      %1253 = vst [vmem:[#allocation3 + $0x70] sm:$0xff] %v1169
      %1254 = vst [vmem:[#allocation3 + $0x78] sm:$0xff] %v1172
      %1255 = vst [vmem:[#allocation3 + $0x80] sm:$0xff] %v1177
      %1256 = vst [vmem:[#allocation3 + $0x88] sm:$0xff] %v1180
      %1257 = vst [vmem:[#allocation3 + $0x90] sm:$0xff] %v1185
      %1258 = vst [vmem:[#allocation3 + $0x98] sm:$0xff] %v1188
      %1259 = vst [vmem:[#allocation3 + $0xa0] sm:$0xff] %v1193
      %1260 = vst [vmem:[#allocation3 + $0xa8] sm:$0xff] %v1196
      %1261 = vst [vmem:[#allocation3 + $0xb0] sm:$0xff] %v1201
      %1262 = vst [vmem:[#allocation3 + $0xb8] sm:$0xff] %v1204
      %1263 = vst [vmem:[#allocation3 + $0xc0] sm:$0xff] %v1209
      %1264 = vst [vmem:[#allocation3 + $0xc8] sm:$0xff] %v1212
      %1265 = vst [vmem:[#allocation3 + $0xd0] sm:$0xff] %v1217
      %1266 = vst [vmem:[#allocation3 + $0xd8] sm:$0xff] %v1220
      %1267 = vst [vmem:[#allocation3 + $0xe0] sm:$0xff] %v1225
      %1268 = vst [vmem:[#allocation3 + $0xe8] sm:$0xff] %v1228
      %1269 = vst [vmem:[#allocation3 + $0xf0] sm:$0xff] %v1233
      %1270 = vst [vmem:[#allocation3 + $0xf8] sm:$0xff] %v1236
      %v1271 = vld [vmem:[%s233] sm:$0xff]
      %v1272 = vld [vmem:[%s233 + $0x8] sm:$0xff]
      %v1273 = vld [vmem:[%s233 + $0x10] sm:$0xff]
      %v1274 = vld [vmem:[%s233 + $0x18] sm:$0xff]
      %v1275 = vld [vmem:[%s233 + $0x20] sm:$0xff]
      %v1276 = vld [vmem:[%s233 + $0x28] sm:$0xff]
      %v1277 = vld [vmem:[%s233 + $0x30] sm:$0xff]
      %v1278 = vld [vmem:[%s233 + $0x38] sm:$0xff]
      %v1279 = vld [vmem:[%s233 + $0x40] sm:$0xff]
      %v1280 = vld [vmem:[%s233 + $0x48] sm:$0xff]
      %v1281 = vld [vmem:[%s233 + $0x50] sm:$0xff]
      %v1282 = vld [vmem:[%s233 + $0x58] sm:$0xff]
      %v1283 = vld [vmem:[%s233 + $0x60] sm:$0xff]
      %v1284 = vld [vmem:[%s233 + $0x68] sm:$0xff]
      %v1285 = vld [vmem:[%s233 + $0x70] sm:$0xff]
      %v1286 = vld [vmem:[%s233 + $0x78] sm:$0xff]
      %v1287 = vld [vmem:[%s233 + $0x80] sm:$0xff]
      %v1288 = vld [vmem:[%s233 + $0x88] sm:$0xff]
      %v1289 = vld [vmem:[%s233 + $0x90] sm:$0xff]
      %v1290 = vld [vmem:[%s233 + $0x98] sm:$0xff]
      %v1291 = vld [vmem:[%s233 + $0xa0] sm:$0xff]
      %v1292 = vld [vmem:[%s233 + $0xa8] sm:$0xff]
      %v1293 = vld [vmem:[%s233 + $0xb0] sm:$0xff]
      %v1294 = vld [vmem:[%s233 + $0xb8] sm:$0xff]
      %v1295 = vld [vmem:[%s233 + $0xc0] sm:$0xff]
      %v1296 = vld [vmem:[%s233 + $0xc8] sm:$0xff]
      %v1297 = vld [vmem:[%s233 + $0xd0] sm:$0xff]
      %v1298 = vld [vmem:[%s233 + $0xd8] sm:$0xff]
      %v1299 = vld [vmem:[%s233 + $0xe0] sm:$0xff]
      %v1300 = vld [vmem:[%s233 + $0xe8] sm:$0xff]
      %v1301 = vld [vmem:[%s233 + $0xf0] sm:$0xff]
      %v1302 = vld [vmem:[%s233 + $0xf8] sm:$0xff]
      %v1303 = vld [vmem:[%s233 + $0x100] sm:$0xff]
      %v1304 = vld [vmem:[%s233 + $0x108] sm:$0xff]
      %v1305 = vld [vmem:[%s233 + $0x110] sm:$0xff]
      %v1306 = vld [vmem:[%s233 + $0x118] sm:$0xff]
      %v1307 = vld [vmem:[%s233 + $0x120] sm:$0xff]
      %v1308 = vld [vmem:[%s233 + $0x128] sm:$0xff]
      %v1309 = vld [vmem:[%s233 + $0x130] sm:$0xff]
      %v1310 = vld [vmem:[%s233 + $0x138] sm:$0xff]
      %v1311 = vld [vmem:[%s233 + $0x140] sm:$0xff]
      %v1312 = vld [vmem:[%s233 + $0x148] sm:$0xff]
      %v1313 = vld [vmem:[%s233 + $0x150] sm:$0xff]
      %v1314 = vld [vmem:[%s233 + $0x158] sm:$0xff]
      %v1315 = vld [vmem:[%s233 + $0x160] sm:$0xff]
      %v1316 = vld [vmem:[%s233 + $0x168] sm:$0xff]
      %v1317 = vld [vmem:[%s233 + $0x170] sm:$0xff]
      %v1318 = vld [vmem:[%s233 + $0x178] sm:$0xff]
      %s1319 = scalar_lea.vmem %s1, 192
      %v1320 = vld [vmem:[%s1319] sm:$0xf]
      %v1321 = vld [vmem:[%s1319 + $0x4] sm:$0xf]
      %v1322 = vld [vmem:[%s1319 + $0x8] sm:$0xf]
      %v1323 = vld [vmem:[%s1319 + $0xc] sm:$0xf]
      %v1324 = vld [vmem:[%s1319 + $0x10] sm:$0xf]
      %v1325 = vld [vmem:[%s1319 + $0x14] sm:$0xf]
      %v1326 = vld [vmem:[%s1319 + $0x18] sm:$0xf]
      %v1327 = vld [vmem:[%s1319 + $0x1c] sm:$0xf]
      %v1328 = vld [vmem:[%s1319 + $0x20] sm:$0xf]
      %v1329 = vld [vmem:[%s1319 + $0x24] sm:$0xf]
      %v1330 = vld [vmem:[%s1319 + $0x28] sm:$0xf]
      %v1331 = vld [vmem:[%s1319 + $0x2c] sm:$0xf]
      %v1332 = vld [vmem:[%s1319 + $0x30] sm:$0xf]
      %v1333 = vld [vmem:[%s1319 + $0x34] sm:$0xf]
      %v1334 = vld [vmem:[%s1319 + $0x38] sm:$0xf]
      %v1335 = vld [vmem:[%s1319 + $0x3c] sm:$0xf]
      %v1336 = vld [vmem:[%s1319 + $0x40] sm:$0xf]
      %v1337 = vld [vmem:[%s1319 + $0x44] sm:$0xf]
      %v1338 = vld [vmem:[%s1319 + $0x48] sm:$0xf]
      %v1339 = vld [vmem:[%s1319 + $0x4c] sm:$0xf]
      %v1340 = vld [vmem:[%s1319 + $0x50] sm:$0xf]
      %v1341 = vld [vmem:[%s1319 + $0x54] sm:$0xf]
      %v1342 = vld [vmem:[%s1319 + $0x58] sm:$0xf]
      %v1343 = vld [vmem:[%s1319 + $0x5c] sm:$0xf]
      %v1344 = vld [vmem:[%s1319 + $0x60] sm:$0xf]
      %v1345 = vld [vmem:[%s1319 + $0x64] sm:$0xf]
      %v1346 = vld [vmem:[%s1319 + $0x68] sm:$0xf]
      %v1347 = vld [vmem:[%s1319 + $0x6c] sm:$0xf]
      %v1348 = vld [vmem:[%s1319 + $0x70] sm:$0xf]
      %v1349 = vld [vmem:[%s1319 + $0x74] sm:$0xf]
      %v1350 = vld [vmem:[%s1319 + $0x78] sm:$0xf]
      %v1351 = vld [vmem:[%s1319 + $0x7c] sm:$0xf]
      %v1352 = vld [vmem:[%s1319 + $0x80] sm:$0xf]
      %v1353 = vld [vmem:[%s1319 + $0x84] sm:$0xf]
      %v1354 = vld [vmem:[%s1319 + $0x88] sm:$0xf]
      %v1355 = vld [vmem:[%s1319 + $0x8c] sm:$0xf]
      %v1356 = vld [vmem:[%s1319 + $0x90] sm:$0xf]
      %v1357 = vld [vmem:[%s1319 + $0x94] sm:$0xf]
      %v1358 = vld [vmem:[%s1319 + $0x98] sm:$0xf]
      %v1359 = vld [vmem:[%s1319 + $0x9c] sm:$0xf]
      %v1360 = vld [vmem:[%s1319 + $0xa0] sm:$0xf]
      %v1361 = vld [vmem:[%s1319 + $0xa4] sm:$0xf]
      %v1362 = vld [vmem:[%s1319 + $0xa8] sm:$0xf]
      %v1363 = vld [vmem:[%s1319 + $0xac] sm:$0xf]
      %v1364 = vld [vmem:[%s1319 + $0xb0] sm:$0xf]
      %v1365 = vld [vmem:[%s1319 + $0xb4] sm:$0xf]
      %v1366 = vld [vmem:[%s1319 + $0xb8] sm:$0xf]
      %v1367 = vld [vmem:[%s1319 + $0xbc] sm:$0xf]
      %v1416 = vunpack.c.l.b16 %v1320
      %v1417 = vunpack.c.l.b16 %v1321
      %v1418 = vunpack.c.l.b16 %v1322
      %v1419 = vunpack.c.l.b16 %v1323
      %v1420 = vunpack.c.l.b16 %v1324
      %v1421 = vunpack.c.l.b16 %v1325
      %v1422 = vunpack.c.l.b16 %v1326
      %v1423 = vunpack.c.l.b16 %v1327
      %v1424 = vunpack.c.l.b16 %v1328
      %v1425 = vunpack.c.l.b16 %v1329
      %v1426 = vunpack.c.l.b16 %v1330
      %v1427 = vunpack.c.l.b16 %v1331
      %v1428 = vunpack.c.l.b16 %v1332
      %v1429 = vunpack.c.l.b16 %v1333
      %v1430 = vunpack.c.l.b16 %v1334
      %v1431 = vunpack.c.l.b16 %v1335
      %v1432 = vunpack.c.l.b16 %v1336
      %v1433 = vunpack.c.l.b16 %v1337
      %v1434 = vunpack.c.l.b16 %v1338
      %v1435 = vunpack.c.l.b16 %v1339
      %v1436 = vunpack.c.l.b16 %v1340
      %v1437 = vunpack.c.l.b16 %v1341
      %v1438 = vunpack.c.l.b16 %v1342
      %v1439 = vunpack.c.l.b16 %v1343
      %v1440 = vunpack.c.l.b16 %v1344
      %v1441 = vunpack.c.l.b16 %v1345
      %v1442 = vunpack.c.l.b16 %v1346
      %v1443 = vunpack.c.l.b16 %v1347
      %v1444 = vunpack.c.l.b16 %v1348
      %v1445 = vunpack.c.l.b16 %v1349
      %v1446 = vunpack.c.l.b16 %v1350
      %v1447 = vunpack.c.l.b16 %v1351
      %v1448 = vunpack.c.l.b16 %v1352
      %v1449 = vunpack.c.l.b16 %v1353
      %v1450 = vunpack.c.l.b16 %v1354
      %v1451 = vunpack.c.l.b16 %v1355
      %v1452 = vunpack.c.l.b16 %v1356
      %v1453 = vunpack.c.l.b16 %v1357
      %v1454 = vunpack.c.l.b16 %v1358
      %v1455 = vunpack.c.l.b16 %v1359
      %v1456 = vunpack.c.l.b16 %v1360
      %v1457 = vunpack.c.l.b16 %v1361
      %v1458 = vunpack.c.l.b16 %v1362
      %v1459 = vunpack.c.l.b16 %v1363
      %v1460 = vunpack.c.l.b16 %v1364
      %v1461 = vunpack.c.l.b16 %v1365
      %v1462 = vunpack.c.l.b16 %v1366
      %v1463 = vunpack.c.l.b16 %v1367
      %v1464 = vpack.c.b16 %v1417, %v1416
      %v1465 = vpack.c.b16 %v1419, %v1418
      %v1466 = vpack.c.b16 %v1421, %v1420
      %v1467 = vpack.c.b16 %v1423, %v1422
      %v1468 = vpack.c.b16 %v1425, %v1424
      %v1469 = vpack.c.b16 %v1427, %v1426
      %v1470 = vpack.c.b16 %v1429, %v1428
      %v1471 = vpack.c.b16 %v1431, %v1430
      %v1472 = vpack.c.b16 %v1433, %v1432
      %v1473 = vpack.c.b16 %v1435, %v1434
      %v1474 = vpack.c.b16 %v1437, %v1436
      %v1475 = vpack.c.b16 %v1439, %v1438
      %v1476 = vpack.c.b16 %v1441, %v1440
      %v1477 = vpack.c.b16 %v1443, %v1442
      %v1478 = vpack.c.b16 %v1445, %v1444
      %v1479 = vpack.c.b16 %v1447, %v1446
      %v1480 = vpack.c.b16 %v1449, %v1448
      %v1481 = vpack.c.b16 %v1451, %v1450
      %v1482 = vpack.c.b16 %v1453, %v1452
      %v1483 = vpack.c.b16 %v1455, %v1454
      %v1484 = vpack.c.b16 %v1457, %v1456
      %v1485 = vpack.c.b16 %v1459, %v1458
      %v1486 = vpack.c.b16 %v1461, %v1460
      %v1487 = vpack.c.b16 %v1463, %v1462
      %1512 = vmatprep.subr.bf16.mxu0 0
      %1513 = vmatpush1.bf16.msra.mxu0 %v1464
      %1514 = vmatprep.subr.bf16.mxu0 0
      %1515 = vmatpush1.bf16.msra.mxu0 %v1465
      %1516 = vmatprep.subr.bf16.mxu0 0
      %1517 = vmatpush1.bf16.msra.mxu0 %v1466
      %1518 = vmatprep.subr.bf16.mxu0 0
      %1519 = vmatpush1.bf16.msra.mxu0 %v1467
      %1520 = vmatprep.subr.bf16.mxu0 0
      %1521 = vmatpush1.bf16.msra.mxu0 %v1468
      %1522 = vmatprep.subr.bf16.mxu0 0
      %1523 = vmatpush1.bf16.msra.mxu0 %v1469
      %1524 = vmatprep.subr.bf16.mxu0 0
      %1525 = vmatpush1.bf16.msra.mxu0 %v1470
      %1526 = vmatprep.subr.bf16.mxu0 0
      %1527 = vmatpush1.bf16.msra.mxu0 %v1471
      %1528 = vmatprep.subr.bf16.mxu0 0
      %1529 = vmatpush1.bf16.msra.mxu0 %v1472
      %1530 = vmatprep.subr.bf16.mxu0 0
      %1531 = vmatpush1.bf16.msra.mxu0 %v1473
      %1532 = vmatprep.subr.bf16.mxu0 0
      %1533 = vmatpush1.bf16.msra.mxu0 %v1474
      %1534 = vmatprep.subr.bf16.mxu0 0
      %1535 = vmatpush1.bf16.msra.mxu0 %v1475
      %1536 = vmatprep.subr.bf16.mxu0 0
      %1537 = vmatpush1.bf16.msra.mxu0 %v1476
      %1538 = vmatprep.subr.bf16.mxu0 0
      %1539 = vmatpush1.bf16.msra.mxu0 %v1477
      %1540 = vmatprep.subr.bf16.mxu0 0
      %1541 = vmatpush1.bf16.msra.mxu0 %v1478
      %1542 = vmatprep.subr.bf16.mxu0 0
      %1543 = vmatpush1.bf16.msra.mxu0 %v1479
      %1544 = vmatprep.mubr.bf16.mxu0 %v1272
      %1545 = vmatmul.mubr.bf16.gmra.mrb[0].mxu0 %v1271
      %v1546 = vpop.f32.mrb[0].mxu0
      %v1547 = vadd.f32 0.0, %v1546
      %v1548 = vpop.f32.mrb[0].mxu0
      %v1549 = vpop.f32.mrb[0].mxu0
      %v1550 = vadd.f32 0.0, %v1549
      %v1551 = vpop.f32.mrb[0].mxu0
      %1552 = vmatprep.mubr.bf16.mxu0 %v1275
      %1553 = vmatmul.mubr.bf16.gmra.mrb[0].mxu0 %v1274
      %v1554 = vpop.f32.mrb[0].mxu0
      %v1555 = vadd.f32 0.0, %v1554
      %v1556 = vpop.f32.mrb[0].mxu0
      %v1557 = vpop.f32.mrb[0].mxu0
      %v1558 = vadd.f32 0.0, %v1557
      %v1559 = vpop.f32.mrb[0].mxu0
      %1560 = vmatprep.mubr.bf16.mxu0 %v1278
      %1561 = vmatmul.mubr.bf16.gmra.mrb[0].mxu0 %v1277
      %v1562 = vpop.f32.mrb[0].mxu0
      %v1563 = vadd.f32 0.0, %v1562
      %v1564 = vpop.f32.mrb[0].mxu0
      %v1565 = vpop.f32.mrb[0].mxu0
      %v1566 = vadd.f32 0.0, %v1565
      %v1567 = vpop.f32.mrb[0].mxu0
      %1568 = vmatprep.mubr.bf16.mxu0 %v1281
      %1569 = vmatmul.mubr.bf16.gmra.mrb[0].mxu0 %v1280
      %v1570 = vpop.f32.mrb[0].mxu0
      %v1571 = vadd.f32 0.0, %v1570
      %v1572 = vpop.f32.mrb[0].mxu0
      %v1573 = vpop.f32.mrb[0].mxu0
      %v1574 = vadd.f32 0.0, %v1573
      %v1575 = vpop.f32.mrb[0].mxu0
      %1576 = vmatprep.mubr.bf16.mxu0 %v1284
      %1577 = vmatmul.mubr.bf16.gmra.mrb[0].mxu0 %v1283
      %v1578 = vpop.f32.mrb[0].mxu0
      %v1579 = vadd.f32 0.0, %v1578
      %v1580 = vpop.f32.mrb[0].mxu0
      %v1581 = vpop.f32.mrb[0].mxu0
      %v1582 = vadd.f32 0.0, %v1581
      %v1583 = vpop.f32.mrb[0].mxu0
      %1584 = vmatprep.mubr.bf16.mxu0 %v1287
      %1585 = vmatmul.mubr.bf16.gmra.mrb[0].mxu0 %v1286
      %v1586 = vpop.f32.mrb[0].mxu0
      %v1587 = vadd.f32 0.0, %v1586
      %v1588 = vpop.f32.mrb[0].mxu0
      %v1589 = vpop.f32.mrb[0].mxu0
      %v1590 = vadd.f32 0.0, %v1589
      %v1591 = vpop.f32.mrb[0].mxu0
      %1592 = vmatprep.mubr.bf16.mxu0 %v1290
      %1593 = vmatmul.mubr.bf16.gmra.mrb[0].mxu0 %v1289
      %v1594 = vpop.f32.mrb[0].mxu0
      %v1595 = vadd.f32 0.0, %v1594
      %v1596 = vpop.f32.mrb[0].mxu0
      %v1597 = vpop.f32.mrb[0].mxu0
      %v1598 = vadd.f32 0.0, %v1597
      %v1599 = vpop.f32.mrb[0].mxu0
      %1600 = vmatprep.mubr.bf16.mxu0 %v1293
      %1601 = vmatmul.mubr.bf16.gmra.mrb[0].mxu0 %v1292
      %v1602 = vpop.f32.mrb[0].mxu0
      %v1603 = vadd.f32 0.0, %v1602
      %v1604 = vpop.f32.mrb[0].mxu0
      %v1605 = vpop.f32.mrb[0].mxu0
      %v1606 = vadd.f32 0.0, %v1605
      %v1607 = vpop.f32.mrb[0].mxu0
      %1608 = vmatprep.mubr.bf16.mxu0 %v1296
      %1609 = vmatmul.mubr.bf16.gmra.mrb[0].mxu0 %v1295
      %v1610 = vpop.f32.mrb[0].mxu0
      %v1611 = vadd.f32 0.0, %v1610
      %v1612 = vpop.f32.mrb[0].mxu0
      %v1613 = vpop.f32.mrb[0].mxu0
      %v1614 = vadd.f32 0.0, %v1613
      %v1615 = vpop.f32.mrb[0].mxu0
      %1616 = vmatprep.mubr.bf16.mxu0 %v1299
      %1617 = vmatmul.mubr.bf16.gmra.mrb[0].mxu0 %v1298
      %v1618 = vpop.f32.mrb[0].mxu0
      %v1619 = vadd.f32 0.0, %v1618
      %v1620 = vpop.f32.mrb[0].mxu0
      %v1621 = vpop.f32.mrb[0].mxu0
      %v1622 = vadd.f32 0.0, %v1621
      %v1623 = vpop.f32.mrb[0].mxu0
      %1624 = vmatprep.mubr.bf16.mxu0 %v1302
      %1625 = vmatmul.mubr.bf16.gmra.mrb[0].mxu0 %v1301
      %v1626 = vpop.f32.mrb[0].mxu0
      %v1627 = vadd.f32 0.0, %v1626
      %v1628 = vpop.f32.mrb[0].mxu0
      %v1629 = vpop.f32.mrb[0].mxu0
      %v1630 = vadd.f32 0.0, %v1629
      %v1631 = vpop.f32.mrb[0].mxu0
      %1632 = vmatprep.mubr.bf16.mxu0 %v1305
      %1633 = vmatmul.mubr.bf16.gmra.mrb[0].mxu0 %v1304
      %v1634 = vpop.f32.mrb[0].mxu0
      %v1635 = vadd.f32 0.0, %v1634
      %v1636 = vpop.f32.mrb[0].mxu0
      %v1637 = vpop.f32.mrb[0].mxu0
      %v1638 = vadd.f32 0.0, %v1637
      %v1639 = vpop.f32.mrb[0].mxu0
      %1640 = vmatprep.mubr.bf16.mxu0 %v1308
      %1641 = vmatmul.mubr.bf16.gmra.mrb[0].mxu0 %v1307
      %v1642 = vpop.f32.mrb[0].mxu0
      %v1643 = vadd.f32 0.0, %v1642
      %v1644 = vpop.f32.mrb[0].mxu0
      %v1645 = vpop.f32.mrb[0].mxu0
      %v1646 = vadd.f32 0.0, %v1645
      %v1647 = vpop.f32.mrb[0].mxu0
      %1648 = vmatprep.mubr.bf16.mxu0 %v1311
      %1649 = vmatmul.mubr.bf16.gmra.mrb[0].mxu0 %v1310
      %v1650 = vpop.f32.mrb[0].mxu0
      %v1651 = vadd.f32 0.0, %v1650
      %v1652 = vpop.f32.mrb[0].mxu0
      %v1653 = vpop.f32.mrb[0].mxu0
      %v1654 = vadd.f32 0.0, %v1653
      %v1655 = vpop.f32.mrb[0].mxu0
      %1656 = vmatprep.mubr.bf16.mxu0 %v1314
      %1657 = vmatmul.mubr.bf16.gmra.mrb[0].mxu0 %v1313
      %v1658 = vpop.f32.mrb[0].mxu0
      %v1659 = vadd.f32 0.0, %v1658
      %v1660 = vpop.f32.mrb[0].mxu0
      %v1661 = vpop.f32.mrb[0].mxu0
      %v1662 = vadd.f32 0.0, %v1661
      %v1663 = vpop.f32.mrb[0].mxu0
      %1664 = vmatprep.mubr.bf16.mxu0 %v1317
      %1665 = vmatmul.mubr.bf16.gmra.mrb[0].mxu0 %v1316
      %v1666 = vpop.f32.mrb[0].mxu0
      %v1667 = vadd.f32 0.0, %v1666
      %v1668 = vpop.f32.mrb[0].mxu0
      %v1669 = vpop.f32.mrb[0].mxu0
      %v1670 = vadd.f32 0.0, %v1669
      %v1671 = vpop.f32.mrb[0].mxu0
      %1672 = vdwg.mxu0
      %1673 = vmatprep.subr.bf16.mxu0 0
      %1674 = vmatpush1.bf16.msra.mxu0 %v1480
      %1675 = vmatprep.subr.bf16.mxu0 0
      %1676 = vmatpush1.bf16.msra.mxu0 %v1481
      %1677 = vmatprep.subr.bf16.mxu0 0
      %1678 = vmatpush1.bf16.msra.mxu0 %v1482
      %1679 = vmatprep.subr.bf16.mxu0 0
      %1680 = vmatpush1.bf16.msra.mxu0 %v1483
      %1681 = vmatprep.subr.bf16.mxu0 0
      %1682 = vmatpush1.bf16.msra.mxu0 %v1484
      %1683 = vmatprep.subr.bf16.mxu0 0
      %1684 = vmatpush1.bf16.msra.mxu0 %v1485
      %1685 = vmatprep.subr.bf16.mxu0 0
      %1686 = vmatpush1.bf16.msra.mxu0 %v1486
      %1687 = vmatprep.subr.bf16.mxu0 0
      %1688 = vmatpush1.bf16.msra.mxu0 %v1487
      %1689 = vmatprep.subr.bf16.mxu0 0
      %1690 = vmatpush1.bf16.msra.mxu0 0
      %1691 = vmatprep.subr.bf16.mxu0 0
      %1692 = vmatpush1.bf16.msra.mxu0 0
      %1693 = vmatprep.subr.bf16.mxu0 0
      %1694 = vmatpush1.bf16.msra.mxu0 0
      %1695 = vmatprep.subr.bf16.mxu0 0
      %1696 = vmatpush1.bf16.msra.mxu0 0
      %1697 = vmatprep.subr.bf16.mxu0 0
      %1698 = vmatpush1.bf16.msra.mxu0 0
      %1699 = vmatprep.subr.bf16.mxu0 0
      %1700 = vmatpush1.bf16.msra.mxu0 0
      %1701 = vmatprep.subr.bf16.mxu0 0
      %1702 = vmatpush1.bf16.msra.mxu0 0
      %1703 = vmatprep.subr.bf16.mxu0 0
      %1704 = vmatpush1.bf16.msra.mxu0 0
      %1705 = vmatprep.mubr.bf16.mxu0 0
      %1706 = vmatmul.mubr.bf16.gmra.mrb[0].mxu0 %v1273
      %v1707 = vpop.f32.mrb[0].mxu0
      %v1708 = vadd.f32 %v1547, %v1707
      %v1709 = vpop.f32.mrb[0].mxu0
      %v1710 = vpop.f32.mrb[0].mxu0
      %v1711 = vadd.f32 %v1550, %v1710
      %v1712 = vpop.f32.mrb[0].mxu0
      %1713 = vmatprep.mubr.bf16.mxu0 0
      %1714 = vmatmul.mubr.bf16.gmra.mrb[0].mxu0 %v1276
      %v1715 = vpop.f32.mrb[0].mxu0
      %v1716 = vadd.f32 %v1555, %v1715
      %v1717 = vpop.f32.mrb[0].mxu0
      %v1718 = vpop.f32.mrb[0].mxu0
      %v1719 = vadd.f32 %v1558, %v1718
      %v1720 = vpop.f32.mrb[0].mxu0
      %1721 = vmatprep.mubr.bf16.mxu0 0
      %1722 = vmatmul.mubr.bf16.gmra.mrb[0].mxu0 %v1279
      %v1723 = vpop.f32.mrb[0].mxu0
      %v1724 = vadd.f32 %v1563, %v1723
      %v1725 = vpop.f32.mrb[0].mxu0
      %v1726 = vpop.f32.mrb[0].mxu0
      %v1727 = vadd.f32 %v1566, %v1726
      %v1728 = vpop.f32.mrb[0].mxu0
      %1729 = vmatprep.mubr.bf16.mxu0 0
      %1730 = vmatmul.mubr.bf16.gmra.mrb[0].mxu0 %v1282
      %v1731 = vpop.f32.mrb[0].mxu0
      %v1732 = vadd.f32 %v1571, %v1731
      %v1733 = vpop.f32.mrb[0].mxu0
      %v1734 = vpop.f32.mrb[0].mxu0
      %v1735 = vadd.f32 %v1574, %v1734
      %v1736 = vpop.f32.mrb[0].mxu0
      %1737 = vmatprep.mubr.bf16.mxu0 0
      %1738 = vmatmul.mubr.bf16.gmra.mrb[0].mxu0 %v1285
      %v1739 = vpop.f32.mrb[0].mxu0
      %v1740 = vadd.f32 %v1579, %v1739
      %v1741 = vpop.f32.mrb[0].mxu0
      %v1742 = vpop.f32.mrb[0].mxu0
      %v1743 = vadd.f32 %v1582, %v1742
      %v1744 = vpop.f32.mrb[0].mxu0
      %1745 = vmatprep.mubr.bf16.mxu0 0
      %1746 = vmatmul.mubr.bf16.gmra.mrb[0].mxu0 %v1288
      %v1747 = vpop.f32.mrb[0].mxu0
      %v1748 = vadd.f32 %v1587, %v1747
      %v1749 = vpop.f32.mrb[0].mxu0
      %v1750 = vpop.f32.mrb[0].mxu0
      %v1751 = vadd.f32 %v1590, %v1750
      %v1752 = vpop.f32.mrb[0].mxu0
      %1753 = vmatprep.mubr.bf16.mxu0 0
      %1754 = vmatmul.mubr.bf16.gmra.mrb[0].mxu0 %v1291
      %v1755 = vpop.f32.mrb[0].mxu0
      %v1756 = vadd.f32 %v1595, %v1755
      %v1757 = vpop.f32.mrb[0].mxu0
      %v1758 = vpop.f32.mrb[0].mxu0
      %v1759 = vadd.f32 %v1598, %v1758
      %v1760 = vpop.f32.mrb[0].mxu0
      %1761 = vmatprep.mubr.bf16.mxu0 0
      %1762 = vmatmul.mubr.bf16.gmra.mrb[0].mxu0 %v1294
      %v1763 = vpop.f32.mrb[0].mxu0
      %v1764 = vadd.f32 %v1603, %v1763
      %v1765 = vpop.f32.mrb[0].mxu0
      %v1766 = vpop.f32.mrb[0].mxu0
      %v1767 = vadd.f32 %v1606, %v1766
      %v1768 = vpop.f32.mrb[0].mxu0
      %1769 = vmatprep.mubr.bf16.mxu0 0
      %1770 = vmatmul.mubr.bf16.gmra.mrb[0].mxu0 %v1297
      %v1771 = vpop.f32.mrb[0].mxu0
      %v1772 = vadd.f32 %v1611, %v1771
      %v1773 = vpop.f32.mrb[0].mxu0
      %v1774 = vpop.f32.mrb[0].mxu0
      %v1775 = vadd.f32 %v1614, %v1774
      %v1776 = vpop.f32.mrb[0].mxu0
      %1777 = vmatprep.mubr.bf16.mxu0 0
      %1778 = vmatmul.mubr.bf16.gmra.mrb[0].mxu0 %v1300
      %v1779 = vpop.f32.mrb[0].mxu0
      %v1780 = vadd.f32 %v1619, %v1779
      %v1781 = vpop.f32.mrb[0].mxu0
      %v1782 = vpop.f32.mrb[0].mxu0
      %v1783 = vadd.f32 %v1622, %v1782
      %v1784 = vpop.f32.mrb[0].mxu0
      %1785 = vmatprep.mubr.bf16.mxu0 0
      %1786 = vmatmul.mubr.bf16.gmra.mrb[0].mxu0 %v1303
      %v1787 = vpop.f32.mrb[0].mxu0
      %v1788 = vadd.f32 %v1627, %v1787
      %v1789 = vpop.f32.mrb[0].mxu0
      %v1790 = vpop.f32.mrb[0].mxu0
      %v1791 = vadd.f32 %v1630, %v1790
      %v1792 = vpop.f32.mrb[0].mxu0
      %1793 = vmatprep.mubr.bf16.mxu0 0
      %1794 = vmatmul.mubr.bf16.gmra.mrb[0].mxu0 %v1306
      %v1795 = vpop.f32.mrb[0].mxu0
      %v1796 = vadd.f32 %v1635, %v1795
      %v1797 = vpop.f32.mrb[0].mxu0
      %v1798 = vpop.f32.mrb[0].mxu0
      %v1799 = vadd.f32 %v1638, %v1798
      %v1800 = vpop.f32.mrb[0].mxu0
      %1801 = vmatprep.mubr.bf16.mxu0 0
      %1802 = vmatmul.mubr.bf16.gmra.mrb[0].mxu0 %v1309
      %v1803 = vpop.f32.mrb[0].mxu0
      %v1804 = vadd.f32 %v1643, %v1803
      %v1805 = vpop.f32.mrb[0].mxu0
      %v1806 = vpop.f32.mrb[0].mxu0
      %v1807 = vadd.f32 %v1646, %v1806
      %v1808 = vpop.f32.mrb[0].mxu0
      %1809 = vmatprep.mubr.bf16.mxu0 0
      %1810 = vmatmul.mubr.bf16.gmra.mrb[0].mxu0 %v1312
      %v1811 = vpop.f32.mrb[0].mxu0
      %v1812 = vadd.f32 %v1651, %v1811
      %v1813 = vpop.f32.mrb[0].mxu0
      %v1814 = vpop.f32.mrb[0].mxu0
      %v1815 = vadd.f32 %v1654, %v1814
      %v1816 = vpop.f32.mrb[0].mxu0
      %1817 = vmatprep.mubr.bf16.mxu0 0
      %1818 = vmatmul.mubr.bf16.gmra.mrb[0].mxu0 %v1315
      %v1819 = vpop.f32.mrb[0].mxu0
      %v1820 = vadd.f32 %v1659, %v1819
      %v1821 = vpop.f32.mrb[0].mxu0
      %v1822 = vpop.f32.mrb[0].mxu0
      %v1823 = vadd.f32 %v1662, %v1822
      %v1824 = vpop.f32.mrb[0].mxu0
      %1825 = vmatprep.mubr.bf16.mxu0 0
      %1826 = vmatmul.mubr.bf16.gmra.mrb[0].mxu0 %v1318
      %v1827 = vpop.f32.mrb[0].mxu0
      %v1828 = vadd.f32 %v1667, %v1827
      %v1829 = vpop.f32.mrb[0].mxu0
      %v1830 = vpop.f32.mrb[0].mxu0
      %v1831 = vadd.f32 %v1670, %v1830
      %v1832 = vpop.f32.mrb[0].mxu0
      %1833 = vdwg.mxu0
      %v1834 = vld [vmem:[#allocation3] sm:$0xff]
      %v1835 = vld [vmem:[#allocation3 + $0x8] sm:$0xff]
      %v1836 = vld [vmem:[#allocation3 + $0x10] sm:$0xff]
      %v1837 = vld [vmem:[#allocation3 + $0x18] sm:$0xff]
      %v1838 = vld [vmem:[#allocation3 + $0x20] sm:$0xff]
      %v1839 = vld [vmem:[#allocation3 + $0x28] sm:$0xff]
      %v1840 = vld [vmem:[#allocation3 + $0x30] sm:$0xff]
      %v1841 = vld [vmem:[#allocation3 + $0x38] sm:$0xff]
      %v1842 = vld [vmem:[#allocation3 + $0x40] sm:$0xff]
      %v1843 = vld [vmem:[#allocation3 + $0x48] sm:$0xff]
      %v1844 = vld [vmem:[#allocation3 + $0x50] sm:$0xff]
      %v1845 = vld [vmem:[#allocation3 + $0x58] sm:$0xff]
      %v1846 = vld [vmem:[#allocation3 + $0x60] sm:$0xff]
      %v1847 = vld [vmem:[#allocation3 + $0x68] sm:$0xff]
      %v1848 = vld [vmem:[#allocation3 + $0x70] sm:$0xff]
      %v1849 = vld [vmem:[#allocation3 + $0x78] sm:$0xff]
      %v1850 = vld [vmem:[#allocation3 + $0x80] sm:$0xff]
      %v1851 = vld [vmem:[#allocation3 + $0x88] sm:$0xff]
      %v1852 = vld [vmem:[#allocation3 + $0x90] sm:$0xff]
      %v1853 = vld [vmem:[#allocation3 + $0x98] sm:$0xff]
      %v1854 = vld [vmem:[#allocation3 + $0xa0] sm:$0xff]
      %v1855 = vld [vmem:[#allocation3 + $0xa8] sm:$0xff]
      %v1856 = vld [vmem:[#allocation3 + $0xb0] sm:$0xff]
      %v1857 = vld [vmem:[#allocation3 + $0xb8] sm:$0xff]
      %v1858 = vld [vmem:[#allocation3 + $0xc0] sm:$0xff]
      %v1859 = vld [vmem:[#allocation3 + $0xc8] sm:$0xff]
      %v1860 = vld [vmem:[#allocation3 + $0xd0] sm:$0xff]
      %v1861 = vld [vmem:[#allocation3 + $0xd8] sm:$0xff]
      %v1862 = vld [vmem:[#allocation3 + $0xe0] sm:$0xff]
      %v1863 = vld [vmem:[#allocation3 + $0xe8] sm:$0xff]
      %v1864 = vld [vmem:[#allocation3 + $0xf0] sm:$0xff]
      %v1865 = vld [vmem:[#allocation3 + $0xf8] sm:$0xff]
      %v1866 = vadd.f32 %v1834, %v1708
      %v1867 = vadd.f32 %v1835, %v1711
      %v1868 = vadd.f32 %v1836, %v1716
      %v1869 = vadd.f32 %v1837, %v1719
      %v1870 = vadd.f32 %v1838, %v1724
      %v1871 = vadd.f32 %v1839, %v1727
      %v1872 = vadd.f32 %v1840, %v1732
      %v1873 = vadd.f32 %v1841, %v1735
      %v1874 = vadd.f32 %v1842, %v1740
      %v1875 = vadd.f32 %v1843, %v1743
      %v1876 = vadd.f32 %v1844, %v1748
      %v1877 = vadd.f32 %v1845, %v1751
      %v1878 = vadd.f32 %v1846, %v1756
      %v1879 = vadd.f32 %v1847, %v1759
      %v1880 = vadd.f32 %v1848, %v1764
      %v1881 = vadd.f32 %v1849, %v1767
      %v1882 = vadd.f32 %v1850, %v1772
      %v1883 = vadd.f32 %v1851, %v1775
      %v1884 = vadd.f32 %v1852, %v1780
      %v1885 = vadd.f32 %v1853, %v1783
      %v1886 = vadd.f32 %v1854, %v1788
      %v1887 = vadd.f32 %v1855, %v1791
      %v1888 = vadd.f32 %v1856, %v1796
      %v1889 = vadd.f32 %v1857, %v1799
      %v1890 = vadd.f32 %v1858, %v1804
      %v1891 = vadd.f32 %v1859, %v1807
      %v1892 = vadd.f32 %v1860, %v1812
      %v1893 = vadd.f32 %v1861, %v1815
      %v1894 = vadd.f32 %v1862, %v1820
      %v1895 = vadd.f32 %v1863, %v1823
      %v1896 = vadd.f32 %v1864, %v1828
      %v1897 = vadd.f32 %v1865, %v1831
      %1898 = vst [vmem:[#allocation3] sm:$0xff] %v1866
      %1899 = vst [vmem:[#allocation3 + $0x8] sm:$0xff] %v1867
      %1900 = vst [vmem:[#allocation3 + $0x10] sm:$0xff] %v1868
      %1901 = vst [vmem:[#allocation3 + $0x18] sm:$0xff] %v1869
      %1902 = vst [vmem:[#allocation3 + $0x20] sm:$0xff] %v1870
      %1903 = vst [vmem:[#allocation3 + $0x28] sm:$0xff] %v1871
      %1904 = vst [vmem:[#allocation3 + $0x30] sm:$0xff] %v1872
      %1905 = vst [vmem:[#allocation3 + $0x38] sm:$0xff] %v1873
      %1906 = vst [vmem:[#allocation3 + $0x40] sm:$0xff] %v1874
      %1907 = vst [vmem:[#allocation3 + $0x48] sm:$0xff] %v1875
      %1908 = vst [vmem:[#allocation3 + $0x50] sm:$0xff] %v1876
      %1909 = vst [vmem:[#allocation3 + $0x58] sm:$0xff] %v1877
      %1910 = vst [vmem:[#allocation3 + $0x60] sm:$0xff] %v1878
      %1911 = vst [vmem:[#allocation3 + $0x68] sm:$0xff] %v1879
      %1912 = vst [vmem:[#allocation3 + $0x70] sm:$0xff] %v1880
      %1913 = vst [vmem:[#allocation3 + $0x78] sm:$0xff] %v1881
      %1914 = vst [vmem:[#allocation3 + $0x80] sm:$0xff] %v1882
      %1915 = vst [vmem:[#allocation3 + $0x88] sm:$0xff] %v1883
      %1916 = vst [vmem:[#allocation3 + $0x90] sm:$0xff] %v1884
      %1917 = vst [vmem:[#allocation3 + $0x98] sm:$0xff] %v1885
      %1918 = vst [vmem:[#allocation3 + $0xa0] sm:$0xff] %v1886
      %1919 = vst [vmem:[#allocation3 + $0xa8] sm:$0xff] %v1887
      %1920 = vst [vmem:[#allocation3 + $0xb0] sm:$0xff] %v1888
      %1921 = vst [vmem:[#allocation3 + $0xb8] sm:$0xff] %v1889
      %1922 = vst [vmem:[#allocation3 + $0xc0] sm:$0xff] %v1890
      %1923 = vst [vmem:[#allocation3 + $0xc8] sm:$0xff] %v1891
      %1924 = vst [vmem:[#allocation3 + $0xd0] sm:$0xff] %v1892
      %1925 = vst [vmem:[#allocation3 + $0xd8] sm:$0xff] %v1893
      %1926 = vst [vmem:[#allocation3 + $0xe0] sm:$0xff] %v1894
      %1927 = vst [vmem:[#allocation3 + $0xe8] sm:$0xff] %v1895
      %1928 = vst [vmem:[#allocation3 + $0xf0] sm:$0xff] %v1896
      %1929 = vst [vmem:[#allocation3 + $0xf8] sm:$0xff] %v1897
      %s1930 = scalar_lea.vmem [#allocation2], 48
      %v1931 = vld [vmem:[%s1930] sm:$0xff]
      %v1932 = vld [vmem:[%s1930 + $0x8] sm:$0xff]
      %v1933 = vld [vmem:[%s1930 + $0x10] sm:$0xff]
      %v1934 = vld [vmem:[%s1930 + $0x18] sm:$0xff]
      %v1935 = vld [vmem:[%s1930 + $0x20] sm:$0xff]
      %v1936 = vld [vmem:[%s1930 + $0x28] sm:$0xff]
      %v1937 = vld [vmem:[%s1930 + $0x30] sm:$0xff]
      %v1938 = vld [vmem:[%s1930 + $0x38] sm:$0xff]
      %v1939 = vld [vmem:[%s1930 + $0x40] sm:$0xff]
      %v1940 = vld [vmem:[%s1930 + $0x48] sm:$0xff]
      %v1941 = vld [vmem:[%s1930 + $0x50] sm:$0xff]
      %v1942 = vld [vmem:[%s1930 + $0x58] sm:$0xff]
      %v1943 = vld [vmem:[%s1930 + $0x60] sm:$0xff]
      %v1944 = vld [vmem:[%s1930 + $0x68] sm:$0xff]
      %v1945 = vld [vmem:[%s1930 + $0x70] sm:$0xff]
      %v1946 = vld [vmem:[%s1930 + $0x78] sm:$0xff]
      %v1947 = vld [vmem:[%s1930 + $0x80] sm:$0xff]
      %v1948 = vld [vmem:[%s1930 + $0x88] sm:$0xff]
      %v1949 = vld [vmem:[%s1930 + $0x90] sm:$0xff]
      %v1950 = vld [vmem:[%s1930 + $0x98] sm:$0xff]
      %v1951 = vld [vmem:[%s1930 + $0xa0] sm:$0xff]
      %v1952 = vld [vmem:[%s1930 + $0xa8] sm:$0xff]
      %v1953 = vld [vmem:[%s1930 + $0xb0] sm:$0xff]
      %v1954 = vld [vmem:[%s1930 + $0xb8] sm:$0xff]
      %v1955 = vld [vmem:[%s1930 + $0xc0] sm:$0xff]
      %v1956 = vld [vmem:[%s1930 + $0xc8] sm:$0xff]
      %v1957 = vld [vmem:[%s1930 + $0xd0] sm:$0xff]
      %v1958 = vld [vmem:[%s1930 + $0xd8] sm:$0xff]
      %v1959 = vld [vmem:[%s1930 + $0xe0] sm:$0xff]
      %v1960 = vld [vmem:[%s1930 + $0xe8] sm:$0xff]
      %v1961 = vld [vmem:[%s1930 + $0xf0] sm:$0xff]
      %v1962 = vld [vmem:[%s1930 + $0xf8] sm:$0xff]
      %v1963 = vld [vmem:[%s1930 + $0x100] sm:$0xff]
      %v1964 = vld [vmem:[%s1930 + $0x108] sm:$0xff]
      %v1965 = vld [vmem:[%s1930 + $0x110] sm:$0xff]
      %v1966 = vld [vmem:[%s1930 + $0x118] sm:$0xff]
      %v1967 = vld [vmem:[%s1930 + $0x120] sm:$0xff]
      %v1968 = vld [vmem:[%s1930 + $0x128] sm:$0xff]
      %v1969 = vld [vmem:[%s1930 + $0x130] sm:$0xff]
      %v1970 = vld [vmem:[%s1930 + $0x138] sm:$0xff]
      %v1971 = vld [vmem:[%s1930 + $0x140] sm:$0xff]
      %v1972 = vld [vmem:[%s1930 + $0x148] sm:$0xff]
      %v1973 = vld [vmem:[%s1930 + $0x150] sm:$0xff]
      %v1974 = vld [vmem:[%s1930 + $0x158] sm:$0xff]
      %v1975 = vld [vmem:[%s1930 + $0x160] sm:$0xff]
      %v1976 = vld [vmem:[%s1930 + $0x168] sm:$0xff]
      %v1977 = vld [vmem:[%s1930 + $0x170] sm:$0xff]
      %v1978 = vld [vmem:[%s1930 + $0x178] sm:$0xff]
      %s1979 = scalar_lea.vmem %s1, 384
      %v1980 = vld [vmem:[%s1979] sm:$0xf]
      %v1981 = vld [vmem:[%s1979 + $0x4] sm:$0xf]
      %v1982 = vld [vmem:[%s1979 + $0x8] sm:$0xf]
      %v1983 = vld [vmem:[%s1979 + $0xc] sm:$0xf]
      %v1984 = vld [vmem:[%s1979 + $0x10] sm:$0xf]
      %v1985 = vld [vmem:[%s1979 + $0x14] sm:$0xf]
      %v1986 = vld [vmem:[%s1979 + $0x18] sm:$0xf]
      %v1987 = vld [vmem:[%s1979 + $0x1c] sm:$0xf]
      %v1988 = vld [vmem:[%s1979 + $0x20] sm:$0xf]
      %v1989 = vld [vmem:[%s1979 + $0x24] sm:$0xf]
      %v1990 = vld [vmem:[%s1979 + $0x28] sm:$0xf]
      %v1991 = vld [vmem:[%s1979 + $0x2c] sm:$0xf]
      %v1992 = vld [vmem:[%s1979 + $0x30] sm:$0xf]
      %v1993 = vld [vmem:[%s1979 + $0x34] sm:$0xf]
      %v1994 = vld [vmem:[%s1979 + $0x38] sm:$0xf]
      %v1995 = vld [vmem:[%s1979 + $0x3c] sm:$0xf]
      %v1996 = vld [vmem:[%s1979 + $0x40] sm:$0xf]
      %v1997 = vld [vmem:[%s1979 + $0x44] sm:$0xf]
      %v1998 = vld [vmem:[%s1979 + $0x48] sm:$0xf]
      %v1999 = vld [vmem:[%s1979 + $0x4c] sm:$0xf]
      %v2000 = vld [vmem:[%s1979 + $0x50] sm:$0xf]
      %v2001 = vld [vmem:[%s1979 + $0x54] sm:$0xf]
      %v2002 = vld [vmem:[%s1979 + $0x58] sm:$0xf]
      %v2003 = vld [vmem:[%s1979 + $0x5c] sm:$0xf]
      %v2004 = vld [vmem:[%s1979 + $0x60] sm:$0xf]
      %v2005 = vld [vmem:[%s1979 + $0x64] sm:$0xf]
      %v2006 = vld [vmem:[%s1979 + $0x68] sm:$0xf]
      %v2007 = vld [vmem:[%s1979 + $0x6c] sm:$0xf]
      %v2008 = vld [vmem:[%s1979 + $0x70] sm:$0xf]
      %v2009 = vld [vmem:[%s1979 + $0x74] sm:$0xf]
      %v2010 = vld [vmem:[%s1979 + $0x78] sm:$0xf]
      %v2011 = vld [vmem:[%s1979 + $0x7c] sm:$0xf]
      %v2012 = vld [vmem:[%s1979 + $0x80] sm:$0xf]
      %v2013 = vld [vmem:[%s1979 + $0x84] sm:$0xf]
      %v2014 = vld [vmem:[%s1979 + $0x88] sm:$0xf]
      %v2015 = vld [vmem:[%s1979 + $0x8c] sm:$0xf]
      %v2016 = vld [vmem:[%s1979 + $0x90] sm:$0xf]
      %v2017 = vld [vmem:[%s1979 + $0x94] sm:$0xf]
      %v2018 = vld [vmem:[%s1979 + $0x98] sm:$0xf]
      %v2019 = vld [vmem:[%s1979 + $0x9c] sm:$0xf]
      %v2020 = vld [vmem:[%s1979 + $0xa0] sm:$0xf]
      %v2021 = vld [vmem:[%s1979 + $0xa4] sm:$0xf]
      %v2022 = vld [vmem:[%s1979 + $0xa8] sm:$0xf]
      %v2023 = vld [vmem:[%s1979 + $0xac] sm:$0xf]
      %v2024 = vld [vmem:[%s1979 + $0xb0] sm:$0xf]
      %v2025 = vld [vmem:[%s1979 + $0xb4] sm:$0xf]
      %v2026 = vld [vmem:[%s1979 + $0xb8] sm:$0xf]
      %v2027 = vld [vmem:[%s1979 + $0xbc] sm:$0xf]
      %v2076 = vunpack.c.l.b16 %v1980
      %v2077 = vunpack.c.l.b16 %v1981
      %v2078 = vunpack.c.l.b16 %v1982
      %v2079 = vunpack.c.l.b16 %v1983
      %v2080 = vunpack.c.l.b16 %v1984
      %v2081 = vunpack.c.l.b16 %v1985
      %v2082 = vunpack.c.l.b16 %v1986
      %v2083 = vunpack.c.l.b16 %v1987
      %v2084 = vunpack.c.l.b16 %v1988
      %v2085 = vunpack.c.l.b16 %v1989
      %v2086 = vunpack.c.l.b16 %v1990
      %v2087 = vunpack.c.l.b16 %v1991
      %v2088 = vunpack.c.l.b16 %v1992
      %v2089 = vunpack.c.l.b16 %v1993
      %v2090 = vunpack.c.l.b16 %v1994
      %v2091 = vunpack.c.l.b16 %v1995
      %v2092 = vunpack.c.l.b16 %v1996
      %v2093 = vunpack.c.l.b16 %v1997
      %v2094 = vunpack.c.l.b16 %v1998
      %v2095 = vunpack.c.l.b16 %v1999
      %v2096 = vunpack.c.l.b16 %v2000
      %v2097 = vunpack.c.l.b16 %v2001
      %v2098 = vunpack.c.l.b16 %v2002
      %v2099 = vunpack.c.l.b16 %v2003
      %v2100 = vunpack.c.l.b16 %v2004
      %v2101 = vunpack.c.l.b16 %v2005
      %v2102 = vunpack.c.l.b16 %v2006
      %v2103 = vunpack.c.l.b16 %v2007
      %v2104 = vunpack.c.l.b16 %v2008
      %v2105 = vunpack.c.l.b16 %v2009
      %v2106 = vunpack.c.l.b16 %v2010
      %v2107 = vunpack.c.l.b16 %v2011
      %v2108 = vunpack.c.l.b16 %v2012
      %v2109 = vunpack.c.l.b16 %v2013
      %v2110 = vunpack.c.l.b16 %v2014
      %v2111 = vunpack.c.l.b16 %v2015
      %v2112 = vunpack.c.l.b16 %v2016
      %v2113 = vunpack.c.l.b16 %v2017
      %v2114 = vunpack.c.l.b16 %v2018
      %v2115 = vunpack.c.l.b16 %v2019
      %v2116 = vunpack.c.l.b16 %v2020
      %v2117 = vunpack.c.l.b16 %v2021
      %v2118 = vunpack.c.l.b16 %v2022
      %v2119 = vunpack.c.l.b16 %v2023
      %v2120 = vunpack.c.l.b16 %v2024
      %v2121 = vunpack.c.l.b16 %v2025
      %v2122 = vunpack.c.l.b16 %v2026
      %v2123 = vunpack.c.l.b16 %v2027
      %v2124 = vpack.c.b16 %v2077, %v2076
      %v2125 = vpack.c.b16 %v2079, %v2078
      %v2126 = vpack.c.b16 %v2081, %v2080
      %v2127 = vpack.c.b16 %v2083, %v2082
      %v2128 = vpack.c.b16 %v2085, %v2084
      %v2129 = vpack.c.b16 %v2087, %v2086
      %v2130 = vpack.c.b16 %v2089, %v2088
      %v2131 = vpack.c.b16 %v2091, %v2090
      %v2132 = vpack.c.b16 %v2093, %v2092
      %v2133 = vpack.c.b16 %v2095, %v2094
      %v2134 = vpack.c.b16 %v2097, %v2096
      %v2135 = vpack.c.b16 %v2099, %v2098
      %v2136 = vpack.c.b16 %v2101, %v2100
      %v2137 = vpack.c.b16 %v2103, %v2102
      %v2138 = vpack.c.b16 %v2105, %v2104
      %v2139 = vpack.c.b16 %v2107, %v2106
      %v2140 = vpack.c.b16 %v2109, %v2108
      %v2141 = vpack.c.b16 %v2111, %v2110
      %v2142 = vpack.c.b16 %v2113, %v2112
      %v2143 = vpack.c.b16 %v2115, %v2114
      %v2144 = vpack.c.b16 %v2117, %v2116
      %v2145 = vpack.c.b16 %v2119, %v2118
      %v2146 = vpack.c.b16 %v2121, %v2120
      %v2147 = vpack.c.b16 %v2123, %v2122
      %2172 = vmatprep.subr.bf16.mxu0 0
      %2173 = vmatpush1.bf16.msra.mxu0 %v2124
      %2174 = vmatprep.subr.bf16.mxu0 0
      %2175 = vmatpush1.bf16.msra.mxu0 %v2125
      %2176 = vmatprep.subr.bf16.mxu0 0
      %2177 = vmatpush1.bf16.msra.mxu0 %v2126
      %2178 = vmatprep.subr.bf16.mxu0 0
      %2179 = vmatpush1.bf16.msra.mxu0 %v2127
      %2180 = vmatprep.subr.bf16.mxu0 0
      %2181 = vmatpush1.bf16.msra.mxu0 %v2128
      %2182 = vmatprep.subr.bf16.mxu0 0
      %2183 = vmatpush1.bf16.msra.mxu0 %v2129
      %2184 = vmatprep.subr.bf16.mxu0 0
      %2185 = vmatpush1.bf16.msra.mxu0 %v2130
      %2186 = vmatprep.subr.bf16.mxu0 0
      %2187 = vmatpush1.bf16.msra.mxu0 %v2131
      %2188 = vmatprep.subr.bf16.mxu0 0
      %2189 = vmatpush1.bf16.msra.mxu0 %v2132
      %2190 = vmatprep.subr.bf16.mxu0 0
      %2191 = vmatpush1.bf16.msra.mxu0 %v2133
      %2192 = vmatprep.subr.bf16.mxu0 0
      %2193 = vmatpush1.bf16.msra.mxu0 %v2134
      %2194 = vmatprep.subr.bf16.mxu0 0
      %2195 = vmatpush1.bf16.msra.mxu0 %v2135
      %2196 = vmatprep.subr.bf16.mxu0 0
      %2197 = vmatpush1.bf16.msra.mxu0 %v2136
      %2198 = vmatprep.subr.bf16.mxu0 0
      %2199 = vmatpush1.bf16.msra.mxu0 %v2137
      %2200 = vmatprep.subr.bf16.mxu0 0
      %2201 = vmatpush1.bf16.msra.mxu0 %v2138
      %2202 = vmatprep.subr.bf16.mxu0 0
      %2203 = vmatpush1.bf16.msra.mxu0 %v2139
      %2204 = vmatprep.mubr.bf16.mxu0 %v1932
      %2205 = vmatmul.mubr.bf16.gmra.mrb[0].mxu0 %v1931
      %v2206 = vpop.f32.mrb[0].mxu0
      %v2207 = vadd.f32 0.0, %v2206
      %v2208 = vpop.f32.mrb[0].mxu0
      %v2209 = vpop.f32.mrb[0].mxu0
      %v2210 = vadd.f32 0.0, %v2209
      %v2211 = vpop.f32.mrb[0].mxu0
      %2212 = vmatprep.mubr.bf16.mxu0 %v1935
      %2213 = vmatmul.mubr.bf16.gmra.mrb[0].mxu0 %v1934
      %v2214 = vpop.f32.mrb[0].mxu0
      %v2215 = vadd.f32 0.0, %v2214
      %v2216 = vpop.f32.mrb[0].mxu0
      %v2217 = vpop.f32.mrb[0].mxu0
      %v2218 = vadd.f32 0.0, %v2217
      %v2219 = vpop.f32.mrb[0].mxu0
      %2220 = vmatprep.mubr.bf16.mxu0 %v1938
      %2221 = vmatmul.mubr.bf16.gmra.mrb[0].mxu0 %v1937
      %v2222 = vpop.f32.mrb[0].mxu0
      %v2223 = vadd.f32 0.0, %v2222
      %v2224 = vpop.f32.mrb[0].mxu0
      %v2225 = vpop.f32.mrb[0].mxu0
      %v2226 = vadd.f32 0.0, %v2225
      %v2227 = vpop.f32.mrb[0].mxu0
      %2228 = vmatprep.mubr.bf16.mxu0 %v1941
      %2229 = vmatmul.mubr.bf16.gmra.mrb[0].mxu0 %v1940
      %v2230 = vpop.f32.mrb[0].mxu0
      %v2231 = vadd.f32 0.0, %v2230
      %v2232 = vpop.f32.mrb[0].mxu0
      %v2233 = vpop.f32.mrb[0].mxu0
      %v2234 = vadd.f32 0.0, %v2233
      %v2235 = vpop.f32.mrb[0].mxu0
      %2236 = vmatprep.mubr.bf16.mxu0 %v1944
      %2237 = vmatmul.mubr.bf16.gmra.mrb[0].mxu0 %v1943
      %v2238 = vpop.f32.mrb[0].mxu0
      %v2239 = vadd.f32 0.0, %v2238
      %v2240 = vpop.f32.mrb[0].mxu0
      %v2241 = vpop.f32.mrb[0].mxu0
      %v2242 = vadd.f32 0.0, %v2241
      %v2243 = vpop.f32.mrb[0].mxu0
      %2244 = vmatprep.mubr.bf16.mxu0 %v1947
      %2245 = vmatmul.mubr.bf16.gmra.mrb[0].mxu0 %v1946
      %v2246 = vpop.f32.mrb[0].mxu0
      %v2247 = vadd.f32 0.0, %v2246
      %v2248 = vpop.f32.mrb[0].mxu0
      %v2249 = vpop.f32.mrb[0].mxu0
      %v2250 = vadd.f32 0.0, %v2249
      %v2251 = vpop.f32.mrb[0].mxu0
      %2252 = vmatprep.mubr.bf16.mxu0 %v1950
      %2253 = vmatmul.mubr.bf16.gmra.mrb[0].mxu0 %v1949
      %v2254 = vpop.f32.mrb[0].mxu0
      %v2255 = vadd.f32 0.0, %v2254
      %v2256 = vpop.f32.mrb[0].mxu0
      %v2257 = vpop.f32.mrb[0].mxu0
      %v2258 = vadd.f32 0.0, %v2257
      %v2259 = vpop.f32.mrb[0].mxu0
      %2260 = vmatprep.mubr.bf16.mxu0 %v1953
      %2261 = vmatmul.mubr.bf16.gmra.mrb[0].mxu0 %v1952
      %v2262 = vpop.f32.mrb[0].mxu0
      %v2263 = vadd.f32 0.0, %v2262
      %v2264 = vpop.f32.mrb[0].mxu0
      %v2265 = vpop.f32.mrb[0].mxu0
      %v2266 = vadd.f32 0.0, %v2265
      %v2267 = vpop.f32.mrb[0].mxu0
      %2268 = vmatprep.mubr.bf16.mxu0 %v1956
      %2269 = vmatmul.mubr.bf16.gmra.mrb[0].mxu0 %v1955
      %v2270 = vpop.f32.mrb[0].mxu0
      %v2271 = vadd.f32 0.0, %v2270
      %v2272 = vpop.f32.mrb[0].mxu0
      %v2273 = vpop.f32.mrb[0].mxu0
      %v2274 = vadd.f32 0.0, %v2273
      %v2275 = vpop.f32.mrb[0].mxu0
      %2276 = vmatprep.mubr.bf16.mxu0 %v1959
      %2277 = vmatmul.mubr.bf16.gmra.mrb[0].mxu0 %v1958
      %v2278 = vpop.f32.mrb[0].mxu0
      %v2279 = vadd.f32 0.0, %v2278
      %v2280 = vpop.f32.mrb[0].mxu0
      %v2281 = vpop.f32.mrb[0].mxu0
      %v2282 = vadd.f32 0.0, %v2281
      %v2283 = vpop.f32.mrb[0].mxu0
      %2284 = vmatprep.mubr.bf16.mxu0 %v1962
      %2285 = vmatmul.mubr.bf16.gmra.mrb[0].mxu0 %v1961
      %v2286 = vpop.f32.mrb[0].mxu0
      %v2287 = vadd.f32 0.0, %v2286
      %v2288 = vpop.f32.mrb[0].mxu0
      %v2289 = vpop.f32.mrb[0].mxu0
      %v2290 = vadd.f32 0.0, %v2289
      %v2291 = vpop.f32.mrb[0].mxu0
      %2292 = vmatprep.mubr.bf16.mxu0 %v1965
      %2293 = vmatmul.mubr.bf16.gmra.mrb[0].mxu0 %v1964
      %v2294 = vpop.f32.mrb[0].mxu0
      %v2295 = vadd.f32 0.0, %v2294
      %v2296 = vpop.f32.mrb[0].mxu0
      %v2297 = vpop.f32.mrb[0].mxu0
      %v2298 = vadd.f32 0.0, %v2297
      %v2299 = vpop.f32.mrb[0].mxu0
      %2300 = vmatprep.mubr.bf16.mxu0 %v1968
      %2301 = vmatmul.mubr.bf16.gmra.mrb[0].mxu0 %v1967
      %v2302 = vpop.f32.mrb[0].mxu0
      %v2303 = vadd.f32 0.0, %v2302
      %v2304 = vpop.f32.mrb[0].mxu0
      %v2305 = vpop.f32.mrb[0].mxu0
      %v2306 = vadd.f32 0.0, %v2305
      %v2307 = vpop.f32.mrb[0].mxu0
      %2308 = vmatprep.mubr.bf16.mxu0 %v1971
      %2309 = vmatmul.mubr.bf16.gmra.mrb[0].mxu0 %v1970
      %v2310 = vpop.f32.mrb[0].mxu0
      %v2311 = vadd.f32 0.0, %v2310
      %v2312 = vpop.f32.mrb[0].mxu0
      %v2313 = vpop.f32.mrb[0].mxu0
      %v2314 = vadd.f32 0.0, %v2313
      %v2315 = vpop.f32.mrb[0].mxu0
      %2316 = vmatprep.mubr.bf16.mxu0 %v1974
      %2317 = vmatmul.mubr.bf16.gmra.mrb[0].mxu0 %v1973
      %v2318 = vpop.f32.mrb[0].mxu0
      %v2319 = vadd.f32 0.0, %v2318
      %v2320 = vpop.f32.mrb[0].mxu0
      %v2321 = vpop.f32.mrb[0].mxu0
      %v2322 = vadd.f32 0.0, %v2321
      %v2323 = vpop.f32.mrb[0].mxu0
      %2324 = vmatprep.mubr.bf16.mxu0 %v1977
      %2325 = vmatmul.mubr.bf16.gmra.mrb[0].mxu0 %v1976
      %v2326 = vpop.f32.mrb[0].mxu0
      %v2327 = vadd.f32 0.0, %v2326
      %v2328 = vpop.f32.mrb[0].mxu0
      %v2329 = vpop.f32.mrb[0].mxu0
      %v2330 = vadd.f32 0.0, %v2329
      %v2331 = vpop.f32.mrb[0].mxu0
      %2332 = vdwg.mxu0
      %2333 = vmatprep.subr.bf16.mxu0 0
      %2334 = vmatpush1.bf16.msra.mxu0 %v2140
      %2335 = vmatprep.subr.bf16.mxu0 0
      %2336 = vmatpush1.bf16.msra.mxu0 %v2141
      %2337 = vmatprep.subr.bf16.mxu0 0
      %2338 = vmatpush1.bf16.msra.mxu0 %v2142
      %2339 = vmatprep.subr.bf16.mxu0 0
      %2340 = vmatpush1.bf16.msra.mxu0 %v2143
      %2341 = vmatprep.subr.bf16.mxu0 0
      %2342 = vmatpush1.bf16.msra.mxu0 %v2144
      %2343 = vmatprep.subr.bf16.mxu0 0
      %2344 = vmatpush1.bf16.msra.mxu0 %v2145
      %2345 = vmatprep.subr.bf16.mxu0 0
      %2346 = vmatpush1.bf16.msra.mxu0 %v2146
      %2347 = vmatprep.subr.bf16.mxu0 0
      %2348 = vmatpush1.bf16.msra.mxu0 %v2147
      %2349 = vmatprep.subr.bf16.mxu0 0
      %2350 = vmatpush1.bf16.msra.mxu0 0
      %2351 = vmatprep.subr.bf16.mxu0 0
      %2352 = vmatpush1.bf16.msra.mxu0 0
      %2353 = vmatprep.subr.bf16.mxu0 0
      %2354 = vmatpush1.bf16.msra.mxu0 0
      %2355 = vmatprep.subr.bf16.mxu0 0
      %2356 = vmatpush1.bf16.msra.mxu0 0
      %2357 = vmatprep.subr.bf16.mxu0 0
      %2358 = vmatpush1.bf16.msra.mxu0 0
      %2359 = vmatprep.subr.bf16.mxu0 0
      %2360 = vmatpush1.bf16.msra.mxu0 0
      %2361 = vmatprep.subr.bf16.mxu0 0
      %2362 = vmatpush1.bf16.msra.mxu0 0
      %2363 = vmatprep.subr.bf16.mxu0 0
      %2364 = vmatpush1.bf16.msra.mxu0 0
      %2365 = vmatprep.mubr.bf16.mxu0 0
      %2366 = vmatmul.mubr.bf16.gmra.mrb[0].mxu0 %v1933
      %v2367 = vpop.f32.mrb[0].mxu0
      %v2368 = vadd.f32 %v2207, %v2367
      %v2369 = vpop.f32.mrb[0].mxu0
      %v2370 = vpop.f32.mrb[0].mxu0
      %v2371 = vadd.f32 %v2210, %v2370
      %v2372 = vpop.f32.mrb[0].mxu0
      %2373 = vmatprep.mubr.bf16.mxu0 0
      %2374 = vmatmul.mubr.bf16.gmra.mrb[0].mxu0 %v1936
      %v2375 = vpop.f32.mrb[0].mxu0
      %v2376 = vadd.f32 %v2215, %v2375
      %v2377 = vpop.f32.mrb[0].mxu0
      %v2378 = vpop.f32.mrb[0].mxu0
      %v2379 = vadd.f32 %v2218, %v2378
      %v2380 = vpop.f32.mrb[0].mxu0
      %2381 = vmatprep.mubr.bf16.mxu0 0
      %2382 = vmatmul.mubr.bf16.gmra.mrb[0].mxu0 %v1939
      %v2383 = vpop.f32.mrb[0].mxu0
      %v2384 = vadd.f32 %v2223, %v2383
      %v2385 = vpop.f32.mrb[0].mxu0
      %v2386 = vpop.f32.mrb[0].mxu0
      %v2387 = vadd.f32 %v2226, %v2386
      %v2388 = vpop.f32.mrb[0].mxu0
      %2389 = vmatprep.mubr.bf16.mxu0 0
      %2390 = vmatmul.mubr.bf16.gmra.mrb[0].mxu0 %v1942
      %v2391 = vpop.f32.mrb[0].mxu0
      %v2392 = vadd.f32 %v2231, %v2391
      %v2393 = vpop.f32.mrb[0].mxu0
      %v2394 = vpop.f32.mrb[0].mxu0
      %v2395 = vadd.f32 %v2234, %v2394
      %v2396 = vpop.f32.mrb[0].mxu0
      %2397 = vmatprep.mubr.bf16.mxu0 0
      %2398 = vmatmul.mubr.bf16.gmra.mrb[0].mxu0 %v1945
      %v2399 = vpop.f32.mrb[0].mxu0
      %v2400 = vadd.f32 %v2239, %v2399
      %v2401 = vpop.f32.mrb[0].mxu0
      %v2402 = vpop.f32.mrb[0].mxu0
      %v2403 = vadd.f32 %v2242, %v2402
      %v2404 = vpop.f32.mrb[0].mxu0
      %2405 = vmatprep.mubr.bf16.mxu0 0
      %2406 = vmatmul.mubr.bf16.gmra.mrb[0].mxu0 %v1948
      %v2407 = vpop.f32.mrb[0].mxu0
      %v2408 = vadd.f32 %v2247, %v2407
      %v2409 = vpop.f32.mrb[0].mxu0
      %v2410 = vpop.f32.mrb[0].mxu0
      %v2411 = vadd.f32 %v2250, %v2410
      %v2412 = vpop.f32.mrb[0].mxu0
      %2413 = vmatprep.mubr.bf16.mxu0 0
      %2414 = vmatmul.mubr.bf16.gmra.mrb[0].mxu0 %v1951
      %v2415 = vpop.f32.mrb[0].mxu0
      %v2416 = vadd.f32 %v2255, %v2415
      %v2417 = vpop.f32.mrb[0].mxu0
      %v2418 = vpop.f32.mrb[0].mxu0
      %v2419 = vadd.f32 %v2258, %v2418
      %v2420 = vpop.f32.mrb[0].mxu0
      %2421 = vmatprep.mubr.bf16.mxu0 0
      %2422 = vmatmul.mubr.bf16.gmra.mrb[0].mxu0 %v1954
      %v2423 = vpop.f32.mrb[0].mxu0
      %v2424 = vadd.f32 %v2263, %v2423
      %v2425 = vpop.f32.mrb[0].mxu0
      %v2426 = vpop.f32.mrb[0].mxu0
      %v2427 = vadd.f32 %v2266, %v2426
      %v2428 = vpop.f32.mrb[0].mxu0
      %2429 = vmatprep.mubr.bf16.mxu0 0
      %2430 = vmatmul.mubr.bf16.gmra.mrb[0].mxu0 %v1957
      %v2431 = vpop.f32.mrb[0].mxu0
      %v2432 = vadd.f32 %v2271, %v2431
      %v2433 = vpop.f32.mrb[0].mxu0
      %v2434 = vpop.f32.mrb[0].mxu0
      %v2435 = vadd.f32 %v2274, %v2434
      %v2436 = vpop.f32.mrb[0].mxu0
      %2437 = vmatprep.mubr.bf16.mxu0 0
      %2438 = vmatmul.mubr.bf16.gmra.mrb[0].mxu0 %v1960
      %v2439 = vpop.f32.mrb[0].mxu0
      %v2440 = vadd.f32 %v2279, %v2439
      %v2441 = vpop.f32.mrb[0].mxu0
      %v2442 = vpop.f32.mrb[0].mxu0
      %v2443 = vadd.f32 %v2282, %v2442
      %v2444 = vpop.f32.mrb[0].mxu0
      %2445 = vmatprep.mubr.bf16.mxu0 0
      %2446 = vmatmul.mubr.bf16.gmra.mrb[0].mxu0 %v1963
      %v2447 = vpop.f32.mrb[0].mxu0
      %v2448 = vadd.f32 %v2287, %v2447
      %v2449 = vpop.f32.mrb[0].mxu0
      %v2450 = vpop.f32.mrb[0].mxu0
      %v2451 = vadd.f32 %v2290, %v2450
      %v2452 = vpop.f32.mrb[0].mxu0
      %2453 = vmatprep.mubr.bf16.mxu0 0
      %2454 = vmatmul.mubr.bf16.gmra.mrb[0].mxu0 %v1966
      %v2455 = vpop.f32.mrb[0].mxu0
      %v2456 = vadd.f32 %v2295, %v2455
      %v2457 = vpop.f32.mrb[0].mxu0
      %v2458 = vpop.f32.mrb[0].mxu0
      %v2459 = vadd.f32 %v2298, %v2458
      %v2460 = vpop.f32.mrb[0].mxu0
      %2461 = vmatprep.mubr.bf16.mxu0 0
      %2462 = vmatmul.mubr.bf16.gmra.mrb[0].mxu0 %v1969
      %v2463 = vpop.f32.mrb[0].mxu0
      %v2464 = vadd.f32 %v2303, %v2463
      %v2465 = vpop.f32.mrb[0].mxu0
      %v2466 = vpop.f32.mrb[0].mxu0
      %v2467 = vadd.f32 %v2306, %v2466
      %v2468 = vpop.f32.mrb[0].mxu0
      %2469 = vmatprep.mubr.bf16.mxu0 0
      %2470 = vmatmul.mubr.bf16.gmra.mrb[0].mxu0 %v1972
      %v2471 = vpop.f32.mrb[0].mxu0
      %v2472 = vadd.f32 %v2311, %v2471
      %v2473 = vpop.f32.mrb[0].mxu0
      %v2474 = vpop.f32.mrb[0].mxu0
      %v2475 = vadd.f32 %v2314, %v2474
      %v2476 = vpop.f32.mrb[0].mxu0
      %2477 = vmatprep.mubr.bf16.mxu0 0
      %2478 = vmatmul.mubr.bf16.gmra.mrb[0].mxu0 %v1975
      %v2479 = vpop.f32.mrb[0].mxu0
      %v2480 = vadd.f32 %v2319, %v2479
      %v2481 = vpop.f32.mrb[0].mxu0
      %v2482 = vpop.f32.mrb[0].mxu0
      %v2483 = vadd.f32 %v2322, %v2482
      %v2484 = vpop.f32.mrb[0].mxu0
      %2485 = vmatprep.mubr.bf16.mxu0 0
      %2486 = vmatmul.mubr.bf16.gmra.mrb[0].mxu0 %v1978
      %v2487 = vpop.f32.mrb[0].mxu0
      %v2488 = vadd.f32 %v2327, %v2487
      %v2489 = vpop.f32.mrb[0].mxu0
      %v2490 = vpop.f32.mrb[0].mxu0
      %v2491 = vadd.f32 %v2330, %v2490
      %v2492 = vpop.f32.mrb[0].mxu0
      %2493 = vdwg.mxu0
      %v2494 = vld [vmem:[#allocation3] sm:$0xff]
      %v2495 = vld [vmem:[#allocation3 + $0x8] sm:$0xff]
      %v2496 = vld [vmem:[#allocation3 + $0x10] sm:$0xff]
      %v2497 = vld [vmem:[#allocation3 + $0x18] sm:$0xff]
      %v2498 = vld [vmem:[#allocation3 + $0x20] sm:$0xff]
      %v2499 = vld [vmem:[#allocation3 + $0x28] sm:$0xff]
      %v2500 = vld [vmem:[#allocation3 + $0x30] sm:$0xff]
      %v2501 = vld [vmem:[#allocation3 + $0x38] sm:$0xff]
      %v2502 = vld [vmem:[#allocation3 + $0x40] sm:$0xff]
      %v2503 = vld [vmem:[#allocation3 + $0x48] sm:$0xff]
      %v2504 = vld [vmem:[#allocation3 + $0x50] sm:$0xff]
      %v2505 = vld [vmem:[#allocation3 + $0x58] sm:$0xff]
      %v2506 = vld [vmem:[#allocation3 + $0x60] sm:$0xff]
      %v2507 = vld [vmem:[#allocation3 + $0x68] sm:$0xff]
      %v2508 = vld [vmem:[#allocation3 + $0x70] sm:$0xff]
      %v2509 = vld [vmem:[#allocation3 + $0x78] sm:$0xff]
      %v2510 = vld [vmem:[#allocation3 + $0x80] sm:$0xff]
      %v2511 = vld [vmem:[#allocation3 + $0x88] sm:$0xff]
      %v2512 = vld [vmem:[#allocation3 + $0x90] sm:$0xff]
      %v2513 = vld [vmem:[#allocation3 + $0x98] sm:$0xff]
      %v2514 = vld [vmem:[#allocation3 + $0xa0] sm:$0xff]
      %v2515 = vld [vmem:[#allocation3 + $0xa8] sm:$0xff]
      %v2516 = vld [vmem:[#allocation3 + $0xb0] sm:$0xff]
      %v2517 = vld [vmem:[#allocation3 + $0xb8] sm:$0xff]
      %v2518 = vld [vmem:[#allocation3 + $0xc0] sm:$0xff]
      %v2519 = vld [vmem:[#allocation3 + $0xc8] sm:$0xff]
      %v2520 = vld [vmem:[#allocation3 + $0xd0] sm:$0xff]
      %v2521 = vld [vmem:[#allocation3 + $0xd8] sm:$0xff]
      %v2522 = vld [vmem:[#allocation3 + $0xe0] sm:$0xff]
      %v2523 = vld [vmem:[#allocation3 + $0xe8] sm:$0xff]
      %v2524 = vld [vmem:[#allocation3 + $0xf0] sm:$0xff]
      %v2525 = vld [vmem:[#allocation3 + $0xf8] sm:$0xff]
      %v2526 = vadd.f32 %v2494, %v2368
      %v2527 = vadd.f32 %v2495, %v2371
      %v2528 = vadd.f32 %v2496, %v2376
      %v2529 = vadd.f32 %v2497, %v2379
      %v2530 = vadd.f32 %v2498, %v2384
      %v2531 = vadd.f32 %v2499, %v2387
      %v2532 = vadd.f32 %v2500, %v2392
      %v2533 = vadd.f32 %v2501, %v2395
      %v2534 = vadd.f32 %v2502, %v2400
      %v2535 = vadd.f32 %v2503, %v2403
      %v2536 = vadd.f32 %v2504, %v2408
      %v2537 = vadd.f32 %v2505, %v2411
      %v2538 = vadd.f32 %v2506, %v2416
      %v2539 = vadd.f32 %v2507, %v2419
      %v2540 = vadd.f32 %v2508, %v2424
      %v2541 = vadd.f32 %v2509, %v2427
      %v2542 = vadd.f32 %v2510, %v2432
      %v2543 = vadd.f32 %v2511, %v2435
      %v2544 = vadd.f32 %v2512, %v2440
      %v2545 = vadd.f32 %v2513, %v2443
      %v2546 = vadd.f32 %v2514, %v2448
      %v2547 = vadd.f32 %v2515, %v2451
      %v2548 = vadd.f32 %v2516, %v2456
      %v2549 = vadd.f32 %v2517, %v2459
      %v2550 = vadd.f32 %v2518, %v2464
      %v2551 = vadd.f32 %v2519, %v2467
      %v2552 = vadd.f32 %v2520, %v2472
      %v2553 = vadd.f32 %v2521, %v2475
      %v2554 = vadd.f32 %v2522, %v2480
      %v2555 = vadd.f32 %v2523, %v2483
      %v2556 = vadd.f32 %v2524, %v2488
      %v2557 = vadd.f32 %v2525, %v2491
      %2558 = vst [vmem:[#allocation3] sm:$0xff] %v2526
      %2559 = vst [vmem:[#allocation3 + $0x8] sm:$0xff] %v2527
      %2560 = vst [vmem:[#allocation3 + $0x10] sm:$0xff] %v2528
      %2561 = vst [vmem:[#allocation3 + $0x18] sm:$0xff] %v2529
      %2562 = vst [vmem:[#allocation3 + $0x20] sm:$0xff] %v2530
      %2563 = vst [vmem:[#allocation3 + $0x28] sm:$0xff] %v2531
      %2564 = vst [vmem:[#allocation3 + $0x30] sm:$0xff] %v2532
      %2565 = vst [vmem:[#allocation3 + $0x38] sm:$0xff] %v2533
      %2566 = vst [vmem:[#allocation3 + $0x40] sm:$0xff] %v2534
      %2567 = vst [vmem:[#allocation3 + $0x48] sm:$0xff] %v2535
      %2568 = vst [vmem:[#allocation3 + $0x50] sm:$0xff] %v2536
      %2569 = vst [vmem:[#allocation3 + $0x58] sm:$0xff] %v2537
      %2570 = vst [vmem:[#allocation3 + $0x60] sm:$0xff] %v2538
      %2571 = vst [vmem:[#allocation3 + $0x68] sm:$0xff] %v2539
      %2572 = vst [vmem:[#allocation3 + $0x70] sm:$0xff] %v2540
      %2573 = vst [vmem:[#allocation3 + $0x78] sm:$0xff] %v2541
      %2574 = vst [vmem:[#allocation3 + $0x80] sm:$0xff] %v2542
      %2575 = vst [vmem:[#allocation3 + $0x88] sm:$0xff] %v2543
      %2576 = vst [vmem:[#allocation3 + $0x90] sm:$0xff] %v2544
      %2577 = vst [vmem:[#allocation3 + $0x98] sm:$0xff] %v2545
      %2578 = vst [vmem:[#allocation3 + $0xa0] sm:$0xff] %v2546
      %2579 = vst [vmem:[#allocation3 + $0xa8] sm:$0xff] %v2547
      %2580 = vst [vmem:[#allocation3 + $0xb0] sm:$0xff] %v2548
      %2581 = vst [vmem:[#allocation3 + $0xb8] sm:$0xff] %v2549
      %2582 = vst [vmem:[#allocation3 + $0xc0] sm:$0xff] %v2550
      %2583 = vst [vmem:[#allocation3 + $0xc8] sm:$0xff] %v2551
      %2584 = vst [vmem:[#allocation3 + $0xd0] sm:$0xff] %v2552
      %2585 = vst [vmem:[#allocation3 + $0xd8] sm:$0xff] %v2553
      %2586 = vst [vmem:[#allocation3 + $0xe0] sm:$0xff] %v2554
      %2587 = vst [vmem:[#allocation3 + $0xe8] sm:$0xff] %v2555
      %2588 = vst [vmem:[#allocation3 + $0xf0] sm:$0xff] %v2556
      %2589 = vst [vmem:[#allocation3 + $0xf8] sm:$0xff] %v2557
      %v2590 = vld [vmem:[#allocation3] sm:$0xff]
      %v2591 = vld [vmem:[#allocation3 + $0x8] sm:$0xff]
      %v2592 = vld [vmem:[#allocation3 + $0x10] sm:$0xff]
      %v2593 = vld [vmem:[#allocation3 + $0x18] sm:$0xff]
      %v2594 = vld [vmem:[#allocation3 + $0x20] sm:$0xff]
      %v2595 = vld [vmem:[#allocation3 + $0x28] sm:$0xff]
      %v2596 = vld [vmem:[#allocation3 + $0x30] sm:$0xff]
      %v2597 = vld [vmem:[#allocation3 + $0x38] sm:$0xff]
      %v2598 = vld [vmem:[#allocation3 + $0x40] sm:$0xff]
      %v2599 = vld [vmem:[#allocation3 + $0x48] sm:$0xff]
      %v2600 = vld [vmem:[#allocation3 + $0x50] sm:$0xff]
      %v2601 = vld [vmem:[#allocation3 + $0x58] sm:$0xff]
      %v2602 = vld [vmem:[#allocation3 + $0x60] sm:$0xff]
      %v2603 = vld [vmem:[#allocation3 + $0x68] sm:$0xff]
      %v2604 = vld [vmem:[#allocation3 + $0x70] sm:$0xff]
      %v2605 = vld [vmem:[#allocation3 + $0x78] sm:$0xff]
      %v2606 = vld [vmem:[#allocation3 + $0x80] sm:$0xff]
      %v2607 = vld [vmem:[#allocation3 + $0x88] sm:$0xff]
      %v2608 = vld [vmem:[#allocation3 + $0x90] sm:$0xff]
      %v2609 = vld [vmem:[#allocation3 + $0x98] sm:$0xff]
      %v2610 = vld [vmem:[#allocation3 + $0xa0] sm:$0xff]
      %v2611 = vld [vmem:[#allocation3 + $0xa8] sm:$0xff]
      %v2612 = vld [vmem:[#allocation3 + $0xb0] sm:$0xff]
      %v2613 = vld [vmem:[#allocation3 + $0xb8] sm:$0xff]
      %v2614 = vld [vmem:[#allocation3 + $0xc0] sm:$0xff]
      %v2615 = vld [vmem:[#allocation3 + $0xc8] sm:$0xff]
      %v2616 = vld [vmem:[#allocation3 + $0xd0] sm:$0xff]
      %v2617 = vld [vmem:[#allocation3 + $0xd8] sm:$0xff]
      %v2618 = vld [vmem:[#allocation3 + $0xe0] sm:$0xff]
      %v2619 = vld [vmem:[#allocation3 + $0xe8] sm:$0xff]
      %v2620 = vld [vmem:[#allocation3 + $0xf0] sm:$0xff]
      %v2621 = vld [vmem:[#allocation3 + $0xf8] sm:$0xff]
      %v2622 = vld [vmem:[%s2] sm:$0x1]
      %v2624 = vlaneseq
      %v2625 = vshrl.u32 %v2624, 7
      %v2626 = vsub.s32 0, %v2625
      %v2627 = vrot.slane %v2622, %v2626
      %v2629 = vadd.f32 %v2590, %v2627
      %v2630 = vadd.f32 %v2591, %v2627
      %v2631 = vadd.f32 %v2592, %v2627
      %v2632 = vadd.f32 %v2593, %v2627
      %v2633 = vadd.f32 %v2594, %v2627
      %v2634 = vadd.f32 %v2595, %v2627
      %v2635 = vadd.f32 %v2596, %v2627
      %v2636 = vadd.f32 %v2597, %v2627
      %v2637 = vadd.f32 %v2598, %v2627
      %v2638 = vadd.f32 %v2599, %v2627
      %v2639 = vadd.f32 %v2600, %v2627
      %v2640 = vadd.f32 %v2601, %v2627
      %v2641 = vadd.f32 %v2602, %v2627
      %v2642 = vadd.f32 %v2603, %v2627
      %v2643 = vadd.f32 %v2604, %v2627
      %v2644 = vadd.f32 %v2605, %v2627
      %v2645 = vadd.f32 %v2606, %v2627
      %v2646 = vadd.f32 %v2607, %v2627
      %v2647 = vadd.f32 %v2608, %v2627
      %v2648 = vadd.f32 %v2609, %v2627
      %v2649 = vadd.f32 %v2610, %v2627
      %v2650 = vadd.f32 %v2611, %v2627
      %v2651 = vadd.f32 %v2612, %v2627
      %v2652 = vadd.f32 %v2613, %v2627
      %v2653 = vadd.f32 %v2614, %v2627
      %v2654 = vadd.f32 %v2615, %v2627
      %v2655 = vadd.f32 %v2616, %v2627
      %v2656 = vadd.f32 %v2617, %v2627
      %v2657 = vadd.f32 %v2618, %v2627
      %v2658 = vadd.f32 %v2619, %v2627
      %v2659 = vadd.f32 %v2620, %v2627
      %v2660 = vadd.f32 %v2621, %v2627
      %v2661 = vmax.f32 %v2629, 0.0
      %v2662 = vmax.f32 %v2630, 0.0
      %v2663 = vmax.f32 %v2631, 0.0
      %v2664 = vmax.f32 %v2632, 0.0
      %v2665 = vmax.f32 %v2633, 0.0
      %v2666 = vmax.f32 %v2634, 0.0
      %v2667 = vmax.f32 %v2635, 0.0
      %v2668 = vmax.f32 %v2636, 0.0
      %v2669 = vmax.f32 %v2637, 0.0
      %v2670 = vmax.f32 %v2638, 0.0
      %v2671 = vmax.f32 %v2639, 0.0
      %v2672 = vmax.f32 %v2640, 0.0
      %v2673 = vmax.f32 %v2641, 0.0
      %v2674 = vmax.f32 %v2642, 0.0
      %v2675 = vmax.f32 %v2643, 0.0
      %v2676 = vmax.f32 %v2644, 0.0
      %v2677 = vmax.f32 %v2645, 0.0
      %v2678 = vmax.f32 %v2646, 0.0
      %v2679 = vmax.f32 %v2647, 0.0
      %v2680 = vmax.f32 %v2648, 0.0
      %v2681 = vmax.f32 %v2649, 0.0
      %v2682 = vmax.f32 %v2650, 0.0
      %v2683 = vmax.f32 %v2651, 0.0
      %v2684 = vmax.f32 %v2652, 0.0
      %v2685 = vmax.f32 %v2653, 0.0
      %v2686 = vmax.f32 %v2654, 0.0
      %v2687 = vmax.f32 %v2655, 0.0
      %v2688 = vmax.f32 %v2656, 0.0
      %v2689 = vmax.f32 %v2657, 0.0
      %v2690 = vmax.f32 %v2658, 0.0
      %v2691 = vmax.f32 %v2659, 0.0
      %v2692 = vmax.f32 %v2660, 0.0
      %v2693 = vpack.c.bf16 %v2662, %v2661
      %v2694 = vpack.c.bf16 %v2664, %v2663
      %v2695 = vpack.c.bf16 %v2666, %v2665
      %v2696 = vpack.c.bf16 %v2668, %v2667
      %v2697 = vpack.c.bf16 %v2670, %v2669
      %v2698 = vpack.c.bf16 %v2672, %v2671
      %v2699 = vpack.c.bf16 %v2674, %v2673
      %v2700 = vpack.c.bf16 %v2676, %v2675
      %v2701 = vpack.c.bf16 %v2678, %v2677
      %v2702 = vpack.c.bf16 %v2680, %v2679
      %v2703 = vpack.c.bf16 %v2682, %v2681
      %v2704 = vpack.c.bf16 %v2684, %v2683
      %v2705 = vpack.c.bf16 %v2686, %v2685
      %v2706 = vpack.c.bf16 %v2688, %v2687
      %v2707 = vpack.c.bf16 %v2690, %v2689
      %v2708 = vpack.c.bf16 %v2692, %v2691
      %2709 = vst [vmem:[%s233 + $0x8] sm:$0xff] %v2693
      %2710 = vst [vmem:[%s233 + $0x20] sm:$0xff] %v2694
      %2711 = vst [vmem:[%s233 + $0x38] sm:$0xff] %v2695
      %2712 = vst [vmem:[%s233 + $0x50] sm:$0xff] %v2696
      %2713 = vst [vmem:[%s233 + $0x68] sm:$0xff] %v2697
      %2714 = vst [vmem:[%s233 + $0x80] sm:$0xff] %v2698
      %2715 = vst [vmem:[%s233 + $0x98] sm:$0xff] %v2699
      %2716 = vst [vmem:[%s233 + $0xb0] sm:$0xff] %v2700
      %2717 = vst [vmem:[%s233 + $0xc8] sm:$0xff] %v2701
      %2718 = vst [vmem:[%s233 + $0xe0] sm:$0xff] %v2702
      %2719 = vst [vmem:[%s233 + $0xf8] sm:$0xff] %v2703
      %2720 = vst [vmem:[%s233 + $0x110] sm:$0xff] %v2704
      %2721 = vst [vmem:[%s233 + $0x128] sm:$0xff] %v2705
      %2722 = vst [vmem:[%s233 + $0x140] sm:$0xff] %v2706
      %2723 = vst [vmem:[%s233 + $0x158] sm:$0xff] %v2707
      %2724 = vst [vmem:[%s233 + $0x170] sm:$0xff] %v2708
      %v2726 = vshrl.u32 %v2693, 16
      %v2728 = vrot.slane %v2726, 7
      %v2729 = vshll.u32 %v2693, 16
      %v2731 = vor.u32 %v2728, %v2729
      %v2733 = vshrl.u32 %v2694, 16
      %v2735 = vrot.slane %v2733, 7
      %v2736 = vshll.u32 %v2694, 16
      %v2738 = vor.u32 %v2735, %v2736
      %v2740 = vshrl.u32 %v2695, 16
      %v2742 = vrot.slane %v2740, 7
      %v2743 = vshll.u32 %v2695, 16
      %v2745 = vor.u32 %v2742, %v2743
      %v2747 = vshrl.u32 %v2696, 16
      %v2749 = vrot.slane %v2747, 7
      %v2750 = vshll.u32 %v2696, 16
      %v2752 = vor.u32 %v2749, %v2750
      %v2754 = vshrl.u32 %v2697, 16
      %v2756 = vrot.slane %v2754, 7
      %v2757 = vshll.u32 %v2697, 16
      %v2759 = vor.u32 %v2756, %v2757
      %v2761 = vshrl.u32 %v2698, 16
      %v2763 = vrot.slane %v2761, 7
      %v2764 = vshll.u32 %v2698, 16
      %v2766 = vor.u32 %v2763, %v2764
      %v2768 = vshrl.u32 %v2699, 16
      %v2770 = vrot.slane %v2768, 7
      %v2771 = vshll.u32 %v2699, 16
      %v2773 = vor.u32 %v2770, %v2771
      %v2775 = vshrl.u32 %v2700, 16
      %v2777 = vrot.slane %v2775, 7
      %v2778 = vshll.u32 %v2700, 16
      %v2780 = vor.u32 %v2777, %v2778
      %v2782 = vshrl.u32 %v2701, 16
      %v2784 = vrot.slane %v2782, 7
      %v2785 = vshll.u32 %v2701, 16
      %v2787 = vor.u32 %v2784, %v2785
      %v2789 = vshrl.u32 %v2702, 16
      %v2791 = vrot.slane %v2789, 7
      %v2792 = vshll.u32 %v2702, 16
      %v2794 = vor.u32 %v2791, %v2792
      %v2796 = vshrl.u32 %v2703, 16
      %v2798 = vrot.slane %v2796, 7
      %v2799 = vshll.u32 %v2703, 16
      %v2801 = vor.u32 %v2798, %v2799
      %v2803 = vshrl.u32 %v2704, 16
      %v2805 = vrot.slane %v2803, 7
      %v2806 = vshll.u32 %v2704, 16
      %v2808 = vor.u32 %v2805, %v2806
      %v2810 = vshrl.u32 %v2705, 16
      %v2812 = vrot.slane %v2810, 7
      %v2813 = vshll.u32 %v2705, 16
      %v2815 = vor.u32 %v2812, %v2813
      %v2817 = vshrl.u32 %v2706, 16
      %v2819 = vrot.slane %v2817, 7
      %v2820 = vshll.u32 %v2706, 16
      %v2822 = vor.u32 %v2819, %v2820
      %v2824 = vshrl.u32 %v2707, 16
      %v2826 = vrot.slane %v2824, 7
      %v2827 = vshll.u32 %v2707, 16
      %v2829 = vor.u32 %v2826, %v2827
      %v2831 = vshrl.u32 %v2708, 16
      %v2833 = vrot.slane %v2831, 7
      %v2834 = vshll.u32 %v2708, 16
      %v2836 = vor.u32 %v2833, %v2834
      %v2853 = vld [vmem:[%s233] sm:$0xff]
      %v2854 = vsel %vm530, %v2731, %v2853
      %2855 = vst [vmem:[%s233] sm:$0xff] %v2854
      %v2856 = vld [vmem:[%s233 + $0x18] sm:$0xff]
      %v2857 = vsel %vm530, %v2738, %v2856
      %2858 = vst [vmem:[%s233 + $0x18] sm:$0xff] %v2857
      %v2859 = vld [vmem:[%s233 + $0x30] sm:$0xff]
      %v2860 = vsel %vm530, %v2745, %v2859
      %2861 = vst [vmem:[%s233 + $0x30] sm:$0xff] %v2860
      %v2862 = vld [vmem:[%s233 + $0x48] sm:$0xff]
      %v2863 = vsel %vm530, %v2752, %v2862
      %2864 = vst [vmem:[%s233 + $0x48] sm:$0xff] %v2863
      %v2865 = vld [vmem:[%s233 + $0x60] sm:$0xff]
      %v2866 = vsel %vm530, %v2759, %v2865
      %2867 = vst [vmem:[%s233 + $0x60] sm:$0xff] %v2866
      %v2868 = vld [vmem:[%s233 + $0x78] sm:$0xff]
      %v2869 = vsel %vm530, %v2766, %v2868
      %2870 = vst [vmem:[%s233 + $0x78] sm:$0xff] %v2869
      %v2871 = vld [vmem:[%s233 + $0x90] sm:$0xff]
      %v2872 = vsel %vm530, %v2773, %v2871
      %2873 = vst [vmem:[%s233 + $0x90] sm:$0xff] %v2872
      %v2874 = vld [vmem:[%s233 + $0xa8] sm:$0xff]
      %v2875 = vsel %vm530, %v2780, %v2874
      %2876 = vst [vmem:[%s233 + $0xa8] sm:$0xff] %v2875
      %v2877 = vld [vmem:[%s233 + $0xc0] sm:$0xff]
      %v2878 = vsel %vm530, %v2787, %v2877
      %2879 = vst [vmem:[%s233 + $0xc0] sm:$0xff] %v2878
      %v2880 = vld [vmem:[%s233 + $0xd8] sm:$0xff]
      %v2881 = vsel %vm530, %v2794, %v2880
      %2882 = vst [vmem:[%s233 + $0xd8] sm:$0xff] %v2881
      %v2883 = vld [vmem:[%s233 + $0xf0] sm:$0xff]
      %v2884 = vsel %vm530, %v2801, %v2883
      %2885 = vst [vmem:[%s233 + $0xf0] sm:$0xff] %v2884
      %v2886 = vld [vmem:[%s233 + $0x108] sm:$0xff]
      %v2887 = vsel %vm530, %v2808, %v2886
      %2888 = vst [vmem:[%s233 + $0x108] sm:$0xff] %v2887
      %v2889 = vld [vmem:[%s233 + $0x120] sm:$0xff]
      %v2890 = vsel %vm530, %v2815, %v2889
      %2891 = vst [vmem:[%s233 + $0x120] sm:$0xff] %v2890
      %v2892 = vld [vmem:[%s233 + $0x138] sm:$0xff]
      %v2893 = vsel %vm530, %v2822, %v2892
      %2894 = vst [vmem:[%s233 + $0x138] sm:$0xff] %v2893
      %v2895 = vld [vmem:[%s233 + $0x150] sm:$0xff]
      %v2896 = vsel %vm530, %v2829, %v2895
      %2897 = vst [vmem:[%s233 + $0x150] sm:$0xff] %v2896
      %v2898 = vld [vmem:[%s233 + $0x168] sm:$0xff]
      %v2899 = vsel %vm530, %v2836, %v2898
      %2900 = vst [vmem:[%s233 + $0x168] sm:$0xff] %v2899
      %v2901 = vrot.slane %v2729, 1
      %v2902 = vor.u32 %v2726, %v2901
      %v2903 = vrot.slane %v2736, 1
      %v2904 = vor.u32 %v2733, %v2903
      %v2905 = vrot.slane %v2743, 1
      %v2906 = vor.u32 %v2740, %v2905
      %v2907 = vrot.slane %v2750, 1
      %v2908 = vor.u32 %v2747, %v2907
      %v2909 = vrot.slane %v2757, 1
      %v2910 = vor.u32 %v2754, %v2909
      %v2911 = vrot.slane %v2764, 1
      %v2912 = vor.u32 %v2761, %v2911
      %v2913 = vrot.slane %v2771, 1
      %v2914 = vor.u32 %v2768, %v2913
      %v2915 = vrot.slane %v2778, 1
      %v2916 = vor.u32 %v2775, %v2915
      %v2917 = vrot.slane %v2785, 1
      %v2918 = vor.u32 %v2782, %v2917
      %v2919 = vrot.slane %v2792, 1
      %v2920 = vor.u32 %v2789, %v2919
      %v2921 = vrot.slane %v2799, 1
      %v2922 = vor.u32 %v2796, %v2921
      %v2923 = vrot.slane %v2806, 1
      %v2924 = vor.u32 %v2803, %v2923
      %v2925 = vrot.slane %v2813, 1
      %v2926 = vor.u32 %v2810, %v2925
      %v2927 = vrot.slane %v2820, 1
      %v2928 = vor.u32 %v2817, %v2927
      %v2929 = vrot.slane %v2827, 1
      %v2930 = vor.u32 %v2824, %v2929
      %v2931 = vrot.slane %v2834, 1
      %v2932 = vor.u32 %v2831, %v2931
      %v2949 = vld [vmem:[%s233 + $0x10] sm:$0xff]
      %v2950 = vsel %vm628, %v2902, %v2949
      %2951 = vst [vmem:[%s233 + $0x10] sm:$0xff] %v2950
      %v2952 = vld [vmem:[%s233 + $0x28] sm:$0xff]
      %v2953 = vsel %vm628, %v2904, %v2952
      %2954 = vst [vmem:[%s233 + $0x28] sm:$0xff] %v2953
      %v2955 = vld [vmem:[%s233 + $0x40] sm:$0xff]
      %v2956 = vsel %vm628, %v2906, %v2955
      %2957 = vst [vmem:[%s233 + $0x40] sm:$0xff] %v2956
      %v2958 = vld [vmem:[%s233 + $0x58] sm:$0xff]
      %v2959 = vsel %vm628, %v2908, %v2958
      %2960 = vst [vmem:[%s233 + $0x58] sm:$0xff] %v2959
      %v2961 = vld [vmem:[%s233 + $0x70] sm:$0xff]
      %v2962 = vsel %vm628, %v2910, %v2961
      %2963 = vst [vmem:[%s233 + $0x70] sm:$0xff] %v2962
      %v2964 = vld [vmem:[%s233 + $0x88] sm:$0xff]
      %v2965 = vsel %vm628, %v2912, %v2964
      %2966 = vst [vmem:[%s233 + $0x88] sm:$0xff] %v2965
      %v2967 = vld [vmem:[%s233 + $0xa0] sm:$0xff]
      %v2968 = vsel %vm628, %v2914, %v2967
      %2969 = vst [vmem:[%s233 + $0xa0] sm:$0xff] %v2968
      %v2970 = vld [vmem:[%s233 + $0xb8] sm:$0xff]
      %v2971 = vsel %vm628, %v2916, %v2970
      %2972 = vst [vmem:[%s233 + $0xb8] sm:$0xff] %v2971
      %v2973 = vld [vmem:[%s233 + $0xd0] sm:$0xff]
      %v2974 = vsel %vm628, %v2918, %v2973
      %2975 = vst [vmem:[%s233 + $0xd0] sm:$0xff] %v2974
      %v2976 = vld [vmem:[%s233 + $0xe8] sm:$0xff]
      %v2977 = vsel %vm628, %v2920, %v2976
      %2978 = vst [vmem:[%s233 + $0xe8] sm:$0xff] %v2977
      %v2979 = vld [vmem:[%s233 + $0x100] sm:$0xff]
      %v2980 = vsel %vm628, %v2922, %v2979
      %2981 = vst [vmem:[%s233 + $0x100] sm:$0xff] %v2980
      %v2982 = vld [vmem:[%s233 + $0x118] sm:$0xff]
      %v2983 = vsel %vm628, %v2924, %v2982
      %2984 = vst [vmem:[%s233 + $0x118] sm:$0xff] %v2983
      %v2985 = vld [vmem:[%s233 + $0x130] sm:$0xff]
      %v2986 = vsel %vm628, %v2926, %v2985
      %2987 = vst [vmem:[%s233 + $0x130] sm:$0xff] %v2986
      %v2988 = vld [vmem:[%s233 + $0x148] sm:$0xff]
      %v2989 = vsel %vm628, %v2928, %v2988
      %2990 = vst [vmem:[%s233 + $0x148] sm:$0xff] %v2989
      %v2991 = vld [vmem:[%s233 + $0x160] sm:$0xff]
      %v2992 = vsel %vm628, %v2930, %v2991
      %2993 = vst [vmem:[%s233 + $0x160] sm:$0xff] %v2992
      %v2994 = vld [vmem:[%s233 + $0x178] sm:$0xff]
      %v2995 = vsel %vm628, %v2932, %v2994
      %2996 = vst [vmem:[%s233 + $0x178] sm:$0xff] %v2995
      %v2997 = vld [vmem:[#allocation2] sm:$0xff]
      %v2998 = vld [vmem:[#allocation2 + $0x8] sm:$0xff]
      %v2999 = vld [vmem:[#allocation2 + $0x10] sm:$0xff]
      %v3000 = vld [vmem:[#allocation2 + $0x18] sm:$0xff]
      %v3001 = vld [vmem:[#allocation2 + $0x20] sm:$0xff]
      %v3002 = vld [vmem:[#allocation2 + $0x28] sm:$0xff]
      %v3003 = vld [vmem:[#allocation2 + $0x30] sm:$0xff]
      %v3004 = vld [vmem:[#allocation2 + $0x38] sm:$0xff]
      %v3005 = vld [vmem:[#allocation2 + $0x40] sm:$0xff]
      %v3006 = vld [vmem:[#allocation2 + $0x48] sm:$0xff]
      %v3007 = vld [vmem:[#allocation2 + $0x50] sm:$0xff]
      %v3008 = vld [vmem:[#allocation2 + $0x58] sm:$0xff]
      %v3009 = vld [vmem:[#allocation2 + $0x60] sm:$0xff]
      %v3010 = vld [vmem:[#allocation2 + $0x68] sm:$0xff]
      %v3011 = vld [vmem:[#allocation2 + $0x70] sm:$0xff]
      %v3012 = vld [vmem:[#allocation2 + $0x78] sm:$0xff]
      %v3013 = vld [vmem:[#allocation2 + $0x80] sm:$0xff]
      %v3014 = vld [vmem:[#allocation2 + $0x88] sm:$0xff]
      %v3015 = vld [vmem:[#allocation2 + $0x90] sm:$0xff]
      %v3016 = vld [vmem:[#allocation2 + $0x98] sm:$0xff]
      %v3017 = vld [vmem:[#allocation2 + $0xa0] sm:$0xff]
      %v3018 = vld [vmem:[#allocation2 + $0xa8] sm:$0xff]
      %v3019 = vld [vmem:[#allocation2 + $0xb0] sm:$0xff]
      %v3020 = vld [vmem:[#allocation2 + $0xb8] sm:$0xff]
      %v3021 = vld [vmem:[#allocation2 + $0xc0] sm:$0xff]
      %v3022 = vld [vmem:[#allocation2 + $0xc8] sm:$0xff]
      %v3023 = vld [vmem:[#allocation2 + $0xd0] sm:$0xff]
      %v3024 = vld [vmem:[#allocation2 + $0xd8] sm:$0xff]
      %v3025 = vld [vmem:[#allocation2 + $0xe0] sm:$0xff]
      %v3026 = vld [vmem:[#allocation2 + $0xe8] sm:$0xff]
      %v3027 = vld [vmem:[#allocation2 + $0xf0] sm:$0xff]
      %v3028 = vld [vmem:[#allocation2 + $0xf8] sm:$0xff]
      %v3029 = vld [vmem:[#allocation2 + $0x100] sm:$0xff]
      %v3030 = vld [vmem:[#allocation2 + $0x108] sm:$0xff]
      %v3031 = vld [vmem:[#allocation2 + $0x110] sm:$0xff]
      %v3032 = vld [vmem:[#allocation2 + $0x118] sm:$0xff]
      %v3033 = vld [vmem:[#allocation2 + $0x120] sm:$0xff]
      %v3034 = vld [vmem:[#allocation2 + $0x128] sm:$0xff]
      %v3035 = vld [vmem:[#allocation2 + $0x130] sm:$0xff]
      %v3036 = vld [vmem:[#allocation2 + $0x138] sm:$0xff]
      %v3037 = vld [vmem:[#allocation2 + $0x140] sm:$0xff]
      %v3038 = vld [vmem:[#allocation2 + $0x148] sm:$0xff]
      %v3039 = vld [vmem:[#allocation2 + $0x150] sm:$0xff]
      %v3040 = vld [vmem:[#allocation2 + $0x158] sm:$0xff]
      %v3041 = vld [vmem:[#allocation2 + $0x160] sm:$0xff]
      %v3042 = vld [vmem:[#allocation2 + $0x168] sm:$0xff]
      %v3043 = vld [vmem:[#allocation2 + $0x170] sm:$0xff]
      %v3044 = vld [vmem:[#allocation2 + $0x178] sm:$0xff]
      %v3045 = vld [vmem:[%s3] sm:$0xf]
      %v3046 = vld [vmem:[%s3 + $0x4] sm:$0xf]
      %v3047 = vld [vmem:[%s3 + $0x8] sm:$0xf]
      %v3048 = vld [vmem:[%s3 + $0xc] sm:$0xf]
      %v3049 = vld [vmem:[%s3 + $0x10] sm:$0xf]
      %v3050 = vld [vmem:[%s3 + $0x14] sm:$0xf]
      %v3051 = vld [vmem:[%s3 + $0x18] sm:$0xf]
      %v3052 = vld [vmem:[%s3 + $0x1c] sm:$0xf]
      %v3053 = vld [vmem:[%s3 + $0x20] sm:$0xf]
      %v3054 = vld [vmem:[%s3 + $0x24] sm:$0xf]
      %v3055 = vld [vmem:[%s3 + $0x28] sm:$0xf]
      %v3056 = vld [vmem:[%s3 + $0x2c] sm:$0xf]
      %v3057 = vld [vmem:[%s3 + $0x30] sm:$0xf]
      %v3058 = vld [vmem:[%s3 + $0x34] sm:$0xf]
      %v3059 = vld [vmem:[%s3 + $0x38] sm:$0xf]
      %v3060 = vld [vmem:[%s3 + $0x3c] sm:$0xf]
      %v3061 = vld [vmem:[%s3 + $0x40] sm:$0xf]
      %v3062 = vld [vmem:[%s3 + $0x44] sm:$0xf]
      %v3063 = vld [vmem:[%s3 + $0x48] sm:$0xf]
      %v3064 = vld [vmem:[%s3 + $0x4c] sm:$0xf]
      %v3065 = vld [vmem:[%s3 + $0x50] sm:$0xf]
      %v3066 = vld [vmem:[%s3 + $0x54] sm:$0xf]
      %v3067 = vld [vmem:[%s3 + $0x58] sm:$0xf]
      %v3068 = vld [vmem:[%s3 + $0x5c] sm:$0xf]
      %v3069 = vld [vmem:[%s3 + $0x60] sm:$0xf]
      %v3070 = vld [vmem:[%s3 + $0x64] sm:$0xf]
      %v3071 = vld [vmem:[%s3 + $0x68] sm:$0xf]
      %v3072 = vld [vmem:[%s3 + $0x6c] sm:$0xf]
      %v3073 = vld [vmem:[%s3 + $0x70] sm:$0xf]
      %v3074 = vld [vmem:[%s3 + $0x74] sm:$0xf]
      %v3075 = vld [vmem:[%s3 + $0x78] sm:$0xf]
      %v3076 = vld [vmem:[%s3 + $0x7c] sm:$0xf]
      %v3077 = vld [vmem:[%s3 + $0x80] sm:$0xf]
      %v3078 = vld [vmem:[%s3 + $0x84] sm:$0xf]
      %v3079 = vld [vmem:[%s3 + $0x88] sm:$0xf]
      %v3080 = vld [vmem:[%s3 + $0x8c] sm:$0xf]
      %v3081 = vld [vmem:[%s3 + $0x90] sm:$0xf]
      %v3082 = vld [vmem:[%s3 + $0x94] sm:$0xf]
      %v3083 = vld [vmem:[%s3 + $0x98] sm:$0xf]
      %v3084 = vld [vmem:[%s3 + $0x9c] sm:$0xf]
      %v3085 = vld [vmem:[%s3 + $0xa0] sm:$0xf]
      %v3086 = vld [vmem:[%s3 + $0xa4] sm:$0xf]
      %v3087 = vld [vmem:[%s3 + $0xa8] sm:$0xf]
      %v3088 = vld [vmem:[%s3 + $0xac] sm:$0xf]
      %v3089 = vld [vmem:[%s3 + $0xb0] sm:$0xf]
      %v3090 = vld [vmem:[%s3 + $0xb4] sm:$0xf]
      %v3091 = vld [vmem:[%s3 + $0xb8] sm:$0xf]
      %v3092 = vld [vmem:[%s3 + $0xbc] sm:$0xf]
      %v3141 = vunpack.c.l.b16 %v3045
      %v3142 = vunpack.c.l.b16 %v3046
      %v3143 = vunpack.c.l.b16 %v3047
      %v3144 = vunpack.c.l.b16 %v3048
      %v3145 = vunpack.c.l.b16 %v3049
      %v3146 = vunpack.c.l.b16 %v3050
      %v3147 = vunpack.c.l.b16 %v3051
      %v3148 = vunpack.c.l.b16 %v3052
      %v3149 = vunpack.c.l.b16 %v3053
      %v3150 = vunpack.c.l.b16 %v3054
      %v3151 = vunpack.c.l.b16 %v3055
      %v3152 = vunpack.c.l.b16 %v3056
      %v3153 = vunpack.c.l.b16 %v3057
      %v3154 = vunpack.c.l.b16 %v3058
      %v3155 = vunpack.c.l.b16 %v3059
      %v3156 = vunpack.c.l.b16 %v3060
      %v3157 = vunpack.c.l.b16 %v3061
      %v3158 = vunpack.c.l.b16 %v3062
      %v3159 = vunpack.c.l.b16 %v3063
      %v3160 = vunpack.c.l.b16 %v3064
      %v3161 = vunpack.c.l.b16 %v3065
      %v3162 = vunpack.c.l.b16 %v3066
      %v3163 = vunpack.c.l.b16 %v3067
      %v3164 = vunpack.c.l.b16 %v3068
      %v3165 = vunpack.c.l.b16 %v3069
      %v3166 = vunpack.c.l.b16 %v3070
      %v3167 = vunpack.c.l.b16 %v3071
      %v3168 = vunpack.c.l.b16 %v3072
      %v3169 = vunpack.c.l.b16 %v3073
      %v3170 = vunpack.c.l.b16 %v3074
      %v3171 = vunpack.c.l.b16 %v3075
      %v3172 = vunpack.c.l.b16 %v3076
      %v3173 = vunpack.c.l.b16 %v3077
      %v3174 = vunpack.c.l.b16 %v3078
      %v3175 = vunpack.c.l.b16 %v3079
      %v3176 = vunpack.c.l.b16 %v3080
      %v3177 = vunpack.c.l.b16 %v3081
      %v3178 = vunpack.c.l.b16 %v3082
      %v3179 = vunpack.c.l.b16 %v3083
      %v3180 = vunpack.c.l.b16 %v3084
      %v3181 = vunpack.c.l.b16 %v3085
      %v3182 = vunpack.c.l.b16 %v3086
      %v3183 = vunpack.c.l.b16 %v3087
      %v3184 = vunpack.c.l.b16 %v3088
      %v3185 = vunpack.c.l.b16 %v3089
      %v3186 = vunpack.c.l.b16 %v3090
      %v3187 = vunpack.c.l.b16 %v3091
      %v3188 = vunpack.c.l.b16 %v3092
      %v3189 = vpack.c.b16 %v3142, %v3141
      %v3190 = vpack.c.b16 %v3144, %v3143
      %v3191 = vpack.c.b16 %v3146, %v3145
      %v3192 = vpack.c.b16 %v3148, %v3147
      %v3193 = vpack.c.b16 %v3150, %v3149
      %v3194 = vpack.c.b16 %v3152, %v3151
      %v3195 = vpack.c.b16 %v3154, %v3153
      %v3196 = vpack.c.b16 %v3156, %v3155
      %v3197 = vpack.c.b16 %v3158, %v3157
      %v3198 = vpack.c.b16 %v3160, %v3159
      %v3199 = vpack.c.b16 %v3162, %v3161
      %v3200 = vpack.c.b16 %v3164, %v3163
      %v3201 = vpack.c.b16 %v3166, %v3165
      %v3202 = vpack.c.b16 %v3168, %v3167
      %v3203 = vpack.c.b16 %v3170, %v3169
      %v3204 = vpack.c.b16 %v3172, %v3171
      %v3205 = vpack.c.b16 %v3174, %v3173
      %v3206 = vpack.c.b16 %v3176, %v3175
      %v3207 = vpack.c.b16 %v3178, %v3177
      %v3208 = vpack.c.b16 %v3180, %v3179
      %v3209 = vpack.c.b16 %v3182, %v3181
      %v3210 = vpack.c.b16 %v3184, %v3183
      %v3211 = vpack.c.b16 %v3186, %v3185
      %v3212 = vpack.c.b16 %v3188, %v3187
      %3237 = vmatprep.subr.bf16.mxu0 0
      %3238 = vmatpush1.bf16.msra.mxu0 %v3189
      %3239 = vmatprep.subr.bf16.mxu0 0
      %3240 = vmatpush1.bf16.msra.mxu0 %v3190
      %3241 = vmatprep.subr.bf16.mxu0 0
      %3242 = vmatpush1.bf16.msra.mxu0 %v3191
      %3243 = vmatprep.subr.bf16.mxu0 0
      %3244 = vmatpush1.bf16.msra.mxu0 %v3192
      %3245 = vmatprep.subr.bf16.mxu0 0
      %3246 = vmatpush1.bf16.msra.mxu0 %v3193
      %3247 = vmatprep.subr.bf16.mxu0 0
      %3248 = vmatpush1.bf16.msra.mxu0 %v3194
      %3249 = vmatprep.subr.bf16.mxu0 0
      %3250 = vmatpush1.bf16.msra.mxu0 %v3195
      %3251 = vmatprep.subr.bf16.mxu0 0
      %3252 = vmatpush1.bf16.msra.mxu0 %v3196
      %3253 = vmatprep.subr.bf16.mxu0 0
      %3254 = vmatpush1.bf16.msra.mxu0 %v3197
      %3255 = vmatprep.subr.bf16.mxu0 0
      %3256 = vmatpush1.bf16.msra.mxu0 %v3198
      %3257 = vmatprep.subr.bf16.mxu0 0
      %3258 = vmatpush1.bf16.msra.mxu0 %v3199
      %3259 = vmatprep.subr.bf16.mxu0 0
      %3260 = vmatpush1.bf16.msra.mxu0 %v3200
      %3261 = vmatprep.subr.bf16.mxu0 0
      %3262 = vmatpush1.bf16.msra.mxu0 %v3201
      %3263 = vmatprep.subr.bf16.mxu0 0
      %3264 = vmatpush1.bf16.msra.mxu0 %v3202
      %3265 = vmatprep.subr.bf16.mxu0 0
      %3266 = vmatpush1.bf16.msra.mxu0 %v3203
      %3267 = vmatprep.subr.bf16.mxu0 0
      %3268 = vmatpush1.bf16.msra.mxu0 %v3204
      %3269 = vmatprep.mubr.bf16.mxu0 %v2998
      %3270 = vmatmul.mubr.bf16.gmra.mrb[0].mxu0 %v2997
      %v3271 = vpop.f32.mrb[0].mxu0
      %v3272 = vadd.f32 0.0, %v3271
      %v3273 = vpop.f32.mrb[0].mxu0
      %v3274 = vpop.f32.mrb[0].mxu0
      %v3275 = vadd.f32 0.0, %v3274
      %v3276 = vpop.f32.mrb[0].mxu0
      %3277 = vmatprep.mubr.bf16.mxu0 %v3001
      %3278 = vmatmul.mubr.bf16.gmra.mrb[0].mxu0 %v3000
      %v3279 = vpop.f32.mrb[0].mxu0
      %v3280 = vadd.f32 0.0, %v3279
      %v3281 = vpop.f32.mrb[0].mxu0
      %v3282 = vpop.f32.mrb[0].mxu0
      %v3283 = vadd.f32 0.0, %v3282
      %v3284 = vpop.f32.mrb[0].mxu0
      %3285 = vmatprep.mubr.bf16.mxu0 %v3004
      %3286 = vmatmul.mubr.bf16.gmra.mrb[0].mxu0 %v3003
      %v3287 = vpop.f32.mrb[0].mxu0
      %v3288 = vadd.f32 0.0, %v3287
      %v3289 = vpop.f32.mrb[0].mxu0
      %v3290 = vpop.f32.mrb[0].mxu0
      %v3291 = vadd.f32 0.0, %v3290
      %v3292 = vpop.f32.mrb[0].mxu0
      %3293 = vmatprep.mubr.bf16.mxu0 %v3007
      %3294 = vmatmul.mubr.bf16.gmra.mrb[0].mxu0 %v3006
      %v3295 = vpop.f32.mrb[0].mxu0
      %v3296 = vadd.f32 0.0, %v3295
      %v3297 = vpop.f32.mrb[0].mxu0
      %v3298 = vpop.f32.mrb[0].mxu0
      %v3299 = vadd.f32 0.0, %v3298
      %v3300 = vpop.f32.mrb[0].mxu0
      %3301 = vmatprep.mubr.bf16.mxu0 %v3010
      %3302 = vmatmul.mubr.bf16.gmra.mrb[0].mxu0 %v3009
      %v3303 = vpop.f32.mrb[0].mxu0
      %v3304 = vadd.f32 0.0, %v3303
      %v3305 = vpop.f32.mrb[0].mxu0
      %v3306 = vpop.f32.mrb[0].mxu0
      %v3307 = vadd.f32 0.0, %v3306
      %v3308 = vpop.f32.mrb[0].mxu0
      %3309 = vmatprep.mubr.bf16.mxu0 %v3013
      %3310 = vmatmul.mubr.bf16.gmra.mrb[0].mxu0 %v3012
      %v3311 = vpop.f32.mrb[0].mxu0
      %v3312 = vadd.f32 0.0, %v3311
      %v3313 = vpop.f32.mrb[0].mxu0
      %v3314 = vpop.f32.mrb[0].mxu0
      %v3315 = vadd.f32 0.0, %v3314
      %v3316 = vpop.f32.mrb[0].mxu0
      %3317 = vmatprep.mubr.bf16.mxu0 %v3016
      %3318 = vmatmul.mubr.bf16.gmra.mrb[0].mxu0 %v3015
      %v3319 = vpop.f32.mrb[0].mxu0
      %v3320 = vadd.f32 0.0, %v3319
      %v3321 = vpop.f32.mrb[0].mxu0
      %v3322 = vpop.f32.mrb[0].mxu0
      %v3323 = vadd.f32 0.0, %v3322
      %v3324 = vpop.f32.mrb[0].mxu0
      %3325 = vmatprep.mubr.bf16.mxu0 %v3019
      %3326 = vmatmul.mubr.bf16.gmra.mrb[0].mxu0 %v3018
      %v3327 = vpop.f32.mrb[0].mxu0
      %v3328 = vadd.f32 0.0, %v3327
      %v3329 = vpop.f32.mrb[0].mxu0
      %v3330 = vpop.f32.mrb[0].mxu0
      %v3331 = vadd.f32 0.0, %v3330
      %v3332 = vpop.f32.mrb[0].mxu0
      %3333 = vmatprep.mubr.bf16.mxu0 %v3022
      %3334 = vmatmul.mubr.bf16.gmra.mrb[0].mxu0 %v3021
      %v3335 = vpop.f32.mrb[0].mxu0
      %v3336 = vadd.f32 0.0, %v3335
      %v3337 = vpop.f32.mrb[0].mxu0
      %v3338 = vpop.f32.mrb[0].mxu0
      %v3339 = vadd.f32 0.0, %v3338
      %v3340 = vpop.f32.mrb[0].mxu0
      %3341 = vmatprep.mubr.bf16.mxu0 %v3025
      %3342 = vmatmul.mubr.bf16.gmra.mrb[0].mxu0 %v3024
      %v3343 = vpop.f32.mrb[0].mxu0
      %v3344 = vadd.f32 0.0, %v3343
      %v3345 = vpop.f32.mrb[0].mxu0
      %v3346 = vpop.f32.mrb[0].mxu0
      %v3347 = vadd.f32 0.0, %v3346
      %v3348 = vpop.f32.mrb[0].mxu0
      %3349 = vmatprep.mubr.bf16.mxu0 %v3028
      %3350 = vmatmul.mubr.bf16.gmra.mrb[0].mxu0 %v3027
      %v3351 = vpop.f32.mrb[0].mxu0
      %v3352 = vadd.f32 0.0, %v3351
      %v3353 = vpop.f32.mrb[0].mxu0
      %v3354 = vpop.f32.mrb[0].mxu0
      %v3355 = vadd.f32 0.0, %v3354
      %v3356 = vpop.f32.mrb[0].mxu0
      %3357 = vmatprep.mubr.bf16.mxu0 %v3031
      %3358 = vmatmul.mubr.bf16.gmra.mrb[0].mxu0 %v3030
      %v3359 = vpop.f32.mrb[0].mxu0
      %v3360 = vadd.f32 0.0, %v3359
      %v3361 = vpop.f32.mrb[0].mxu0
      %v3362 = vpop.f32.mrb[0].mxu0
      %v3363 = vadd.f32 0.0, %v3362
      %v3364 = vpop.f32.mrb[0].mxu0
      %3365 = vmatprep.mubr.bf16.mxu0 %v3034
      %3366 = vmatmul.mubr.bf16.gmra.mrb[0].mxu0 %v3033
      %v3367 = vpop.f32.mrb[0].mxu0
      %v3368 = vadd.f32 0.0, %v3367
      %v3369 = vpop.f32.mrb[0].mxu0
      %v3370 = vpop.f32.mrb[0].mxu0
      %v3371 = vadd.f32 0.0, %v3370
      %v3372 = vpop.f32.mrb[0].mxu0
      %3373 = vmatprep.mubr.bf16.mxu0 %v3037
      %3374 = vmatmul.mubr.bf16.gmra.mrb[0].mxu0 %v3036
      %v3375 = vpop.f32.mrb[0].mxu0
      %v3376 = vadd.f32 0.0, %v3375
      %v3377 = vpop.f32.mrb[0].mxu0
      %v3378 = vpop.f32.mrb[0].mxu0
      %v3379 = vadd.f32 0.0, %v3378
      %v3380 = vpop.f32.mrb[0].mxu0
      %3381 = vmatprep.mubr.bf16.mxu0 %v3040
      %3382 = vmatmul.mubr.bf16.gmra.mrb[0].mxu0 %v3039
      %v3383 = vpop.f32.mrb[0].mxu0
      %v3384 = vadd.f32 0.0, %v3383
      %v3385 = vpop.f32.mrb[0].mxu0
      %v3386 = vpop.f32.mrb[0].mxu0
      %v3387 = vadd.f32 0.0, %v3386
      %v3388 = vpop.f32.mrb[0].mxu0
      %3389 = vmatprep.mubr.bf16.mxu0 %v3043
      %3390 = vmatmul.mubr.bf16.gmra.mrb[0].mxu0 %v3042
      %v3391 = vpop.f32.mrb[0].mxu0
      %v3392 = vadd.f32 0.0, %v3391
      %v3393 = vpop.f32.mrb[0].mxu0
      %v3394 = vpop.f32.mrb[0].mxu0
      %v3395 = vadd.f32 0.0, %v3394
      %v3396 = vpop.f32.mrb[0].mxu0
      %3397 = vdwg.mxu0
      %3398 = vmatprep.subr.bf16.mxu0 0
      %3399 = vmatpush1.bf16.msra.mxu0 %v3205
      %3400 = vmatprep.subr.bf16.mxu0 0
      %3401 = vmatpush1.bf16.msra.mxu0 %v3206
      %3402 = vmatprep.subr.bf16.mxu0 0
      %3403 = vmatpush1.bf16.msra.mxu0 %v3207
      %3404 = vmatprep.subr.bf16.mxu0 0
      %3405 = vmatpush1.bf16.msra.mxu0 %v3208
      %3406 = vmatprep.subr.bf16.mxu0 0
      %3407 = vmatpush1.bf16.msra.mxu0 %v3209
      %3408 = vmatprep.subr.bf16.mxu0 0
      %3409 = vmatpush1.bf16.msra.mxu0 %v3210
      %3410 = vmatprep.subr.bf16.mxu0 0
      %3411 = vmatpush1.bf16.msra.mxu0 %v3211
      %3412 = vmatprep.subr.bf16.mxu0 0
      %3413 = vmatpush1.bf16.msra.mxu0 %v3212
      %3414 = vmatprep.subr.bf16.mxu0 0
      %3415 = vmatpush1.bf16.msra.mxu0 0
      %3416 = vmatprep.subr.bf16.mxu0 0
      %3417 = vmatpush1.bf16.msra.mxu0 0
      %3418 = vmatprep.subr.bf16.mxu0 0
      %3419 = vmatpush1.bf16.msra.mxu0 0
      %3420 = vmatprep.subr.bf16.mxu0 0
      %3421 = vmatpush1.bf16.msra.mxu0 0
      %3422 = vmatprep.subr.bf16.mxu0 0
      %3423 = vmatpush1.bf16.msra.mxu0 0
      %3424 = vmatprep.subr.bf16.mxu0 0
      %3425 = vmatpush1.bf16.msra.mxu0 0
      %3426 = vmatprep.subr.bf16.mxu0 0
      %3427 = vmatpush1.bf16.msra.mxu0 0
      %3428 = vmatprep.subr.bf16.mxu0 0
      %3429 = vmatpush1.bf16.msra.mxu0 0
      %3430 = vmatprep.mubr.bf16.mxu0 0
      %3431 = vmatmul.mubr.bf16.gmra.mrb[0].mxu0 %v2999
      %v3432 = vpop.f32.mrb[0].mxu0
      %v3433 = vadd.f32 %v3272, %v3432
      %v3434 = vpop.f32.mrb[0].mxu0
      %v3435 = vpop.f32.mrb[0].mxu0
      %v3436 = vadd.f32 %v3275, %v3435
      %v3437 = vpop.f32.mrb[0].mxu0
      %3438 = vmatprep.mubr.bf16.mxu0 0
      %3439 = vmatmul.mubr.bf16.gmra.mrb[0].mxu0 %v3002
      %v3440 = vpop.f32.mrb[0].mxu0
      %v3441 = vadd.f32 %v3280, %v3440
      %v3442 = vpop.f32.mrb[0].mxu0
      %v3443 = vpop.f32.mrb[0].mxu0
      %v3444 = vadd.f32 %v3283, %v3443
      %v3445 = vpop.f32.mrb[0].mxu0
      %3446 = vmatprep.mubr.bf16.mxu0 0
      %3447 = vmatmul.mubr.bf16.gmra.mrb[0].mxu0 %v3005
      %v3448 = vpop.f32.mrb[0].mxu0
      %v3449 = vadd.f32 %v3288, %v3448
      %v3450 = vpop.f32.mrb[0].mxu0
      %v3451 = vpop.f32.mrb[0].mxu0
      %v3452 = vadd.f32 %v3291, %v3451
      %v3453 = vpop.f32.mrb[0].mxu0
      %3454 = vmatprep.mubr.bf16.mxu0 0
      %3455 = vmatmul.mubr.bf16.gmra.mrb[0].mxu0 %v3008
      %v3456 = vpop.f32.mrb[0].mxu0
      %v3457 = vadd.f32 %v3296, %v3456
      %v3458 = vpop.f32.mrb[0].mxu0
      %v3459 = vpop.f32.mrb[0].mxu0
      %v3460 = vadd.f32 %v3299, %v3459
      %v3461 = vpop.f32.mrb[0].mxu0
      %3462 = vmatprep.mubr.bf16.mxu0 0
      %3463 = vmatmul.mubr.bf16.gmra.mrb[0].mxu0 %v3011
      %v3464 = vpop.f32.mrb[0].mxu0
      %v3465 = vadd.f32 %v3304, %v3464
      %v3466 = vpop.f32.mrb[0].mxu0
      %v3467 = vpop.f32.mrb[0].mxu0
      %v3468 = vadd.f32 %v3307, %v3467
      %v3469 = vpop.f32.mrb[0].mxu0
      %3470 = vmatprep.mubr.bf16.mxu0 0
      %3471 = vmatmul.mubr.bf16.gmra.mrb[0].mxu0 %v3014
      %v3472 = vpop.f32.mrb[0].mxu0
      %v3473 = vadd.f32 %v3312, %v3472
      %v3474 = vpop.f32.mrb[0].mxu0
      %v3475 = vpop.f32.mrb[0].mxu0
      %v3476 = vadd.f32 %v3315, %v3475
      %v3477 = vpop.f32.mrb[0].mxu0
      %3478 = vmatprep.mubr.bf16.mxu0 0
      %3479 = vmatmul.mubr.bf16.gmra.mrb[0].mxu0 %v3017
      %v3480 = vpop.f32.mrb[0].mxu0
      %v3481 = vadd.f32 %v3320, %v3480
      %v3482 = vpop.f32.mrb[0].mxu0
      %v3483 = vpop.f32.mrb[0].mxu0
      %v3484 = vadd.f32 %v3323, %v3483
      %v3485 = vpop.f32.mrb[0].mxu0
      %3486 = vmatprep.mubr.bf16.mxu0 0
      %3487 = vmatmul.mubr.bf16.gmra.mrb[0].mxu0 %v3020
      %v3488 = vpop.f32.mrb[0].mxu0
      %v3489 = vadd.f32 %v3328, %v3488
      %v3490 = vpop.f32.mrb[0].mxu0
      %v3491 = vpop.f32.mrb[0].mxu0
      %v3492 = vadd.f32 %v3331, %v3491
      %v3493 = vpop.f32.mrb[0].mxu0
      %3494 = vmatprep.mubr.bf16.mxu0 0
      %3495 = vmatmul.mubr.bf16.gmra.mrb[0].mxu0 %v3023
      %v3496 = vpop.f32.mrb[0].mxu0
      %v3497 = vadd.f32 %v3336, %v3496
      %v3498 = vpop.f32.mrb[0].mxu0
      %v3499 = vpop.f32.mrb[0].mxu0
      %v3500 = vadd.f32 %v3339, %v3499
      %v3501 = vpop.f32.mrb[0].mxu0
      %3502 = vmatprep.mubr.bf16.mxu0 0
      %3503 = vmatmul.mubr.bf16.gmra.mrb[0].mxu0 %v3026
      %v3504 = vpop.f32.mrb[0].mxu0
      %v3505 = vadd.f32 %v3344, %v3504
      %v3506 = vpop.f32.mrb[0].mxu0
      %v3507 = vpop.f32.mrb[0].mxu0
      %v3508 = vadd.f32 %v3347, %v3507
      %v3509 = vpop.f32.mrb[0].mxu0
      %3510 = vmatprep.mubr.bf16.mxu0 0
      %3511 = vmatmul.mubr.bf16.gmra.mrb[0].mxu0 %v3029
      %v3512 = vpop.f32.mrb[0].mxu0
      %v3513 = vadd.f32 %v3352, %v3512
      %v3514 = vpop.f32.mrb[0].mxu0
      %v3515 = vpop.f32.mrb[0].mxu0
      %v3516 = vadd.f32 %v3355, %v3515
      %v3517 = vpop.f32.mrb[0].mxu0
      %3518 = vmatprep.mubr.bf16.mxu0 0
      %3519 = vmatmul.mubr.bf16.gmra.mrb[0].mxu0 %v3032
      %v3520 = vpop.f32.mrb[0].mxu0
      %v3521 = vadd.f32 %v3360, %v3520
      %v3522 = vpop.f32.mrb[0].mxu0
      %v3523 = vpop.f32.mrb[0].mxu0
      %v3524 = vadd.f32 %v3363, %v3523
      %v3525 = vpop.f32.mrb[0].mxu0
      %3526 = vmatprep.mubr.bf16.mxu0 0
      %3527 = vmatmul.mubr.bf16.gmra.mrb[0].mxu0 %v3035
      %v3528 = vpop.f32.mrb[0].mxu0
      %v3529 = vadd.f32 %v3368, %v3528
      %v3530 = vpop.f32.mrb[0].mxu0
      %v3531 = vpop.f32.mrb[0].mxu0
      %v3532 = vadd.f32 %v3371, %v3531
      %v3533 = vpop.f32.mrb[0].mxu0
      %3534 = vmatprep.mubr.bf16.mxu0 0
      %3535 = vmatmul.mubr.bf16.gmra.mrb[0].mxu0 %v3038
      %v3536 = vpop.f32.mrb[0].mxu0
      %v3537 = vadd.f32 %v3376, %v3536
      %v3538 = vpop.f32.mrb[0].mxu0
      %v3539 = vpop.f32.mrb[0].mxu0
      %v3540 = vadd.f32 %v3379, %v3539
      %v3541 = vpop.f32.mrb[0].mxu0
      %3542 = vmatprep.mubr.bf16.mxu0 0
      %3543 = vmatmul.mubr.bf16.gmra.mrb[0].mxu0 %v3041
      %v3544 = vpop.f32.mrb[0].mxu0
      %v3545 = vadd.f32 %v3384, %v3544
      %v3546 = vpop.f32.mrb[0].mxu0
      %v3547 = vpop.f32.mrb[0].mxu0
      %v3548 = vadd.f32 %v3387, %v3547
      %v3549 = vpop.f32.mrb[0].mxu0
      %3550 = vmatprep.mubr.bf16.mxu0 0
      %3551 = vmatmul.mubr.bf16.gmra.mrb[0].mxu0 %v3044
      %v3552 = vpop.f32.mrb[0].mxu0
      %v3553 = vadd.f32 %v3392, %v3552
      %v3554 = vpop.f32.mrb[0].mxu0
      %v3555 = vpop.f32.mrb[0].mxu0
      %v3556 = vadd.f32 %v3395, %v3555
      %v3557 = vpop.f32.mrb[0].mxu0
      %3558 = vdwg.mxu0
      %3559 = vst [vmem:[#allocation3] sm:$0xff] %v3433
      %3560 = vst [vmem:[#allocation3 + $0x8] sm:$0xff] %v3436
      %3561 = vst [vmem:[#allocation3 + $0x10] sm:$0xff] %v3441
      %3562 = vst [vmem:[#allocation3 + $0x18] sm:$0xff] %v3444
      %3563 = vst [vmem:[#allocation3 + $0x20] sm:$0xff] %v3449
      %3564 = vst [vmem:[#allocation3 + $0x28] sm:$0xff] %v3452
      %3565 = vst [vmem:[#allocation3 + $0x30] sm:$0xff] %v3457
      %3566 = vst [vmem:[#allocation3 + $0x38] sm:$0xff] %v3460
      %3567 = vst [vmem:[#allocation3 + $0x40] sm:$0xff] %v3465
      %3568 = vst [vmem:[#allocation3 + $0x48] sm:$0xff] %v3468
      %3569 = vst [vmem:[#allocation3 + $0x50] sm:$0xff] %v3473
      %3570 = vst [vmem:[#allocation3 + $0x58] sm:$0xff] %v3476
      %3571 = vst [vmem:[#allocation3 + $0x60] sm:$0xff] %v3481
      %3572 = vst [vmem:[#allocation3 + $0x68] sm:$0xff] %v3484
      %3573 = vst [vmem:[#allocation3 + $0x70] sm:$0xff] %v3489
      %3574 = vst [vmem:[#allocation3 + $0x78] sm:$0xff] %v3492
      %3575 = vst [vmem:[#allocation3 + $0x80] sm:$0xff] %v3497
      %3576 = vst [vmem:[#allocation3 + $0x88] sm:$0xff] %v3500
      %3577 = vst [vmem:[#allocation3 + $0x90] sm:$0xff] %v3505
      %3578 = vst [vmem:[#allocation3 + $0x98] sm:$0xff] %v3508
      %3579 = vst [vmem:[#allocation3 + $0xa0] sm:$0xff] %v3513
      %3580 = vst [vmem:[#allocation3 + $0xa8] sm:$0xff] %v3516
      %3581 = vst [vmem:[#allocation3 + $0xb0] sm:$0xff] %v3521
      %3582 = vst [vmem:[#allocation3 + $0xb8] sm:$0xff] %v3524
      %3583 = vst [vmem:[#allocation3 + $0xc0] sm:$0xff] %v3529
      %3584 = vst [vmem:[#allocation3 + $0xc8] sm:$0xff] %v3532
      %3585 = vst [vmem:[#allocation3 + $0xd0] sm:$0xff] %v3537
      %3586 = vst [vmem:[#allocation3 + $0xd8] sm:$0xff] %v3540
      %3587 = vst [vmem:[#allocation3 + $0xe0] sm:$0xff] %v3545
      %3588 = vst [vmem:[#allocation3 + $0xe8] sm:$0xff] %v3548
      %3589 = vst [vmem:[#allocation3 + $0xf0] sm:$0xff] %v3553
      %3590 = vst [vmem:[#allocation3 + $0xf8] sm:$0xff] %v3556
      %v3591 = vld [vmem:[%s233] sm:$0xff]
      %v3592 = vld [vmem:[%s233 + $0x8] sm:$0xff]
      %v3593 = vld [vmem:[%s233 + $0x10] sm:$0xff]
      %v3594 = vld [vmem:[%s233 + $0x18] sm:$0xff]
      %v3595 = vld [vmem:[%s233 + $0x20] sm:$0xff]
      %v3596 = vld [vmem:[%s233 + $0x28] sm:$0xff]
      %v3597 = vld [vmem:[%s233 + $0x30] sm:$0xff]
      %v3598 = vld [vmem:[%s233 + $0x38] sm:$0xff]
      %v3599 = vld [vmem:[%s233 + $0x40] sm:$0xff]
      %v3600 = vld [vmem:[%s233 + $0x48] sm:$0xff]
      %v3601 = vld [vmem:[%s233 + $0x50] sm:$0xff]
      %v3602 = vld [vmem:[%s233 + $0x58] sm:$0xff]
      %v3603 = vld [vmem:[%s233 + $0x60] sm:$0xff]
      %v3604 = vld [vmem:[%s233 + $0x68] sm:$0xff]
      %v3605 = vld [vmem:[%s233 + $0x70] sm:$0xff]
      %v3606 = vld [vmem:[%s233 + $0x78] sm:$0xff]
      %v3607 = vld [vmem:[%s233 + $0x80] sm:$0xff]
      %v3608 = vld [vmem:[%s233 + $0x88] sm:$0xff]
      %v3609 = vld [vmem:[%s233 + $0x90] sm:$0xff]
      %v3610 = vld [vmem:[%s233 + $0x98] sm:$0xff]
      %v3611 = vld [vmem:[%s233 + $0xa0] sm:$0xff]
      %v3612 = vld [vmem:[%s233 + $0xa8] sm:$0xff]
      %v3613 = vld [vmem:[%s233 + $0xb0] sm:$0xff]
      %v3614 = vld [vmem:[%s233 + $0xb8] sm:$0xff]
      %v3615 = vld [vmem:[%s233 + $0xc0] sm:$0xff]
      %v3616 = vld [vmem:[%s233 + $0xc8] sm:$0xff]
      %v3617 = vld [vmem:[%s233 + $0xd0] sm:$0xff]
      %v3618 = vld [vmem:[%s233 + $0xd8] sm:$0xff]
      %v3619 = vld [vmem:[%s233 + $0xe0] sm:$0xff]
      %v3620 = vld [vmem:[%s233 + $0xe8] sm:$0xff]
      %v3621 = vld [vmem:[%s233 + $0xf0] sm:$0xff]
      %v3622 = vld [vmem:[%s233 + $0xf8] sm:$0xff]
      %v3623 = vld [vmem:[%s233 + $0x100] sm:$0xff]
      %v3624 = vld [vmem:[%s233 + $0x108] sm:$0xff]
      %v3625 = vld [vmem:[%s233 + $0x110] sm:$0xff]
      %v3626 = vld [vmem:[%s233 + $0x118] sm:$0xff]
      %v3627 = vld [vmem:[%s233 + $0x120] sm:$0xff]
      %v3628 = vld [vmem:[%s233 + $0x128] sm:$0xff]
      %v3629 = vld [vmem:[%s233 + $0x130] sm:$0xff]
      %v3630 = vld [vmem:[%s233 + $0x138] sm:$0xff]
      %v3631 = vld [vmem:[%s233 + $0x140] sm:$0xff]
      %v3632 = vld [vmem:[%s233 + $0x148] sm:$0xff]
      %v3633 = vld [vmem:[%s233 + $0x150] sm:$0xff]
      %v3634 = vld [vmem:[%s233 + $0x158] sm:$0xff]
      %v3635 = vld [vmem:[%s233 + $0x160] sm:$0xff]
      %v3636 = vld [vmem:[%s233 + $0x168] sm:$0xff]
      %v3637 = vld [vmem:[%s233 + $0x170] sm:$0xff]
      %v3638 = vld [vmem:[%s233 + $0x178] sm:$0xff]
      %s3639 = scalar_lea.vmem %s3, 192
      %v3640 = vld [vmem:[%s3639] sm:$0xf]
      %v3641 = vld [vmem:[%s3639 + $0x4] sm:$0xf]
      %v3642 = vld [vmem:[%s3639 + $0x8] sm:$0xf]
      %v3643 = vld [vmem:[%s3639 + $0xc] sm:$0xf]
      %v3644 = vld [vmem:[%s3639 + $0x10] sm:$0xf]
      %v3645 = vld [vmem:[%s3639 + $0x14] sm:$0xf]
      %v3646 = vld [vmem:[%s3639 + $0x18] sm:$0xf]
      %v3647 = vld [vmem:[%s3639 + $0x1c] sm:$0xf]
      %v3648 = vld [vmem:[%s3639 + $0x20] sm:$0xf]
      %v3649 = vld [vmem:[%s3639 + $0x24] sm:$0xf]
      %v3650 = vld [vmem:[%s3639 + $0x28] sm:$0xf]
      %v3651 = vld [vmem:[%s3639 + $0x2c] sm:$0xf]
      %v3652 = vld [vmem:[%s3639 + $0x30] sm:$0xf]
      %v3653 = vld [vmem:[%s3639 + $0x34] sm:$0xf]
      %v3654 = vld [vmem:[%s3639 + $0x38] sm:$0xf]
      %v3655 = vld [vmem:[%s3639 + $0x3c] sm:$0xf]
      %v3656 = vld [vmem:[%s3639 + $0x40] sm:$0xf]
      %v3657 = vld [vmem:[%s3639 + $0x44] sm:$0xf]
      %v3658 = vld [vmem:[%s3639 + $0x48] sm:$0xf]
      %v3659 = vld [vmem:[%s3639 + $0x4c] sm:$0xf]
      %v3660 = vld [vmem:[%s3639 + $0x50] sm:$0xf]
      %v3661 = vld [vmem:[%s3639 + $0x54] sm:$0xf]
      %v3662 = vld [vmem:[%s3639 + $0x58] sm:$0xf]
      %v3663 = vld [vmem:[%s3639 + $0x5c] sm:$0xf]
      %v3664 = vld [vmem:[%s3639 + $0x60] sm:$0xf]
      %v3665 = vld [vmem:[%s3639 + $0x64] sm:$0xf]
      %v3666 = vld [vmem:[%s3639 + $0x68] sm:$0xf]
      %v3667 = vld [vmem:[%s3639 + $0x6c] sm:$0xf]
      %v3668 = vld [vmem:[%s3639 + $0x70] sm:$0xf]
      %v3669 = vld [vmem:[%s3639 + $0x74] sm:$0xf]
      %v3670 = vld [vmem:[%s3639 + $0x78] sm:$0xf]
      %v3671 = vld [vmem:[%s3639 + $0x7c] sm:$0xf]
      %v3672 = vld [vmem:[%s3639 + $0x80] sm:$0xf]
      %v3673 = vld [vmem:[%s3639 + $0x84] sm:$0xf]
      %v3674 = vld [vmem:[%s3639 + $0x88] sm:$0xf]
      %v3675 = vld [vmem:[%s3639 + $0x8c] sm:$0xf]
      %v3676 = vld [vmem:[%s3639 + $0x90] sm:$0xf]
      %v3677 = vld [vmem:[%s3639 + $0x94] sm:$0xf]
      %v3678 = vld [vmem:[%s3639 + $0x98] sm:$0xf]
      %v3679 = vld [vmem:[%s3639 + $0x9c] sm:$0xf]
      %v3680 = vld [vmem:[%s3639 + $0xa0] sm:$0xf]
      %v3681 = vld [vmem:[%s3639 + $0xa4] sm:$0xf]
      %v3682 = vld [vmem:[%s3639 + $0xa8] sm:$0xf]
      %v3683 = vld [vmem:[%s3639 + $0xac] sm:$0xf]
      %v3684 = vld [vmem:[%s3639 + $0xb0] sm:$0xf]
      %v3685 = vld [vmem:[%s3639 + $0xb4] sm:$0xf]
      %v3686 = vld [vmem:[%s3639 + $0xb8] sm:$0xf]
      %v3687 = vld [vmem:[%s3639 + $0xbc] sm:$0xf]
      %v3736 = vunpack.c.l.b16 %v3640
      %v3737 = vunpack.c.l.b16 %v3641
      %v3738 = vunpack.c.l.b16 %v3642
      %v3739 = vunpack.c.l.b16 %v3643
      %v3740 = vunpack.c.l.b16 %v3644
      %v3741 = vunpack.c.l.b16 %v3645
      %v3742 = vunpack.c.l.b16 %v3646
      %v3743 = vunpack.c.l.b16 %v3647
      %v3744 = vunpack.c.l.b16 %v3648
      %v3745 = vunpack.c.l.b16 %v3649
      %v3746 = vunpack.c.l.b16 %v3650
      %v3747 = vunpack.c.l.b16 %v3651
      %v3748 = vunpack.c.l.b16 %v3652
      %v3749 = vunpack.c.l.b16 %v3653
      %v3750 = vunpack.c.l.b16 %v3654
      %v3751 = vunpack.c.l.b16 %v3655
      %v3752 = vunpack.c.l.b16 %v3656
      %v3753 = vunpack.c.l.b16 %v3657
      %v3754 = vunpack.c.l.b16 %v3658
      %v3755 = vunpack.c.l.b16 %v3659
      %v3756 = vunpack.c.l.b16 %v3660
      %v3757 = vunpack.c.l.b16 %v3661
      %v3758 = vunpack.c.l.b16 %v3662
      %v3759 = vunpack.c.l.b16 %v3663
      %v3760 = vunpack.c.l.b16 %v3664
      %v3761 = vunpack.c.l.b16 %v3665
      %v3762 = vunpack.c.l.b16 %v3666
      %v3763 = vunpack.c.l.b16 %v3667
      %v3764 = vunpack.c.l.b16 %v3668
      %v3765 = vunpack.c.l.b16 %v3669
      %v3766 = vunpack.c.l.b16 %v3670
      %v3767 = vunpack.c.l.b16 %v3671
      %v3768 = vunpack.c.l.b16 %v3672
      %v3769 = vunpack.c.l.b16 %v3673
      %v3770 = vunpack.c.l.b16 %v3674
      %v3771 = vunpack.c.l.b16 %v3675
      %v3772 = vunpack.c.l.b16 %v3676
      %v3773 = vunpack.c.l.b16 %v3677
      %v3774 = vunpack.c.l.b16 %v3678
      %v3775 = vunpack.c.l.b16 %v3679
      %v3776 = vunpack.c.l.b16 %v3680
      %v3777 = vunpack.c.l.b16 %v3681
      %v3778 = vunpack.c.l.b16 %v3682
      %v3779 = vunpack.c.l.b16 %v3683
      %v3780 = vunpack.c.l.b16 %v3684
      %v3781 = vunpack.c.l.b16 %v3685
      %v3782 = vunpack.c.l.b16 %v3686
      %v3783 = vunpack.c.l.b16 %v3687
      %v3784 = vpack.c.b16 %v3737, %v3736
      %v3785 = vpack.c.b16 %v3739, %v3738
      %v3786 = vpack.c.b16 %v3741, %v3740
      %v3787 = vpack.c.b16 %v3743, %v3742
      %v3788 = vpack.c.b16 %v3745, %v3744
      %v3789 = vpack.c.b16 %v3747, %v3746
      %v3790 = vpack.c.b16 %v3749, %v3748
      %v3791 = vpack.c.b16 %v3751, %v3750
      %v3792 = vpack.c.b16 %v3753, %v3752
      %v3793 = vpack.c.b16 %v3755, %v3754
      %v3794 = vpack.c.b16 %v3757, %v3756
      %v3795 = vpack.c.b16 %v3759, %v3758
      %v3796 = vpack.c.b16 %v3761, %v3760
      %v3797 = vpack.c.b16 %v3763, %v3762
      %v3798 = vpack.c.b16 %v3765, %v3764
      %v3799 = vpack.c.b16 %v3767, %v3766
      %v3800 = vpack.c.b16 %v3769, %v3768
      %v3801 = vpack.c.b16 %v3771, %v3770
      %v3802 = vpack.c.b16 %v3773, %v3772
      %v3803 = vpack.c.b16 %v3775, %v3774
      %v3804 = vpack.c.b16 %v3777, %v3776
      %v3805 = vpack.c.b16 %v3779, %v3778
      %v3806 = vpack.c.b16 %v3781, %v3780
      %v3807 = vpack.c.b16 %v3783, %v3782
      %3832 = vmatprep.subr.bf16.mxu0 0
      %3833 = vmatpush1.bf16.msra.mxu0 %v3784
      %3834 = vmatprep.subr.bf16.mxu0 0
      %3835 = vmatpush1.bf16.msra.mxu0 %v3785
      %3836 = vmatprep.subr.bf16.mxu0 0
      %3837 = vmatpush1.bf16.msra.mxu0 %v3786
      %3838 = vmatprep.subr.bf16.mxu0 0
      %3839 = vmatpush1.bf16.msra.mxu0 %v3787
      %3840 = vmatprep.subr.bf16.mxu0 0
      %3841 = vmatpush1.bf16.msra.mxu0 %v3788
      %3842 = vmatprep.subr.bf16.mxu0 0
      %3843 = vmatpush1.bf16.msra.mxu0 %v3789
      %3844 = vmatprep.subr.bf16.mxu0 0
      %3845 = vmatpush1.bf16.msra.mxu0 %v3790
      %3846 = vmatprep.subr.bf16.mxu0 0
      %3847 = vmatpush1.bf16.msra.mxu0 %v3791
      %3848 = vmatprep.subr.bf16.mxu0 0
      %3849 = vmatpush1.bf16.msra.mxu0 %v3792
      %3850 = vmatprep.subr.bf16.mxu0 0
      %3851 = vmatpush1.bf16.msra.mxu0 %v3793
      %3852 = vmatprep.subr.bf16.mxu0 0
      %3853 = vmatpush1.bf16.msra.mxu0 %v3794
      %3854 = vmatprep.subr.bf16.mxu0 0
      %3855 = vmatpush1.bf16.msra.mxu0 %v3795
      %3856 = vmatprep.subr.bf16.mxu0 0
      %3857 = vmatpush1.bf16.msra.mxu0 %v3796
      %3858 = vmatprep.subr.bf16.mxu0 0
      %3859 = vmatpush1.bf16.msra.mxu0 %v3797
      %3860 = vmatprep.subr.bf16.mxu0 0
      %3861 = vmatpush1.bf16.msra.mxu0 %v3798
      %3862 = vmatprep.subr.bf16.mxu0 0
      %3863 = vmatpush1.bf16.msra.mxu0 %v3799
      %3864 = vmatprep.mubr.bf16.mxu0 %v3592
      %3865 = vmatmul.mubr.bf16.gmra.mrb[0].mxu0 %v3591
      %v3866 = vpop.f32.mrb[0].mxu0
      %v3867 = vadd.f32 0.0, %v3866
      %v3868 = vpop.f32.mrb[0].mxu0
      %v3869 = vpop.f32.mrb[0].mxu0
      %v3870 = vadd.f32 0.0, %v3869
      %v3871 = vpop.f32.mrb[0].mxu0
      %3872 = vmatprep.mubr.bf16.mxu0 %v3595
      %3873 = vmatmul.mubr.bf16.gmra.mrb[0].mxu0 %v3594
      %v3874 = vpop.f32.mrb[0].mxu0
      %v3875 = vadd.f32 0.0, %v3874
      %v3876 = vpop.f32.mrb[0].mxu0
      %v3877 = vpop.f32.mrb[0].mxu0
      %v3878 = vadd.f32 0.0, %v3877
      %v3879 = vpop.f32.mrb[0].mxu0
      %3880 = vmatprep.mubr.bf16.mxu0 %v3598
      %3881 = vmatmul.mubr.bf16.gmra.mrb[0].mxu0 %v3597
      %v3882 = vpop.f32.mrb[0].mxu0
      %v3883 = vadd.f32 0.0, %v3882
      %v3884 = vpop.f32.mrb[0].mxu0
      %v3885 = vpop.f32.mrb[0].mxu0
      %v3886 = vadd.f32 0.0, %v3885
      %v3887 = vpop.f32.mrb[0].mxu0
      %3888 = vmatprep.mubr.bf16.mxu0 %v3601
      %3889 = vmatmul.mubr.bf16.gmra.mrb[0].mxu0 %v3600
      %v3890 = vpop.f32.mrb[0].mxu0
      %v3891 = vadd.f32 0.0, %v3890
      %v3892 = vpop.f32.mrb[0].mxu0
      %v3893 = vpop.f32.mrb[0].mxu0
      %v3894 = vadd.f32 0.0, %v3893
      %v3895 = vpop.f32.mrb[0].mxu0
      %3896 = vmatprep.mubr.bf16.mxu0 %v3604
      %3897 = vmatmul.mubr.bf16.gmra.mrb[0].mxu0 %v3603
      %v3898 = vpop.f32.mrb[0].mxu0
      %v3899 = vadd.f32 0.0, %v3898
      %v3900 = vpop.f32.mrb[0].mxu0
      %v3901 = vpop.f32.mrb[0].mxu0
      %v3902 = vadd.f32 0.0, %v3901
      %v3903 = vpop.f32.mrb[0].mxu0
      %3904 = vmatprep.mubr.bf16.mxu0 %v3607
      %3905 = vmatmul.mubr.bf16.gmra.mrb[0].mxu0 %v3606
      %v3906 = vpop.f32.mrb[0].mxu0
      %v3907 = vadd.f32 0.0, %v3906
      %v3908 = vpop.f32.mrb[0].mxu0
      %v3909 = vpop.f32.mrb[0].mxu0
      %v3910 = vadd.f32 0.0, %v3909
      %v3911 = vpop.f32.mrb[0].mxu0
      %3912 = vmatprep.mubr.bf16.mxu0 %v3610
      %3913 = vmatmul.mubr.bf16.gmra.mrb[0].mxu0 %v3609
      %v3914 = vpop.f32.mrb[0].mxu0
      %v3915 = vadd.f32 0.0, %v3914
      %v3916 = vpop.f32.mrb[0].mxu0
      %v3917 = vpop.f32.mrb[0].mxu0
      %v3918 = vadd.f32 0.0, %v3917
      %v3919 = vpop.f32.mrb[0].mxu0
      %3920 = vmatprep.mubr.bf16.mxu0 %v3613
      %3921 = vmatmul.mubr.bf16.gmra.mrb[0].mxu0 %v3612
      %v3922 = vpop.f32.mrb[0].mxu0
      %v3923 = vadd.f32 0.0, %v3922
      %v3924 = vpop.f32.mrb[0].mxu0
      %v3925 = vpop.f32.mrb[0].mxu0
      %v3926 = vadd.f32 0.0, %v3925
      %v3927 = vpop.f32.mrb[0].mxu0
      %3928 = vmatprep.mubr.bf16.mxu0 %v3616
      %3929 = vmatmul.mubr.bf16.gmra.mrb[0].mxu0 %v3615
      %v3930 = vpop.f32.mrb[0].mxu0
      %v3931 = vadd.f32 0.0, %v3930
      %v3932 = vpop.f32.mrb[0].mxu0
      %v3933 = vpop.f32.mrb[0].mxu0
      %v3934 = vadd.f32 0.0, %v3933
      %v3935 = vpop.f32.mrb[0].mxu0
      %3936 = vmatprep.mubr.bf16.mxu0 %v3619
      %3937 = vmatmul.mubr.bf16.gmra.mrb[0].mxu0 %v3618
      %v3938 = vpop.f32.mrb[0].mxu0
      %v3939 = vadd.f32 0.0, %v3938
      %v3940 = vpop.f32.mrb[0].mxu0
      %v3941 = vpop.f32.mrb[0].mxu0
      %v3942 = vadd.f32 0.0, %v3941
      %v3943 = vpop.f32.mrb[0].mxu0
      %3944 = vmatprep.mubr.bf16.mxu0 %v3622
      %3945 = vmatmul.mubr.bf16.gmra.mrb[0].mxu0 %v3621
      %v3946 = vpop.f32.mrb[0].mxu0
      %v3947 = vadd.f32 0.0, %v3946
      %v3948 = vpop.f32.mrb[0].mxu0
      %v3949 = vpop.f32.mrb[0].mxu0
      %v3950 = vadd.f32 0.0, %v3949
      %v3951 = vpop.f32.mrb[0].mxu0
      %3952 = vmatprep.mubr.bf16.mxu0 %v3625
      %3953 = vmatmul.mubr.bf16.gmra.mrb[0].mxu0 %v3624
      %v3954 = vpop.f32.mrb[0].mxu0
      %v3955 = vadd.f32 0.0, %v3954
      %v3956 = vpop.f32.mrb[0].mxu0
      %v3957 = vpop.f32.mrb[0].mxu0
      %v3958 = vadd.f32 0.0, %v3957
      %v3959 = vpop.f32.mrb[0].mxu0
      %3960 = vmatprep.mubr.bf16.mxu0 %v3628
      %3961 = vmatmul.mubr.bf16.gmra.mrb[0].mxu0 %v3627
      %v3962 = vpop.f32.mrb[0].mxu0
      %v3963 = vadd.f32 0.0, %v3962
      %v3964 = vpop.f32.mrb[0].mxu0
      %v3965 = vpop.f32.mrb[0].mxu0
      %v3966 = vadd.f32 0.0, %v3965
      %v3967 = vpop.f32.mrb[0].mxu0
      %3968 = vmatprep.mubr.bf16.mxu0 %v3631
      %3969 = vmatmul.mubr.bf16.gmra.mrb[0].mxu0 %v3630
      %v3970 = vpop.f32.mrb[0].mxu0
      %v3971 = vadd.f32 0.0, %v3970
      %v3972 = vpop.f32.mrb[0].mxu0
      %v3973 = vpop.f32.mrb[0].mxu0
      %v3974 = vadd.f32 0.0, %v3973
      %v3975 = vpop.f32.mrb[0].mxu0
      %3976 = vmatprep.mubr.bf16.mxu0 %v3634
      %3977 = vmatmul.mubr.bf16.gmra.mrb[0].mxu0 %v3633
      %v3978 = vpop.f32.mrb[0].mxu0
      %v3979 = vadd.f32 0.0, %v3978
      %v3980 = vpop.f32.mrb[0].mxu0
      %v3981 = vpop.f32.mrb[0].mxu0
      %v3982 = vadd.f32 0.0, %v3981
      %v3983 = vpop.f32.mrb[0].mxu0
      %3984 = vmatprep.mubr.bf16.mxu0 %v3637
      %3985 = vmatmul.mubr.bf16.gmra.mrb[0].mxu0 %v3636
      %v3986 = vpop.f32.mrb[0].mxu0
      %v3987 = vadd.f32 0.0, %v3986
      %v3988 = vpop.f32.mrb[0].mxu0
      %v3989 = vpop.f32.mrb[0].mxu0
      %v3990 = vadd.f32 0.0, %v3989
      %v3991 = vpop.f32.mrb[0].mxu0
      %3992 = vdwg.mxu0
      %3993 = vmatprep.subr.bf16.mxu0 0
      %3994 = vmatpush1.bf16.msra.mxu0 %v3800
      %3995 = vmatprep.subr.bf16.mxu0 0
      %3996 = vmatpush1.bf16.msra.mxu0 %v3801
      %3997 = vmatprep.subr.bf16.mxu0 0
      %3998 = vmatpush1.bf16.msra.mxu0 %v3802
      %3999 = vmatprep.subr.bf16.mxu0 0
      %4000 = vmatpush1.bf16.msra.mxu0 %v3803
      %4001 = vmatprep.subr.bf16.mxu0 0
      %4002 = vmatpush1.bf16.msra.mxu0 %v3804
      %4003 = vmatprep.subr.bf16.mxu0 0
      %4004 = vmatpush1.bf16.msra.mxu0 %v3805
      %4005 = vmatprep.subr.bf16.mxu0 0
      %4006 = vmatpush1.bf16.msra.mxu0 %v3806
      %4007 = vmatprep.subr.bf16.mxu0 0
      %4008 = vmatpush1.bf16.msra.mxu0 %v3807
      %4009 = vmatprep.subr.bf16.mxu0 0
      %4010 = vmatpush1.bf16.msra.mxu0 0
      %4011 = vmatprep.subr.bf16.mxu0 0
      %4012 = vmatpush1.bf16.msra.mxu0 0
      %4013 = vmatprep.subr.bf16.mxu0 0
      %4014 = vmatpush1.bf16.msra.mxu0 0
      %4015 = vmatprep.subr.bf16.mxu0 0
      %4016 = vmatpush1.bf16.msra.mxu0 0
      %4017 = vmatprep.subr.bf16.mxu0 0
      %4018 = vmatpush1.bf16.msra.mxu0 0
      %4019 = vmatprep.subr.bf16.mxu0 0
      %4020 = vmatpush1.bf16.msra.mxu0 0
      %4021 = vmatprep.subr.bf16.mxu0 0
      %4022 = vmatpush1.bf16.msra.mxu0 0
      %4023 = vmatprep.subr.bf16.mxu0 0
      %4024 = vmatpush1.bf16.msra.mxu0 0
      %4025 = vmatprep.mubr.bf16.mxu0 0
      %4026 = vmatmul.mubr.bf16.gmra.mrb[0].mxu0 %v3593
      %v4027 = vpop.f32.mrb[0].mxu0
      %v4028 = vadd.f32 %v3867, %v4027
      %v4029 = vpop.f32.mrb[0].mxu0
      %v4030 = vpop.f32.mrb[0].mxu0
      %v4031 = vadd.f32 %v3870, %v4030
      %v4032 = vpop.f32.mrb[0].mxu0
      %4033 = vmatprep.mubr.bf16.mxu0 0
      %4034 = vmatmul.mubr.bf16.gmra.mrb[0].mxu0 %v3596
      %v4035 = vpop.f32.mrb[0].mxu0
      %v4036 = vadd.f32 %v3875, %v4035
      %v4037 = vpop.f32.mrb[0].mxu0
      %v4038 = vpop.f32.mrb[0].mxu0
      %v4039 = vadd.f32 %v3878, %v4038
      %v4040 = vpop.f32.mrb[0].mxu0
      %4041 = vmatprep.mubr.bf16.mxu0 0
      %4042 = vmatmul.mubr.bf16.gmra.mrb[0].mxu0 %v3599
      %v4043 = vpop.f32.mrb[0].mxu0
      %v4044 = vadd.f32 %v3883, %v4043
      %v4045 = vpop.f32.mrb[0].mxu0
      %v4046 = vpop.f32.mrb[0].mxu0
      %v4047 = vadd.f32 %v3886, %v4046
      %v4048 = vpop.f32.mrb[0].mxu0
      %4049 = vmatprep.mubr.bf16.mxu0 0
      %4050 = vmatmul.mubr.bf16.gmra.mrb[0].mxu0 %v3602
      %v4051 = vpop.f32.mrb[0].mxu0
      %v4052 = vadd.f32 %v3891, %v4051
      %v4053 = vpop.f32.mrb[0].mxu0
      %v4054 = vpop.f32.mrb[0].mxu0
      %v4055 = vadd.f32 %v3894, %v4054
      %v4056 = vpop.f32.mrb[0].mxu0
      %4057 = vmatprep.mubr.bf16.mxu0 0
      %4058 = vmatmul.mubr.bf16.gmra.mrb[0].mxu0 %v3605
      %v4059 = vpop.f32.mrb[0].mxu0
      %v4060 = vadd.f32 %v3899, %v4059
      %v4061 = vpop.f32.mrb[0].mxu0
      %v4062 = vpop.f32.mrb[0].mxu0
      %v4063 = vadd.f32 %v3902, %v4062
      %v4064 = vpop.f32.mrb[0].mxu0
      %4065 = vmatprep.mubr.bf16.mxu0 0
      %4066 = vmatmul.mubr.bf16.gmra.mrb[0].mxu0 %v3608
      %v4067 = vpop.f32.mrb[0].mxu0
      %v4068 = vadd.f32 %v3907, %v4067
      %v4069 = vpop.f32.mrb[0].mxu0
      %v4070 = vpop.f32.mrb[0].mxu0
      %v4071 = vadd.f32 %v3910, %v4070
      %v4072 = vpop.f32.mrb[0].mxu0
      %4073 = vmatprep.mubr.bf16.mxu0 0
      %4074 = vmatmul.mubr.bf16.gmra.mrb[0].mxu0 %v3611
      %v4075 = vpop.f32.mrb[0].mxu0
      %v4076 = vadd.f32 %v3915, %v4075
      %v4077 = vpop.f32.mrb[0].mxu0
      %v4078 = vpop.f32.mrb[0].mxu0
      %v4079 = vadd.f32 %v3918, %v4078
      %v4080 = vpop.f32.mrb[0].mxu0
      %4081 = vmatprep.mubr.bf16.mxu0 0
      %4082 = vmatmul.mubr.bf16.gmra.mrb[0].mxu0 %v3614
      %v4083 = vpop.f32.mrb[0].mxu0
      %v4084 = vadd.f32 %v3923, %v4083
      %v4085 = vpop.f32.mrb[0].mxu0
      %v4086 = vpop.f32.mrb[0].mxu0
      %v4087 = vadd.f32 %v3926, %v4086
      %v4088 = vpop.f32.mrb[0].mxu0
      %4089 = vmatprep.mubr.bf16.mxu0 0
      %4090 = vmatmul.mubr.bf16.gmra.mrb[0].mxu0 %v3617
      %v4091 = vpop.f32.mrb[0].mxu0
      %v4092 = vadd.f32 %v3931, %v4091
      %v4093 = vpop.f32.mrb[0].mxu0
      %v4094 = vpop.f32.mrb[0].mxu0
      %v4095 = vadd.f32 %v3934, %v4094
      %v4096 = vpop.f32.mrb[0].mxu0
      %4097 = vmatprep.mubr.bf16.mxu0 0
      %4098 = vmatmul.mubr.bf16.gmra.mrb[0].mxu0 %v3620
      %v4099 = vpop.f32.mrb[0].mxu0
      %v4100 = vadd.f32 %v3939, %v4099
      %v4101 = vpop.f32.mrb[0].mxu0
      %v4102 = vpop.f32.mrb[0].mxu0
      %v4103 = vadd.f32 %v3942, %v4102
      %v4104 = vpop.f32.mrb[0].mxu0
      %4105 = vmatprep.mubr.bf16.mxu0 0
      %4106 = vmatmul.mubr.bf16.gmra.mrb[0].mxu0 %v3623
      %v4107 = vpop.f32.mrb[0].mxu0
      %v4108 = vadd.f32 %v3947, %v4107
      %v4109 = vpop.f32.mrb[0].mxu0
      %v4110 = vpop.f32.mrb[0].mxu0
      %v4111 = vadd.f32 %v3950, %v4110
      %v4112 = vpop.f32.mrb[0].mxu0
      %4113 = vmatprep.mubr.bf16.mxu0 0
      %4114 = vmatmul.mubr.bf16.gmra.mrb[0].mxu0 %v3626
      %v4115 = vpop.f32.mrb[0].mxu0
      %v4116 = vadd.f32 %v3955, %v4115
      %v4117 = vpop.f32.mrb[0].mxu0
      %v4118 = vpop.f32.mrb[0].mxu0
      %v4119 = vadd.f32 %v3958, %v4118
      %v4120 = vpop.f32.mrb[0].mxu0
      %4121 = vmatprep.mubr.bf16.mxu0 0
      %4122 = vmatmul.mubr.bf16.gmra.mrb[0].mxu0 %v3629
      %v4123 = vpop.f32.mrb[0].mxu0
      %v4124 = vadd.f32 %v3963, %v4123
      %v4125 = vpop.f32.mrb[0].mxu0
      %v4126 = vpop.f32.mrb[0].mxu0
      %v4127 = vadd.f32 %v3966, %v4126
      %v4128 = vpop.f32.mrb[0].mxu0
      %4129 = vmatprep.mubr.bf16.mxu0 0
      %4130 = vmatmul.mubr.bf16.gmra.mrb[0].mxu0 %v3632
      %v4131 = vpop.f32.mrb[0].mxu0
      %v4132 = vadd.f32 %v3971, %v4131
      %v4133 = vpop.f32.mrb[0].mxu0
      %v4134 = vpop.f32.mrb[0].mxu0
      %v4135 = vadd.f32 %v3974, %v4134
      %v4136 = vpop.f32.mrb[0].mxu0
      %4137 = vmatprep.mubr.bf16.mxu0 0
      %4138 = vmatmul.mubr.bf16.gmra.mrb[0].mxu0 %v3635
      %v4139 = vpop.f32.mrb[0].mxu0
      %v4140 = vadd.f32 %v3979, %v4139
      %v4141 = vpop.f32.mrb[0].mxu0
      %v4142 = vpop.f32.mrb[0].mxu0
      %v4143 = vadd.f32 %v3982, %v4142
      %v4144 = vpop.f32.mrb[0].mxu0
      %4145 = vmatprep.mubr.bf16.mxu0 0
      %4146 = vmatmul.mubr.bf16.gmra.mrb[0].mxu0 %v3638
      %v4147 = vpop.f32.mrb[0].mxu0
      %v4148 = vadd.f32 %v3987, %v4147
      %v4149 = vpop.f32.mrb[0].mxu0
      %v4150 = vpop.f32.mrb[0].mxu0
      %v4151 = vadd.f32 %v3990, %v4150
      %v4152 = vpop.f32.mrb[0].mxu0
      %4153 = vdwg.mxu0
      %v4154 = vld [vmem:[#allocation3] sm:$0xff]
      %v4155 = vld [vmem:[#allocation3 + $0x8] sm:$0xff]
      %v4156 = vld [vmem:[#allocation3 + $0x10] sm:$0xff]
      %v4157 = vld [vmem:[#allocation3 + $0x18] sm:$0xff]
      %v4158 = vld [vmem:[#allocation3 + $0x20] sm:$0xff]
      %v4159 = vld [vmem:[#allocation3 + $0x28] sm:$0xff]
      %v4160 = vld [vmem:[#allocation3 + $0x30] sm:$0xff]
      %v4161 = vld [vmem:[#allocation3 + $0x38] sm:$0xff]
      %v4162 = vld [vmem:[#allocation3 + $0x40] sm:$0xff]
      %v4163 = vld [vmem:[#allocation3 + $0x48] sm:$0xff]
      %v4164 = vld [vmem:[#allocation3 + $0x50] sm:$0xff]
      %v4165 = vld [vmem:[#allocation3 + $0x58] sm:$0xff]
      %v4166 = vld [vmem:[#allocation3 + $0x60] sm:$0xff]
      %v4167 = vld [vmem:[#allocation3 + $0x68] sm:$0xff]
      %v4168 = vld [vmem:[#allocation3 + $0x70] sm:$0xff]
      %v4169 = vld [vmem:[#allocation3 + $0x78] sm:$0xff]
      %v4170 = vld [vmem:[#allocation3 + $0x80] sm:$0xff]
      %v4171 = vld [vmem:[#allocation3 + $0x88] sm:$0xff]
      %v4172 = vld [vmem:[#allocation3 + $0x90] sm:$0xff]
      %v4173 = vld [vmem:[#allocation3 + $0x98] sm:$0xff]
      %v4174 = vld [vmem:[#allocation3 + $0xa0] sm:$0xff]
      %v4175 = vld [vmem:[#allocation3 + $0xa8] sm:$0xff]
      %v4176 = vld [vmem:[#allocation3 + $0xb0] sm:$0xff]
      %v4177 = vld [vmem:[#allocation3 + $0xb8] sm:$0xff]
      %v4178 = vld [vmem:[#allocation3 + $0xc0] sm:$0xff]
      %v4179 = vld [vmem:[#allocation3 + $0xc8] sm:$0xff]
      %v4180 = vld [vmem:[#allocation3 + $0xd0] sm:$0xff]
      %v4181 = vld [vmem:[#allocation3 + $0xd8] sm:$0xff]
      %v4182 = vld [vmem:[#allocation3 + $0xe0] sm:$0xff]
      %v4183 = vld [vmem:[#allocation3 + $0xe8] sm:$0xff]
      %v4184 = vld [vmem:[#allocation3 + $0xf0] sm:$0xff]
      %v4185 = vld [vmem:[#allocation3 + $0xf8] sm:$0xff]
      %v4186 = vadd.f32 %v4154, %v4028
      %v4187 = vadd.f32 %v4155, %v4031
      %v4188 = vadd.f32 %v4156, %v4036
      %v4189 = vadd.f32 %v4157, %v4039
      %v4190 = vadd.f32 %v4158, %v4044
      %v4191 = vadd.f32 %v4159, %v4047
      %v4192 = vadd.f32 %v4160, %v4052
      %v4193 = vadd.f32 %v4161, %v4055
      %v4194 = vadd.f32 %v4162, %v4060
      %v4195 = vadd.f32 %v4163, %v4063
      %v4196 = vadd.f32 %v4164, %v4068
      %v4197 = vadd.f32 %v4165, %v4071
      %v4198 = vadd.f32 %v4166, %v4076
      %v4199 = vadd.f32 %v4167, %v4079
      %v4200 = vadd.f32 %v4168, %v4084
      %v4201 = vadd.f32 %v4169, %v4087
      %v4202 = vadd.f32 %v4170, %v4092
      %v4203 = vadd.f32 %v4171, %v4095
      %v4204 = vadd.f32 %v4172, %v4100
      %v4205 = vadd.f32 %v4173, %v4103
      %v4206 = vadd.f32 %v4174, %v4108
      %v4207 = vadd.f32 %v4175, %v4111
      %v4208 = vadd.f32 %v4176, %v4116
      %v4209 = vadd.f32 %v4177, %v4119
      %v4210 = vadd.f32 %v4178, %v4124
      %v4211 = vadd.f32 %v4179, %v4127
      %v4212 = vadd.f32 %v4180, %v4132
      %v4213 = vadd.f32 %v4181, %v4135
      %v4214 = vadd.f32 %v4182, %v4140
      %v4215 = vadd.f32 %v4183, %v4143
      %v4216 = vadd.f32 %v4184, %v4148
      %v4217 = vadd.f32 %v4185, %v4151
      %4218 = vst [vmem:[#allocation3] sm:$0xff] %v4186
      %4219 = vst [vmem:[#allocation3 + $0x8] sm:$0xff] %v4187
      %4220 = vst [vmem:[#allocation3 + $0x10] sm:$0xff] %v4188
      %4221 = vst [vmem:[#allocation3 + $0x18] sm:$0xff] %v4189
      %4222 = vst [vmem:[#allocation3 + $0x20] sm:$0xff] %v4190
      %4223 = vst [vmem:[#allocation3 + $0x28] sm:$0xff] %v4191
      %4224 = vst [vmem:[#allocation3 + $0x30] sm:$0xff] %v4192
      %4225 = vst [vmem:[#allocation3 + $0x38] sm:$0xff] %v4193
      %4226 = vst [vmem:[#allocation3 + $0x40] sm:$0xff] %v4194
      %4227 = vst [vmem:[#allocation3 + $0x48] sm:$0xff] %v4195
      %4228 = vst [vmem:[#allocation3 + $0x50] sm:$0xff] %v4196
      %4229 = vst [vmem:[#allocation3 + $0x58] sm:$0xff] %v4197
      %4230 = vst [vmem:[#allocation3 + $0x60] sm:$0xff] %v4198
      %4231 = vst [vmem:[#allocation3 + $0x68] sm:$0xff] %v4199
      %4232 = vst [vmem:[#allocation3 + $0x70] sm:$0xff] %v4200
      %4233 = vst [vmem:[#allocation3 + $0x78] sm:$0xff] %v4201
      %4234 = vst [vmem:[#allocation3 + $0x80] sm:$0xff] %v4202
      %4235 = vst [vmem:[#allocation3 + $0x88] sm:$0xff] %v4203
      %4236 = vst [vmem:[#allocation3 + $0x90] sm:$0xff] %v4204
      %4237 = vst [vmem:[#allocation3 + $0x98] sm:$0xff] %v4205
      %4238 = vst [vmem:[#allocation3 + $0xa0] sm:$0xff] %v4206
      %4239 = vst [vmem:[#allocation3 + $0xa8] sm:$0xff] %v4207
      %4240 = vst [vmem:[#allocation3 + $0xb0] sm:$0xff] %v4208
      %4241 = vst [vmem:[#allocation3 + $0xb8] sm:$0xff] %v4209
      %4242 = vst [vmem:[#allocation3 + $0xc0] sm:$0xff] %v4210
      %4243 = vst [vmem:[#allocation3 + $0xc8] sm:$0xff] %v4211
      %4244 = vst [vmem:[#allocation3 + $0xd0] sm:$0xff] %v4212
      %4245 = vst [vmem:[#allocation3 + $0xd8] sm:$0xff] %v4213
      %4246 = vst [vmem:[#allocation3 + $0xe0] sm:$0xff] %v4214
      %4247 = vst [vmem:[#allocation3 + $0xe8] sm:$0xff] %v4215
      %4248 = vst [vmem:[#allocation3 + $0xf0] sm:$0xff] %v4216
      %4249 = vst [vmem:[#allocation3 + $0xf8] sm:$0xff] %v4217
      %v4250 = vld [vmem:[%s1930] sm:$0xff]
      %v4251 = vld [vmem:[%s1930 + $0x8] sm:$0xff]
      %v4252 = vld [vmem:[%s1930 + $0x10] sm:$0xff]
      %v4253 = vld [vmem:[%s1930 + $0x18] sm:$0xff]
      %v4254 = vld [vmem:[%s1930 + $0x20] sm:$0xff]
      %v4255 = vld [vmem:[%s1930 + $0x28] sm:$0xff]
      %v4256 = vld [vmem:[%s1930 + $0x30] sm:$0xff]
      %v4257 = vld [vmem:[%s1930 + $0x38] sm:$0xff]
      %v4258 = vld [vmem:[%s1930 + $0x40] sm:$0xff]
      %v4259 = vld [vmem:[%s1930 + $0x48] sm:$0xff]
      %v4260 = vld [vmem:[%s1930 + $0x50] sm:$0xff]
      %v4261 = vld [vmem:[%s1930 + $0x58] sm:$0xff]
      %v4262 = vld [vmem:[%s1930 + $0x60] sm:$0xff]
      %v4263 = vld [vmem:[%s1930 + $0x68] sm:$0xff]
      %v4264 = vld [vmem:[%s1930 + $0x70] sm:$0xff]
      %v4265 = vld [vmem:[%s1930 + $0x78] sm:$0xff]
      %v4266 = vld [vmem:[%s1930 + $0x80] sm:$0xff]
      %v4267 = vld [vmem:[%s1930 + $0x88] sm:$0xff]
      %v4268 = vld [vmem:[%s1930 + $0x90] sm:$0xff]
      %v4269 = vld [vmem:[%s1930 + $0x98] sm:$0xff]
      %v4270 = vld [vmem:[%s1930 + $0xa0] sm:$0xff]
      %v4271 = vld [vmem:[%s1930 + $0xa8] sm:$0xff]
      %v4272 = vld [vmem:[%s1930 + $0xb0] sm:$0xff]
      %v4273 = vld [vmem:[%s1930 + $0xb8] sm:$0xff]
      %v4274 = vld [vmem:[%s1930 + $0xc0] sm:$0xff]
      %v4275 = vld [vmem:[%s1930 + $0xc8] sm:$0xff]
      %v4276 = vld [vmem:[%s1930 + $0xd0] sm:$0xff]
      %v4277 = vld [vmem:[%s1930 + $0xd8] sm:$0xff]
      %v4278 = vld [vmem:[%s1930 + $0xe0] sm:$0xff]
      %v4279 = vld [vmem:[%s1930 + $0xe8] sm:$0xff]
      %v4280 = vld [vmem:[%s1930 + $0xf0] sm:$0xff]
      %v4281 = vld [vmem:[%s1930 + $0xf8] sm:$0xff]
      %v4282 = vld [vmem:[%s1930 + $0x100] sm:$0xff]
      %v4283 = vld [vmem:[%s1930 + $0x108] sm:$0xff]
      %v4284 = vld [vmem:[%s1930 + $0x110] sm:$0xff]
      %v4285 = vld [vmem:[%s1930 + $0x118] sm:$0xff]
      %v4286 = vld [vmem:[%s1930 + $0x120] sm:$0xff]
      %v4287 = vld [vmem:[%s1930 + $0x128] sm:$0xff]
      %v4288 = vld [vmem:[%s1930 + $0x130] sm:$0xff]
      %v4289 = vld [vmem:[%s1930 + $0x138] sm:$0xff]
      %v4290 = vld [vmem:[%s1930 + $0x140] sm:$0xff]
      %v4291 = vld [vmem:[%s1930 + $0x148] sm:$0xff]
      %v4292 = vld [vmem:[%s1930 + $0x150] sm:$0xff]
      %v4293 = vld [vmem:[%s1930 + $0x158] sm:$0xff]
      %v4294 = vld [vmem:[%s1930 + $0x160] sm:$0xff]
      %v4295 = vld [vmem:[%s1930 + $0x168] sm:$0xff]
      %v4296 = vld [vmem:[%s1930 + $0x170] sm:$0xff]
      %v4297 = vld [vmem:[%s1930 + $0x178] sm:$0xff]
      %s4298 = scalar_lea.vmem %s3, 384
      %v4299 = vld [vmem:[%s4298] sm:$0xf]
      %v4300 = vld [vmem:[%s4298 + $0x4] sm:$0xf]
      %v4301 = vld [vmem:[%s4298 + $0x8] sm:$0xf]
      %v4302 = vld [vmem:[%s4298 + $0xc] sm:$0xf]
      %v4303 = vld [vmem:[%s4298 + $0x10] sm:$0xf]
      %v4304 = vld [vmem:[%s4298 + $0x14] sm:$0xf]
      %v4305 = vld [vmem:[%s4298 + $0x18] sm:$0xf]
      %v4306 = vld [vmem:[%s4298 + $0x1c] sm:$0xf]
      %v4307 = vld [vmem:[%s4298 + $0x20] sm:$0xf]
      %v4308 = vld [vmem:[%s4298 + $0x24] sm:$0xf]
      %v4309 = vld [vmem:[%s4298 + $0x28] sm:$0xf]
      %v4310 = vld [vmem:[%s4298 + $0x2c] sm:$0xf]
      %v4311 = vld [vmem:[%s4298 + $0x30] sm:$0xf]
      %v4312 = vld [vmem:[%s4298 + $0x34] sm:$0xf]
      %v4313 = vld [vmem:[%s4298 + $0x38] sm:$0xf]
      %v4314 = vld [vmem:[%s4298 + $0x3c] sm:$0xf]
      %v4315 = vld [vmem:[%s4298 + $0x40] sm:$0xf]
      %v4316 = vld [vmem:[%s4298 + $0x44] sm:$0xf]
      %v4317 = vld [vmem:[%s4298 + $0x48] sm:$0xf]
      %v4318 = vld [vmem:[%s4298 + $0x4c] sm:$0xf]
      %v4319 = vld [vmem:[%s4298 + $0x50] sm:$0xf]
      %v4320 = vld [vmem:[%s4298 + $0x54] sm:$0xf]
      %v4321 = vld [vmem:[%s4298 + $0x58] sm:$0xf]
      %v4322 = vld [vmem:[%s4298 + $0x5c] sm:$0xf]
      %v4323 = vld [vmem:[%s4298 + $0x60] sm:$0xf]
      %v4324 = vld [vmem:[%s4298 + $0x64] sm:$0xf]
      %v4325 = vld [vmem:[%s4298 + $0x68] sm:$0xf]
      %v4326 = vld [vmem:[%s4298 + $0x6c] sm:$0xf]
      %v4327 = vld [vmem:[%s4298 + $0x70] sm:$0xf]
      %v4328 = vld [vmem:[%s4298 + $0x74] sm:$0xf]
      %v4329 = vld [vmem:[%s4298 + $0x78] sm:$0xf]
      %v4330 = vld [vmem:[%s4298 + $0x7c] sm:$0xf]
      %v4331 = vld [vmem:[%s4298 + $0x80] sm:$0xf]
      %v4332 = vld [vmem:[%s4298 + $0x84] sm:$0xf]
      %v4333 = vld [vmem:[%s4298 + $0x88] sm:$0xf]
      %v4334 = vld [vmem:[%s4298 + $0x8c] sm:$0xf]
      %v4335 = vld [vmem:[%s4298 + $0x90] sm:$0xf]
      %v4336 = vld [vmem:[%s4298 + $0x94] sm:$0xf]
      %v4337 = vld [vmem:[%s4298 + $0x98] sm:$0xf]
      %v4338 = vld [vmem:[%s4298 + $0x9c] sm:$0xf]
      %v4339 = vld [vmem:[%s4298 + $0xa0] sm:$0xf]
      %v4340 = vld [vmem:[%s4298 + $0xa4] sm:$0xf]
      %v4341 = vld [vmem:[%s4298 + $0xa8] sm:$0xf]
      %v4342 = vld [vmem:[%s4298 + $0xac] sm:$0xf]
      %v4343 = vld [vmem:[%s4298 + $0xb0] sm:$0xf]
      %v4344 = vld [vmem:[%s4298 + $0xb4] sm:$0xf]
      %v4345 = vld [vmem:[%s4298 + $0xb8] sm:$0xf]
      %v4346 = vld [vmem:[%s4298 + $0xbc] sm:$0xf]
      %v4395 = vunpack.c.l.b16 %v4299
      %v4396 = vunpack.c.l.b16 %v4300
      %v4397 = vunpack.c.l.b16 %v4301
      %v4398 = vunpack.c.l.b16 %v4302
      %v4399 = vunpack.c.l.b16 %v4303
      %v4400 = vunpack.c.l.b16 %v4304
      %v4401 = vunpack.c.l.b16 %v4305
      %v4402 = vunpack.c.l.b16 %v4306
      %v4403 = vunpack.c.l.b16 %v4307
      %v4404 = vunpack.c.l.b16 %v4308
      %v4405 = vunpack.c.l.b16 %v4309
      %v4406 = vunpack.c.l.b16 %v4310
      %v4407 = vunpack.c.l.b16 %v4311
      %v4408 = vunpack.c.l.b16 %v4312
      %v4409 = vunpack.c.l.b16 %v4313
      %v4410 = vunpack.c.l.b16 %v4314
      %v4411 = vunpack.c.l.b16 %v4315
      %v4412 = vunpack.c.l.b16 %v4316
      %v4413 = vunpack.c.l.b16 %v4317
      %v4414 = vunpack.c.l.b16 %v4318
      %v4415 = vunpack.c.l.b16 %v4319
      %v4416 = vunpack.c.l.b16 %v4320
      %v4417 = vunpack.c.l.b16 %v4321
      %v4418 = vunpack.c.l.b16 %v4322
      %v4419 = vunpack.c.l.b16 %v4323
      %v4420 = vunpack.c.l.b16 %v4324
      %v4421 = vunpack.c.l.b16 %v4325
      %v4422 = vunpack.c.l.b16 %v4326
      %v4423 = vunpack.c.l.b16 %v4327
      %v4424 = vunpack.c.l.b16 %v4328
      %v4425 = vunpack.c.l.b16 %v4329
      %v4426 = vunpack.c.l.b16 %v4330
      %v4427 = vunpack.c.l.b16 %v4331
      %v4428 = vunpack.c.l.b16 %v4332
      %v4429 = vunpack.c.l.b16 %v4333
      %v4430 = vunpack.c.l.b16 %v4334
      %v4431 = vunpack.c.l.b16 %v4335
      %v4432 = vunpack.c.l.b16 %v4336
      %v4433 = vunpack.c.l.b16 %v4337
      %v4434 = vunpack.c.l.b16 %v4338
      %v4435 = vunpack.c.l.b16 %v4339
      %v4436 = vunpack.c.l.b16 %v4340
      %v4437 = vunpack.c.l.b16 %v4341
      %v4438 = vunpack.c.l.b16 %v4342
      %v4439 = vunpack.c.l.b16 %v4343
      %v4440 = vunpack.c.l.b16 %v4344
      %v4441 = vunpack.c.l.b16 %v4345
      %v4442 = vunpack.c.l.b16 %v4346
      %v4443 = vpack.c.b16 %v4396, %v4395
      %v4444 = vpack.c.b16 %v4398, %v4397
      %v4445 = vpack.c.b16 %v4400, %v4399
      %v4446 = vpack.c.b16 %v4402, %v4401
      %v4447 = vpack.c.b16 %v4404, %v4403
      %v4448 = vpack.c.b16 %v4406, %v4405
      %v4449 = vpack.c.b16 %v4408, %v4407
      %v4450 = vpack.c.b16 %v4410, %v4409
      %v4451 = vpack.c.b16 %v4412, %v4411
      %v4452 = vpack.c.b16 %v4414, %v4413
      %v4453 = vpack.c.b16 %v4416, %v4415
      %v4454 = vpack.c.b16 %v4418, %v4417
      %v4455 = vpack.c.b16 %v4420, %v4419
      %v4456 = vpack.c.b16 %v4422, %v4421
      %v4457 = vpack.c.b16 %v4424, %v4423
      %v4458 = vpack.c.b16 %v4426, %v4425
      %v4459 = vpack.c.b16 %v4428, %v4427
      %v4460 = vpack.c.b16 %v4430, %v4429
      %v4461 = vpack.c.b16 %v4432, %v4431
      %v4462 = vpack.c.b16 %v4434, %v4433
      %v4463 = vpack.c.b16 %v4436, %v4435
      %v4464 = vpack.c.b16 %v4438, %v4437
      %v4465 = vpack.c.b16 %v4440, %v4439
      %v4466 = vpack.c.b16 %v4442, %v4441
      %4491 = vmatprep.subr.bf16.mxu0 0
      %4492 = vmatpush1.bf16.msra.mxu0 %v4443
      %4493 = vmatprep.subr.bf16.mxu0 0
      %4494 = vmatpush1.bf16.msra.mxu0 %v4444
      %4495 = vmatprep.subr.bf16.mxu0 0
      %4496 = vmatpush1.bf16.msra.mxu0 %v4445
      %4497 = vmatprep.subr.bf16.mxu0 0
      %4498 = vmatpush1.bf16.msra.mxu0 %v4446
      %4499 = vmatprep.subr.bf16.mxu0 0
      %4500 = vmatpush1.bf16.msra.mxu0 %v4447
      %4501 = vmatprep.subr.bf16.mxu0 0
      %4502 = vmatpush1.bf16.msra.mxu0 %v4448
      %4503 = vmatprep.subr.bf16.mxu0 0
      %4504 = vmatpush1.bf16.msra.mxu0 %v4449
      %4505 = vmatprep.subr.bf16.mxu0 0
      %4506 = vmatpush1.bf16.msra.mxu0 %v4450
      %4507 = vmatprep.subr.bf16.mxu0 0
      %4508 = vmatpush1.bf16.msra.mxu0 %v4451
      %4509 = vmatprep.subr.bf16.mxu0 0
      %4510 = vmatpush1.bf16.msra.mxu0 %v4452
      %4511 = vmatprep.subr.bf16.mxu0 0
      %4512 = vmatpush1.bf16.msra.mxu0 %v4453
      %4513 = vmatprep.subr.bf16.mxu0 0
      %4514 = vmatpush1.bf16.msra.mxu0 %v4454
      %4515 = vmatprep.subr.bf16.mxu0 0
      %4516 = vmatpush1.bf16.msra.mxu0 %v4455
      %4517 = vmatprep.subr.bf16.mxu0 0
      %4518 = vmatpush1.bf16.msra.mxu0 %v4456
      %4519 = vmatprep.subr.bf16.mxu0 0
      %4520 = vmatpush1.bf16.msra.mxu0 %v4457
      %4521 = vmatprep.subr.bf16.mxu0 0
      %4522 = vmatpush1.bf16.msra.mxu0 %v4458
      %4523 = vmatprep.mubr.bf16.mxu0 %v4251
      %4524 = vmatmul.mubr.bf16.gmra.mrb[0].mxu0 %v4250
      %v4525 = vpop.f32.mrb[0].mxu0
      %v4526 = vadd.f32 0.0, %v4525
      %v4527 = vpop.f32.mrb[0].mxu0
      %v4528 = vpop.f32.mrb[0].mxu0
      %v4529 = vadd.f32 0.0, %v4528
      %v4530 = vpop.f32.mrb[0].mxu0
      %4531 = vmatprep.mubr.bf16.mxu0 %v4254
      %4532 = vmatmul.mubr.bf16.gmra.mrb[0].mxu0 %v4253
      %v4533 = vpop.f32.mrb[0].mxu0
      %v4534 = vadd.f32 0.0, %v4533
      %v4535 = vpop.f32.mrb[0].mxu0
      %v4536 = vpop.f32.mrb[0].mxu0
      %v4537 = vadd.f32 0.0, %v4536
      %v4538 = vpop.f32.mrb[0].mxu0
      %4539 = vmatprep.mubr.bf16.mxu0 %v4257
      %4540 = vmatmul.mubr.bf16.gmra.mrb[0].mxu0 %v4256
      %v4541 = vpop.f32.mrb[0].mxu0
      %v4542 = vadd.f32 0.0, %v4541
      %v4543 = vpop.f32.mrb[0].mxu0
      %v4544 = vpop.f32.mrb[0].mxu0
      %v4545 = vadd.f32 0.0, %v4544
      %v4546 = vpop.f32.mrb[0].mxu0
      %4547 = vmatprep.mubr.bf16.mxu0 %v4260
      %4548 = vmatmul.mubr.bf16.gmra.mrb[0].mxu0 %v4259
      %v4549 = vpop.f32.mrb[0].mxu0
      %v4550 = vadd.f32 0.0, %v4549
      %v4551 = vpop.f32.mrb[0].mxu0
      %v4552 = vpop.f32.mrb[0].mxu0
      %v4553 = vadd.f32 0.0, %v4552
      %v4554 = vpop.f32.mrb[0].mxu0
      %4555 = vmatprep.mubr.bf16.mxu0 %v4263
      %4556 = vmatmul.mubr.bf16.gmra.mrb[0].mxu0 %v4262
      %v4557 = vpop.f32.mrb[0].mxu0
      %v4558 = vadd.f32 0.0, %v4557
      %v4559 = vpop.f32.mrb[0].mxu0
      %v4560 = vpop.f32.mrb[0].mxu0
      %v4561 = vadd.f32 0.0, %v4560
      %v4562 = vpop.f32.mrb[0].mxu0
      %4563 = vmatprep.mubr.bf16.mxu0 %v4266
      %4564 = vmatmul.mubr.bf16.gmra.mrb[0].mxu0 %v4265
      %v4565 = vpop.f32.mrb[0].mxu0
      %v4566 = vadd.f32 0.0, %v4565
      %v4567 = vpop.f32.mrb[0].mxu0
      %v4568 = vpop.f32.mrb[0].mxu0
      %v4569 = vadd.f32 0.0, %v4568
      %v4570 = vpop.f32.mrb[0].mxu0
      %4571 = vmatprep.mubr.bf16.mxu0 %v4269
      %4572 = vmatmul.mubr.bf16.gmra.mrb[0].mxu0 %v4268
      %v4573 = vpop.f32.mrb[0].mxu0
      %v4574 = vadd.f32 0.0, %v4573
      %v4575 = vpop.f32.mrb[0].mxu0
      %v4576 = vpop.f32.mrb[0].mxu0
      %v4577 = vadd.f32 0.0, %v4576
      %v4578 = vpop.f32.mrb[0].mxu0
      %4579 = vmatprep.mubr.bf16.mxu0 %v4272
      %4580 = vmatmul.mubr.bf16.gmra.mrb[0].mxu0 %v4271
      %v4581 = vpop.f32.mrb[0].mxu0
      %v4582 = vadd.f32 0.0, %v4581
      %v4583 = vpop.f32.mrb[0].mxu0
      %v4584 = vpop.f32.mrb[0].mxu0
      %v4585 = vadd.f32 0.0, %v4584
      %v4586 = vpop.f32.mrb[0].mxu0
      %4587 = vmatprep.mubr.bf16.mxu0 %v4275
      %4588 = vmatmul.mubr.bf16.gmra.mrb[0].mxu0 %v4274
      %v4589 = vpop.f32.mrb[0].mxu0
      %v4590 = vadd.f32 0.0, %v4589
      %v4591 = vpop.f32.mrb[0].mxu0
      %v4592 = vpop.f32.mrb[0].mxu0
      %v4593 = vadd.f32 0.0, %v4592
      %v4594 = vpop.f32.mrb[0].mxu0
      %4595 = vmatprep.mubr.bf16.mxu0 %v4278
      %4596 = vmatmul.mubr.bf16.gmra.mrb[0].mxu0 %v4277
      %v4597 = vpop.f32.mrb[0].mxu0
      %v4598 = vadd.f32 0.0, %v4597
      %v4599 = vpop.f32.mrb[0].mxu0
      %v4600 = vpop.f32.mrb[0].mxu0
      %v4601 = vadd.f32 0.0, %v4600
      %v4602 = vpop.f32.mrb[0].mxu0
      %4603 = vmatprep.mubr.bf16.mxu0 %v4281
      %4604 = vmatmul.mubr.bf16.gmra.mrb[0].mxu0 %v4280
      %v4605 = vpop.f32.mrb[0].mxu0
      %v4606 = vadd.f32 0.0, %v4605
      %v4607 = vpop.f32.mrb[0].mxu0
      %v4608 = vpop.f32.mrb[0].mxu0
      %v4609 = vadd.f32 0.0, %v4608
      %v4610 = vpop.f32.mrb[0].mxu0
      %4611 = vmatprep.mubr.bf16.mxu0 %v4284
      %4612 = vmatmul.mubr.bf16.gmra.mrb[0].mxu0 %v4283
      %v4613 = vpop.f32.mrb[0].mxu0
      %v4614 = vadd.f32 0.0, %v4613
      %v4615 = vpop.f32.mrb[0].mxu0
      %v4616 = vpop.f32.mrb[0].mxu0
      %v4617 = vadd.f32 0.0, %v4616
      %v4618 = vpop.f32.mrb[0].mxu0
      %4619 = vmatprep.mubr.bf16.mxu0 %v4287
      %4620 = vmatmul.mubr.bf16.gmra.mrb[0].mxu0 %v4286
      %v4621 = vpop.f32.mrb[0].mxu0
      %v4622 = vadd.f32 0.0, %v4621
      %v4623 = vpop.f32.mrb[0].mxu0
      %v4624 = vpop.f32.mrb[0].mxu0
      %v4625 = vadd.f32 0.0, %v4624
      %v4626 = vpop.f32.mrb[0].mxu0
      %4627 = vmatprep.mubr.bf16.mxu0 %v4290
      %4628 = vmatmul.mubr.bf16.gmra.mrb[0].mxu0 %v4289
      %v4629 = vpop.f32.mrb[0].mxu0
      %v4630 = vadd.f32 0.0, %v4629
      %v4631 = vpop.f32.mrb[0].mxu0
      %v4632 = vpop.f32.mrb[0].mxu0
      %v4633 = vadd.f32 0.0, %v4632
      %v4634 = vpop.f32.mrb[0].mxu0
      %4635 = vmatprep.mubr.bf16.mxu0 %v4293
      %4636 = vmatmul.mubr.bf16.gmra.mrb[0].mxu0 %v4292
      %v4637 = vpop.f32.mrb[0].mxu0
      %v4638 = vadd.f32 0.0, %v4637
      %v4639 = vpop.f32.mrb[0].mxu0
      %v4640 = vpop.f32.mrb[0].mxu0
      %v4641 = vadd.f32 0.0, %v4640
      %v4642 = vpop.f32.mrb[0].mxu0
      %4643 = vmatprep.mubr.bf16.mxu0 %v4296
      %4644 = vmatmul.mubr.bf16.gmra.mrb[0].mxu0 %v4295
      %v4645 = vpop.f32.mrb[0].mxu0
      %v4646 = vadd.f32 0.0, %v4645
      %v4647 = vpop.f32.mrb[0].mxu0
      %v4648 = vpop.f32.mrb[0].mxu0
      %v4649 = vadd.f32 0.0, %v4648
      %v4650 = vpop.f32.mrb[0].mxu0
      %4651 = vdwg.mxu0
      %4652 = vmatprep.subr.bf16.mxu0 0
      %4653 = vmatpush1.bf16.msra.mxu0 %v4459
      %4654 = vmatprep.subr.bf16.mxu0 0
      %4655 = vmatpush1.bf16.msra.mxu0 %v4460
      %4656 = vmatprep.subr.bf16.mxu0 0
      %4657 = vmatpush1.bf16.msra.mxu0 %v4461
      %4658 = vmatprep.subr.bf16.mxu0 0
      %4659 = vmatpush1.bf16.msra.mxu0 %v4462
      %4660 = vmatprep.subr.bf16.mxu0 0
      %4661 = vmatpush1.bf16.msra.mxu0 %v4463
      %4662 = vmatprep.subr.bf16.mxu0 0
      %4663 = vmatpush1.bf16.msra.mxu0 %v4464
      %4664 = vmatprep.subr.bf16.mxu0 0
      %4665 = vmatpush1.bf16.msra.mxu0 %v4465
      %4666 = vmatprep.subr.bf16.mxu0 0
      %4667 = vmatpush1.bf16.msra.mxu0 %v4466
      %4668 = vmatprep.subr.bf16.mxu0 0
      %4669 = vmatpush1.bf16.msra.mxu0 0
      %4670 = vmatprep.subr.bf16.mxu0 0
      %4671 = vmatpush1.bf16.msra.mxu0 0
      %4672 = vmatprep.subr.bf16.mxu0 0
      %4673 = vmatpush1.bf16.msra.mxu0 0
      %4674 = vmatprep.subr.bf16.mxu0 0
      %4675 = vmatpush1.bf16.msra.mxu0 0
      %4676 = vmatprep.subr.bf16.mxu0 0
      %4677 = vmatpush1.bf16.msra.mxu0 0
      %4678 = vmatprep.subr.bf16.mxu0 0
      %4679 = vmatpush1.bf16.msra.mxu0 0
      %4680 = vmatprep.subr.bf16.mxu0 0
      %4681 = vmatpush1.bf16.msra.mxu0 0
      %4682 = vmatprep.subr.bf16.mxu0 0
      %4683 = vmatpush1.bf16.msra.mxu0 0
      %4684 = vmatprep.mubr.bf16.mxu0 0
      %4685 = vmatmul.mubr.bf16.gmra.mrb[0].mxu0 %v4252
      %v4686 = vpop.f32.mrb[0].mxu0
      %v4687 = vadd.f32 %v4526, %v4686
      %v4688 = vpop.f32.mrb[0].mxu0
      %v4689 = vpop.f32.mrb[0].mxu0
      %v4690 = vadd.f32 %v4529, %v4689
      %v4691 = vpop.f32.mrb[0].mxu0
      %4692 = vmatprep.mubr.bf16.mxu0 0
      %4693 = vmatmul.mubr.bf16.gmra.mrb[0].mxu0 %v4255
      %v4694 = vpop.f32.mrb[0].mxu0
      %v4695 = vadd.f32 %v4534, %v4694
      %v4696 = vpop.f32.mrb[0].mxu0
      %v4697 = vpop.f32.mrb[0].mxu0
      %v4698 = vadd.f32 %v4537, %v4697
      %v4699 = vpop.f32.mrb[0].mxu0
      %4700 = vmatprep.mubr.bf16.mxu0 0
      %4701 = vmatmul.mubr.bf16.gmra.mrb[0].mxu0 %v4258
      %v4702 = vpop.f32.mrb[0].mxu0
      %v4703 = vadd.f32 %v4542, %v4702
      %v4704 = vpop.f32.mrb[0].mxu0
      %v4705 = vpop.f32.mrb[0].mxu0
      %v4706 = vadd.f32 %v4545, %v4705
      %v4707 = vpop.f32.mrb[0].mxu0
      %4708 = vmatprep.mubr.bf16.mxu0 0
      %4709 = vmatmul.mubr.bf16.gmra.mrb[0].mxu0 %v4261
      %v4710 = vpop.f32.mrb[0].mxu0
      %v4711 = vadd.f32 %v4550, %v4710
      %v4712 = vpop.f32.mrb[0].mxu0
      %v4713 = vpop.f32.mrb[0].mxu0
      %v4714 = vadd.f32 %v4553, %v4713
      %v4715 = vpop.f32.mrb[0].mxu0
      %4716 = vmatprep.mubr.bf16.mxu0 0
      %4717 = vmatmul.mubr.bf16.gmra.mrb[0].mxu0 %v4264
      %v4718 = vpop.f32.mrb[0].mxu0
      %v4719 = vadd.f32 %v4558, %v4718
      %v4720 = vpop.f32.mrb[0].mxu0
      %v4721 = vpop.f32.mrb[0].mxu0
      %v4722 = vadd.f32 %v4561, %v4721
      %v4723 = vpop.f32.mrb[0].mxu0
      %4724 = vmatprep.mubr.bf16.mxu0 0
      %4725 = vmatmul.mubr.bf16.gmra.mrb[0].mxu0 %v4267
      %v4726 = vpop.f32.mrb[0].mxu0
      %v4727 = vadd.f32 %v4566, %v4726
      %v4728 = vpop.f32.mrb[0].mxu0
      %v4729 = vpop.f32.mrb[0].mxu0
      %v4730 = vadd.f32 %v4569, %v4729
      %v4731 = vpop.f32.mrb[0].mxu0
      %4732 = vmatprep.mubr.bf16.mxu0 0
      %4733 = vmatmul.mubr.bf16.gmra.mrb[0].mxu0 %v4270
      %v4734 = vpop.f32.mrb[0].mxu0
      %v4735 = vadd.f32 %v4574, %v4734
      %v4736 = vpop.f32.mrb[0].mxu0
      %v4737 = vpop.f32.mrb[0].mxu0
      %v4738 = vadd.f32 %v4577, %v4737
      %v4739 = vpop.f32.mrb[0].mxu0
      %4740 = vmatprep.mubr.bf16.mxu0 0
      %4741 = vmatmul.mubr.bf16.gmra.mrb[0].mxu0 %v4273
      %v4742 = vpop.f32.mrb[0].mxu0
      %v4743 = vadd.f32 %v4582, %v4742
      %v4744 = vpop.f32.mrb[0].mxu0
      %v4745 = vpop.f32.mrb[0].mxu0
      %v4746 = vadd.f32 %v4585, %v4745
      %v4747 = vpop.f32.mrb[0].mxu0
      %4748 = vmatprep.mubr.bf16.mxu0 0
      %4749 = vmatmul.mubr.bf16.gmra.mrb[0].mxu0 %v4276
      %v4750 = vpop.f32.mrb[0].mxu0
      %v4751 = vadd.f32 %v4590, %v4750
      %v4752 = vpop.f32.mrb[0].mxu0
      %v4753 = vpop.f32.mrb[0].mxu0
      %v4754 = vadd.f32 %v4593, %v4753
      %v4755 = vpop.f32.mrb[0].mxu0
      %4756 = vmatprep.mubr.bf16.mxu0 0
      %4757 = vmatmul.mubr.bf16.gmra.mrb[0].mxu0 %v4279
      %v4758 = vpop.f32.mrb[0].mxu0
      %v4759 = vadd.f32 %v4598, %v4758
      %v4760 = vpop.f32.mrb[0].mxu0
      %v4761 = vpop.f32.mrb[0].mxu0
      %v4762 = vadd.f32 %v4601, %v4761
      %v4763 = vpop.f32.mrb[0].mxu0
      %4764 = vmatprep.mubr.bf16.mxu0 0
      %4765 = vmatmul.mubr.bf16.gmra.mrb[0].mxu0 %v4282
      %v4766 = vpop.f32.mrb[0].mxu0
      %v4767 = vadd.f32 %v4606, %v4766
      %v4768 = vpop.f32.mrb[0].mxu0
      %v4769 = vpop.f32.mrb[0].mxu0
      %v4770 = vadd.f32 %v4609, %v4769
      %v4771 = vpop.f32.mrb[0].mxu0
      %4772 = vmatprep.mubr.bf16.mxu0 0
      %4773 = vmatmul.mubr.bf16.gmra.mrb[0].mxu0 %v4285
      %v4774 = vpop.f32.mrb[0].mxu0
      %v4775 = vadd.f32 %v4614, %v4774
      %v4776 = vpop.f32.mrb[0].mxu0
      %v4777 = vpop.f32.mrb[0].mxu0
      %v4778 = vadd.f32 %v4617, %v4777
      %v4779 = vpop.f32.mrb[0].mxu0
      %4780 = vmatprep.mubr.bf16.mxu0 0
      %4781 = vmatmul.mubr.bf16.gmra.mrb[0].mxu0 %v4288
      %v4782 = vpop.f32.mrb[0].mxu0
      %v4783 = vadd.f32 %v4622, %v4782
      %v4784 = vpop.f32.mrb[0].mxu0
      %v4785 = vpop.f32.mrb[0].mxu0
      %v4786 = vadd.f32 %v4625, %v4785
      %v4787 = vpop.f32.mrb[0].mxu0
      %4788 = vmatprep.mubr.bf16.mxu0 0
      %4789 = vmatmul.mubr.bf16.gmra.mrb[0].mxu0 %v4291
      %v4790 = vpop.f32.mrb[0].mxu0
      %v4791 = vadd.f32 %v4630, %v4790
      %v4792 = vpop.f32.mrb[0].mxu0
      %v4793 = vpop.f32.mrb[0].mxu0
      %v4794 = vadd.f32 %v4633, %v4793
      %v4795 = vpop.f32.mrb[0].mxu0
      %4796 = vmatprep.mubr.bf16.mxu0 0
      %4797 = vmatmul.mubr.bf16.gmra.mrb[0].mxu0 %v4294
      %v4798 = vpop.f32.mrb[0].mxu0
      %v4799 = vadd.f32 %v4638, %v4798
      %v4800 = vpop.f32.mrb[0].mxu0
      %v4801 = vpop.f32.mrb[0].mxu0
      %v4802 = vadd.f32 %v4641, %v4801
      %v4803 = vpop.f32.mrb[0].mxu0
      %4804 = vmatprep.mubr.bf16.mxu0 0
      %4805 = vmatmul.mubr.bf16.gmra.mrb[0].mxu0 %v4297
      %v4806 = vpop.f32.mrb[0].mxu0
      %v4807 = vadd.f32 %v4646, %v4806
      %v4808 = vpop.f32.mrb[0].mxu0
      %v4809 = vpop.f32.mrb[0].mxu0
      %v4810 = vadd.f32 %v4649, %v4809
      %v4811 = vpop.f32.mrb[0].mxu0
      %4812 = vdwg.mxu0
      %v4813 = vld [vmem:[#allocation3] sm:$0xff]
      %v4814 = vld [vmem:[#allocation3 + $0x8] sm:$0xff]
      %v4815 = vld [vmem:[#allocation3 + $0x10] sm:$0xff]
      %v4816 = vld [vmem:[#allocation3 + $0x18] sm:$0xff]
      %v4817 = vld [vmem:[#allocation3 + $0x20] sm:$0xff]
      %v4818 = vld [vmem:[#allocation3 + $0x28] sm:$0xff]
      %v4819 = vld [vmem:[#allocation3 + $0x30] sm:$0xff]
      %v4820 = vld [vmem:[#allocation3 + $0x38] sm:$0xff]
      %v4821 = vld [vmem:[#allocation3 + $0x40] sm:$0xff]
      %v4822 = vld [vmem:[#allocation3 + $0x48] sm:$0xff]
      %v4823 = vld [vmem:[#allocation3 + $0x50] sm:$0xff]
      %v4824 = vld [vmem:[#allocation3 + $0x58] sm:$0xff]
      %v4825 = vld [vmem:[#allocation3 + $0x60] sm:$0xff]
      %v4826 = vld [vmem:[#allocation3 + $0x68] sm:$0xff]
      %v4827 = vld [vmem:[#allocation3 + $0x70] sm:$0xff]
      %v4828 = vld [vmem:[#allocation3 + $0x78] sm:$0xff]
      %v4829 = vld [vmem:[#allocation3 + $0x80] sm:$0xff]
      %v4830 = vld [vmem:[#allocation3 + $0x88] sm:$0xff]
      %v4831 = vld [vmem:[#allocation3 + $0x90] sm:$0xff]
      %v4832 = vld [vmem:[#allocation3 + $0x98] sm:$0xff]
      %v4833 = vld [vmem:[#allocation3 + $0xa0] sm:$0xff]
      %v4834 = vld [vmem:[#allocation3 + $0xa8] sm:$0xff]
      %v4835 = vld [vmem:[#allocation3 + $0xb0] sm:$0xff]
      %v4836 = vld [vmem:[#allocation3 + $0xb8] sm:$0xff]
      %v4837 = vld [vmem:[#allocation3 + $0xc0] sm:$0xff]
      %v4838 = vld [vmem:[#allocation3 + $0xc8] sm:$0xff]
      %v4839 = vld [vmem:[#allocation3 + $0xd0] sm:$0xff]
      %v4840 = vld [vmem:[#allocation3 + $0xd8] sm:$0xff]
      %v4841 = vld [vmem:[#allocation3 + $0xe0] sm:$0xff]
      %v4842 = vld [vmem:[#allocation3 + $0xe8] sm:$0xff]
      %v4843 = vld [vmem:[#allocation3 + $0xf0] sm:$0xff]
      %v4844 = vld [vmem:[#allocation3 + $0xf8] sm:$0xff]
      %v4845 = vadd.f32 %v4813, %v4687
      %v4846 = vadd.f32 %v4814, %v4690
      %v4847 = vadd.f32 %v4815, %v4695
      %v4848 = vadd.f32 %v4816, %v4698
      %v4849 = vadd.f32 %v4817, %v4703
      %v4850 = vadd.f32 %v4818, %v4706
      %v4851 = vadd.f32 %v4819, %v4711
      %v4852 = vadd.f32 %v4820, %v4714
      %v4853 = vadd.f32 %v4821, %v4719
      %v4854 = vadd.f32 %v4822, %v4722
      %v4855 = vadd.f32 %v4823, %v4727
      %v4856 = vadd.f32 %v4824, %v4730
      %v4857 = vadd.f32 %v4825, %v4735
      %v4858 = vadd.f32 %v4826, %v4738
      %v4859 = vadd.f32 %v4827, %v4743
      %v4860 = vadd.f32 %v4828, %v4746
      %v4861 = vadd.f32 %v4829, %v4751
      %v4862 = vadd.f32 %v4830, %v4754
      %v4863 = vadd.f32 %v4831, %v4759
      %v4864 = vadd.f32 %v4832, %v4762
      %v4865 = vadd.f32 %v4833, %v4767
      %v4866 = vadd.f32 %v4834, %v4770
      %v4867 = vadd.f32 %v4835, %v4775
      %v4868 = vadd.f32 %v4836, %v4778
      %v4869 = vadd.f32 %v4837, %v4783
      %v4870 = vadd.f32 %v4838, %v4786
      %v4871 = vadd.f32 %v4839, %v4791
      %v4872 = vadd.f32 %v4840, %v4794
      %v4873 = vadd.f32 %v4841, %v4799
      %v4874 = vadd.f32 %v4842, %v4802
      %v4875 = vadd.f32 %v4843, %v4807
      %v4876 = vadd.f32 %v4844, %v4810
      %4877 = vst [vmem:[#allocation3] sm:$0xff] %v4845
      %4878 = vst [vmem:[#allocation3 + $0x8] sm:$0xff] %v4846
      %4879 = vst [vmem:[#allocation3 + $0x10] sm:$0xff] %v4847
      %4880 = vst [vmem:[#allocation3 + $0x18] sm:$0xff] %v4848
      %4881 = vst [vmem:[#allocation3 + $0x20] sm:$0xff] %v4849
      %4882 = vst [vmem:[#allocation3 + $0x28] sm:$0xff] %v4850
      %4883 = vst [vmem:[#allocation3 + $0x30] sm:$0xff] %v4851
      %4884 = vst [vmem:[#allocation3 + $0x38] sm:$0xff] %v4852
      %4885 = vst [vmem:[#allocation3 + $0x40] sm:$0xff] %v4853
      %4886 = vst [vmem:[#allocation3 + $0x48] sm:$0xff] %v4854
      %4887 = vst [vmem:[#allocation3 + $0x50] sm:$0xff] %v4855
      %4888 = vst [vmem:[#allocation3 + $0x58] sm:$0xff] %v4856
      %4889 = vst [vmem:[#allocation3 + $0x60] sm:$0xff] %v4857
      %4890 = vst [vmem:[#allocation3 + $0x68] sm:$0xff] %v4858
      %4891 = vst [vmem:[#allocation3 + $0x70] sm:$0xff] %v4859
      %4892 = vst [vmem:[#allocation3 + $0x78] sm:$0xff] %v4860
      %4893 = vst [vmem:[#allocation3 + $0x80] sm:$0xff] %v4861
      %4894 = vst [vmem:[#allocation3 + $0x88] sm:$0xff] %v4862
      %4895 = vst [vmem:[#allocation3 + $0x90] sm:$0xff] %v4863
      %4896 = vst [vmem:[#allocation3 + $0x98] sm:$0xff] %v4864
      %4897 = vst [vmem:[#allocation3 + $0xa0] sm:$0xff] %v4865
      %4898 = vst [vmem:[#allocation3 + $0xa8] sm:$0xff] %v4866
      %4899 = vst [vmem:[#allocation3 + $0xb0] sm:$0xff] %v4867
      %4900 = vst [vmem:[#allocation3 + $0xb8] sm:$0xff] %v4868
      %4901 = vst [vmem:[#allocation3 + $0xc0] sm:$0xff] %v4869
      %4902 = vst [vmem:[#allocation3 + $0xc8] sm:$0xff] %v4870
      %4903 = vst [vmem:[#allocation3 + $0xd0] sm:$0xff] %v4871
      %4904 = vst [vmem:[#allocation3 + $0xd8] sm:$0xff] %v4872
      %4905 = vst [vmem:[#allocation3 + $0xe0] sm:$0xff] %v4873
      %4906 = vst [vmem:[#allocation3 + $0xe8] sm:$0xff] %v4874
      %4907 = vst [vmem:[#allocation3 + $0xf0] sm:$0xff] %v4875
      %4908 = vst [vmem:[#allocation3 + $0xf8] sm:$0xff] %v4876
      %v4909 = vld [vmem:[#allocation3] sm:$0xff]
      %v4910 = vld [vmem:[#allocation3 + $0x8] sm:$0xff]
      %v4911 = vld [vmem:[#allocation3 + $0x10] sm:$0xff]
      %v4912 = vld [vmem:[#allocation3 + $0x18] sm:$0xff]
      %v4913 = vld [vmem:[#allocation3 + $0x20] sm:$0xff]
      %v4914 = vld [vmem:[#allocation3 + $0x28] sm:$0xff]
      %v4915 = vld [vmem:[#allocation3 + $0x30] sm:$0xff]
      %v4916 = vld [vmem:[#allocation3 + $0x38] sm:$0xff]
      %v4917 = vld [vmem:[#allocation3 + $0x40] sm:$0xff]
      %v4918 = vld [vmem:[#allocation3 + $0x48] sm:$0xff]
      %v4919 = vld [vmem:[#allocation3 + $0x50] sm:$0xff]
      %v4920 = vld [vmem:[#allocation3 + $0x58] sm:$0xff]
      %v4921 = vld [vmem:[#allocation3 + $0x60] sm:$0xff]
      %v4922 = vld [vmem:[#allocation3 + $0x68] sm:$0xff]
      %v4923 = vld [vmem:[#allocation3 + $0x70] sm:$0xff]
      %v4924 = vld [vmem:[#allocation3 + $0x78] sm:$0xff]
      %v4925 = vld [vmem:[#allocation3 + $0x80] sm:$0xff]
      %v4926 = vld [vmem:[#allocation3 + $0x88] sm:$0xff]
      %v4927 = vld [vmem:[#allocation3 + $0x90] sm:$0xff]
      %v4928 = vld [vmem:[#allocation3 + $0x98] sm:$0xff]
      %v4929 = vld [vmem:[#allocation3 + $0xa0] sm:$0xff]
      %v4930 = vld [vmem:[#allocation3 + $0xa8] sm:$0xff]
      %v4931 = vld [vmem:[#allocation3 + $0xb0] sm:$0xff]
      %v4932 = vld [vmem:[#allocation3 + $0xb8] sm:$0xff]
      %v4933 = vld [vmem:[#allocation3 + $0xc0] sm:$0xff]
      %v4934 = vld [vmem:[#allocation3 + $0xc8] sm:$0xff]
      %v4935 = vld [vmem:[#allocation3 + $0xd0] sm:$0xff]
      %v4936 = vld [vmem:[#allocation3 + $0xd8] sm:$0xff]
      %v4937 = vld [vmem:[#allocation3 + $0xe0] sm:$0xff]
      %v4938 = vld [vmem:[#allocation3 + $0xe8] sm:$0xff]
      %v4939 = vld [vmem:[#allocation3 + $0xf0] sm:$0xff]
      %v4940 = vld [vmem:[#allocation3 + $0xf8] sm:$0xff]
      %v4941 = vld [vmem:[%s4] sm:$0x1]
      %v4943 = vlaneseq
      %v4944 = vshrl.u32 %v4943, 7
      %v4945 = vsub.s32 0, %v4944
      %v4946 = vrot.slane %v4941, %v4945
      %v4948 = vadd.f32 %v4909, %v4946
      %v4949 = vadd.f32 %v4910, %v4946
      %v4950 = vadd.f32 %v4911, %v4946
      %v4951 = vadd.f32 %v4912, %v4946
      %v4952 = vadd.f32 %v4913, %v4946
      %v4953 = vadd.f32 %v4914, %v4946
      %v4954 = vadd.f32 %v4915, %v4946
      %v4955 = vadd.f32 %v4916, %v4946
      %v4956 = vadd.f32 %v4917, %v4946
      %v4957 = vadd.f32 %v4918, %v4946
      %v4958 = vadd.f32 %v4919, %v4946
      %v4959 = vadd.f32 %v4920, %v4946
      %v4960 = vadd.f32 %v4921, %v4946
      %v4961 = vadd.f32 %v4922, %v4946
      %v4962 = vadd.f32 %v4923, %v4946
      %v4963 = vadd.f32 %v4924, %v4946
      %v4964 = vadd.f32 %v4925, %v4946
      %v4965 = vadd.f32 %v4926, %v4946
      %v4966 = vadd.f32 %v4927, %v4946
      %v4967 = vadd.f32 %v4928, %v4946
      %v4968 = vadd.f32 %v4929, %v4946
      %v4969 = vadd.f32 %v4930, %v4946
      %v4970 = vadd.f32 %v4931, %v4946
      %v4971 = vadd.f32 %v4932, %v4946
      %v4972 = vadd.f32 %v4933, %v4946
      %v4973 = vadd.f32 %v4934, %v4946
      %v4974 = vadd.f32 %v4935, %v4946
      %v4975 = vadd.f32 %v4936, %v4946
      %v4976 = vadd.f32 %v4937, %v4946
      %v4977 = vadd.f32 %v4938, %v4946
      %v4978 = vadd.f32 %v4939, %v4946
      %v4979 = vadd.f32 %v4940, %v4946
      %v4980 = vld [vmem:[%s219] sm:$0xff]
      %v4981 = vld [vmem:[%s219 + $0x8] sm:$0xff]
      %v4982 = vld [vmem:[%s219 + $0x10] sm:$0xff]
      %v4983 = vld [vmem:[%s219 + $0x18] sm:$0xff]
      %v4984 = vld [vmem:[%s219 + $0x20] sm:$0xff]
      %v4985 = vld [vmem:[%s219 + $0x28] sm:$0xff]
      %v4986 = vld [vmem:[%s219 + $0x30] sm:$0xff]
      %v4987 = vld [vmem:[%s219 + $0x38] sm:$0xff]
      %v4988 = vld [vmem:[%s219 + $0x40] sm:$0xff]
      %v4989 = vld [vmem:[%s219 + $0x48] sm:$0xff]
      %v4990 = vld [vmem:[%s219 + $0x50] sm:$0xff]
      %v4991 = vld [vmem:[%s219 + $0x58] sm:$0xff]
      %v4992 = vld [vmem:[%s219 + $0x60] sm:$0xff]
      %v4993 = vld [vmem:[%s219 + $0x68] sm:$0xff]
      %v4994 = vld [vmem:[%s219 + $0x70] sm:$0xff]
      %v4995 = vld [vmem:[%s219 + $0x78] sm:$0xff]
      %v4996 = vld [vmem:[%s219 + $0x80] sm:$0xff]
      %v4997 = vld [vmem:[%s219 + $0x88] sm:$0xff]
      %v4998 = vld [vmem:[%s219 + $0x90] sm:$0xff]
      %v4999 = vld [vmem:[%s219 + $0x98] sm:$0xff]
      %v5000 = vld [vmem:[%s219 + $0xa0] sm:$0xff]
      %v5001 = vld [vmem:[%s219 + $0xa8] sm:$0xff]
      %v5002 = vld [vmem:[%s219 + $0xb0] sm:$0xff]
      %v5003 = vld [vmem:[%s219 + $0xb8] sm:$0xff]
      %v5004 = vld [vmem:[%s219 + $0xc0] sm:$0xff]
      %v5005 = vld [vmem:[%s219 + $0xc8] sm:$0xff]
      %v5006 = vld [vmem:[%s219 + $0xd0] sm:$0xff]
      %v5007 = vld [vmem:[%s219 + $0xd8] sm:$0xff]
      %v5008 = vld [vmem:[%s219 + $0xe0] sm:$0xff]
      %v5009 = vld [vmem:[%s219 + $0xe8] sm:$0xff]
      %v5010 = vld [vmem:[%s219 + $0xf0] sm:$0xff]
      %v5011 = vld [vmem:[%s219 + $0xf8] sm:$0xff]
      %v5012 = vadd.f32 %v4948, %v4980
      %v5013 = vadd.f32 %v4949, %v4981
      %v5014 = vadd.f32 %v4950, %v4982
      %v5015 = vadd.f32 %v4951, %v4983
      %v5016 = vadd.f32 %v4952, %v4984
      %v5017 = vadd.f32 %v4953, %v4985
      %v5018 = vadd.f32 %v4954, %v4986
      %v5019 = vadd.f32 %v4955, %v4987
      %v5020 = vadd.f32 %v4956, %v4988
      %v5021 = vadd.f32 %v4957, %v4989
      %v5022 = vadd.f32 %v4958, %v4990
      %v5023 = vadd.f32 %v4959, %v4991
      %v5024 = vadd.f32 %v4960, %v4992
      %v5025 = vadd.f32 %v4961, %v4993
      %v5026 = vadd.f32 %v4962, %v4994
      %v5027 = vadd.f32 %v4963, %v4995
      %v5028 = vadd.f32 %v4964, %v4996
      %v5029 = vadd.f32 %v4965, %v4997
      %v5030 = vadd.f32 %v4966, %v4998
      %v5031 = vadd.f32 %v4967, %v4999
      %v5032 = vadd.f32 %v4968, %v5000
      %v5033 = vadd.f32 %v4969, %v5001
      %v5034 = vadd.f32 %v4970, %v5002
      %v5035 = vadd.f32 %v4971, %v5003
      %v5036 = vadd.f32 %v4972, %v5004
      %v5037 = vadd.f32 %v4973, %v5005
      %v5038 = vadd.f32 %v4974, %v5006
      %v5039 = vadd.f32 %v4975, %v5007
      %v5040 = vadd.f32 %v4976, %v5008
      %v5041 = vadd.f32 %v4977, %v5009
      %v5042 = vadd.f32 %v4978, %v5010
      %v5043 = vadd.f32 %v4979, %v5011
      %v5044 = vmax.f32 %v5012, 0.0
      %v5045 = vmax.f32 %v5013, 0.0
      %v5046 = vmax.f32 %v5014, 0.0
      %v5047 = vmax.f32 %v5015, 0.0
      %v5048 = vmax.f32 %v5016, 0.0
      %v5049 = vmax.f32 %v5017, 0.0
      %v5050 = vmax.f32 %v5018, 0.0
      %v5051 = vmax.f32 %v5019, 0.0
      %v5052 = vmax.f32 %v5020, 0.0
      %v5053 = vmax.f32 %v5021, 0.0
      %v5054 = vmax.f32 %v5022, 0.0
      %v5055 = vmax.f32 %v5023, 0.0
      %v5056 = vmax.f32 %v5024, 0.0
      %v5057 = vmax.f32 %v5025, 0.0
      %v5058 = vmax.f32 %v5026, 0.0
      %v5059 = vmax.f32 %v5027, 0.0
      %v5060 = vmax.f32 %v5028, 0.0
      %v5061 = vmax.f32 %v5029, 0.0
      %v5062 = vmax.f32 %v5030, 0.0
      %v5063 = vmax.f32 %v5031, 0.0
      %v5064 = vmax.f32 %v5032, 0.0
      %v5065 = vmax.f32 %v5033, 0.0
      %v5066 = vmax.f32 %v5034, 0.0
      %v5067 = vmax.f32 %v5035, 0.0
      %v5068 = vmax.f32 %v5036, 0.0
      %v5069 = vmax.f32 %v5037, 0.0
      %v5070 = vmax.f32 %v5038, 0.0
      %v5071 = vmax.f32 %v5039, 0.0
      %v5072 = vmax.f32 %v5040, 0.0
      %v5073 = vmax.f32 %v5041, 0.0
      %v5074 = vmax.f32 %v5042, 0.0
      %v5075 = vmax.f32 %v5043, 0.0
      %5076 = vst [vmem:[%s224] sm:$0xff] %v5044
      %5077 = vst [vmem:[%s224 + $0x8] sm:$0xff] %v5045
      %5078 = vst [vmem:[%s224 + $0x10] sm:$0xff] %v5046
      %5079 = vst [vmem:[%s224 + $0x18] sm:$0xff] %v5047
      %5080 = vst [vmem:[%s224 + $0x20] sm:$0xff] %v5048
      %5081 = vst [vmem:[%s224 + $0x28] sm:$0xff] %v5049
      %5082 = vst [vmem:[%s224 + $0x30] sm:$0xff] %v5050
      %5083 = vst [vmem:[%s224 + $0x38] sm:$0xff] %v5051
      %5084 = vst [vmem:[%s224 + $0x40] sm:$0xff] %v5052
      %5085 = vst [vmem:[%s224 + $0x48] sm:$0xff] %v5053
      %5086 = vst [vmem:[%s224 + $0x50] sm:$0xff] %v5054
      %5087 = vst [vmem:[%s224 + $0x58] sm:$0xff] %v5055
      %5088 = vst [vmem:[%s224 + $0x60] sm:$0xff] %v5056
      %5089 = vst [vmem:[%s224 + $0x68] sm:$0xff] %v5057
      %5090 = vst [vmem:[%s224 + $0x70] sm:$0xff] %v5058
      %5091 = vst [vmem:[%s224 + $0x78] sm:$0xff] %v5059
      %5092 = vst [vmem:[%s224 + $0x80] sm:$0xff] %v5060
      %5093 = vst [vmem:[%s224 + $0x88] sm:$0xff] %v5061
      %5094 = vst [vmem:[%s224 + $0x90] sm:$0xff] %v5062
      %5095 = vst [vmem:[%s224 + $0x98] sm:$0xff] %v5063
      %5096 = vst [vmem:[%s224 + $0xa0] sm:$0xff] %v5064
      %5097 = vst [vmem:[%s224 + $0xa8] sm:$0xff] %v5065
      %5098 = vst [vmem:[%s224 + $0xb0] sm:$0xff] %v5066
      %5099 = vst [vmem:[%s224 + $0xb8] sm:$0xff] %v5067
      %5100 = vst [vmem:[%s224 + $0xc0] sm:$0xff] %v5068
      %5101 = vst [vmem:[%s224 + $0xc8] sm:$0xff] %v5069
      %5102 = vst [vmem:[%s224 + $0xd0] sm:$0xff] %v5070
      %5103 = vst [vmem:[%s224 + $0xd8] sm:$0xff] %v5071
      %5104 = vst [vmem:[%s224 + $0xe0] sm:$0xff] %v5072
      %5105 = vst [vmem:[%s224 + $0xe8] sm:$0xff] %v5073
      %5106 = vst [vmem:[%s224 + $0xf0] sm:$0xff] %v5074
      %5107 = vst [vmem:[%s224 + $0xf8] sm:$0xff] %v5075
      %p5108 = scmp.lt.s32.totalorder %s16, 1
      %s5109 = scalar_select %p5108, %s16, 1
      %s5110 = smul.addr %s5109, 32
      %s5111 = smul.addr %s5110, 8
      %s5112 = scalar_lea.vmem %s5, %s5111
      // Predicated region
      $region41: #{a_call__.1} parent=39 // pred_check
        %p5113 = pneg %p144
      $region42: #{a_call__.1} parent=39 // pred_check_branch
        %5115 = sbr.rel (%p5113) target = $region44
      $region43: #{a_call__.1} parent=39 // pred_region
        _
      $region44: #{a_call__.1} parent=39 // pred_fallthru
        _
    $region40: #{a_call__.1} parent=5 // pred_fallthru
      _
    %p5116 = scmp.le.s32.totalorder 2, %s11
    // Predicated region
    $region45: #{a_call__.1} parent=5 // pred_check
      %p5117 = pneg %p5116
    $region46: #{a_call__.1} parent=5 // pred_check_branch
      %5119 = sbr.rel (%p5117) target = $region48
    $region47: #{a_call__.1} parent=5 // pred_region
      %s5120 = ssub.s32 %s11, 2
      // Predicated region
      $region49: #{a_call__.1} parent=47 // pred_check
        %p5121 = pneg %p150
      $region50: #{a_call__.1} parent=47 // pred_check_branch
        %5123 = sbr.rel (%p5121) target = $region52
      $region51: #{a_call__.1} parent=47 // pred_region
        %p5124 = scmp.lt.s32.totalorder %s17, 1
        %s5125 = scalar_select %p5124, %s17, 1
        %s5126 = smul.addr %s5125, 32
        %s5127 = smul.addr %s5126, 8
        %s5128 = scalar_lea.vmem %s5, %s5127
      $region52: #{a_call__.1} parent=47 // pred_fallthru
        _
    $region48: #{a_call__.1} parent=5 // pred_fallthru
      _
  $region6: #{a_call__.1} parent=0 // loop_footer
    %s15 = sadd.s32 1, %s11
  $region7: #{a_call__.1} parent=0 // loop_footer_branch
    %10 = sbr.rel target = $region3
  $region8: #{a_call__.1} parent=0 // loop_exit
    _

</llo_original>
